<compile_context>
chip_gen: v6e
topology: v6e:2x2x1
jax: 0.10.0
libtpu: 0.0.40
codegen_flags: <defaults>
</compile_context>

<pallas_src>
import numpy as np
import jax
import jax.numpy as jnp
from jax.experimental import pallas as pl
from jax.experimental.pallas import tpu as pltpu


_TB_MAX = 32  # images per grid step (sweepable 32/64); clamped down for small batches


def _pick_tile(b):
    """Batch tile: multiple of 8 (sublane aligned), at most _TB_MAX."""
    return min(_TB_MAX, ((b + 7) // 8) * 8)


# ------------------------------ Pallas kernel -------------------------------

def _lenet_kernel(x_ref, a1_ref, b1_ref, a2_ref, b2_ref,
                  wf1_ref, bf1_ref, wf2_ref, bf2_ref, wf3_ref, bf3_ref,
                  o_ref):
    tb = x_ref.shape[0]
    w_dt = a1_ref.dtype                                     # f32 (default) or bf16
    x = x_ref[...].astype(w_dt)                             # (TB, 28, 28)

    # ---- conv1 (1->6, 5x5) + bias + ReLU: 5 banded matmuls over the kh taps ----
    # a1[kh] is (28, 144) with columns in (ow-parity)-major order:
    #   col = (ow % 2) * 72 + (ow // 2) * 6 + oc,  a1[kh][iw, col] = w1[oc, 0, kh, iw - ow].
    acc1 = jnp.zeros((tb * 24, 144), jnp.float32)
    for kh in range(5):
        xk = x[:, kh:kh + 24, :].reshape(tb * 24, 28)       # shifted read of resident tile
        acc1 = acc1 + jnp.dot(xk, a1_ref[kh], preferred_element_type=jnp.float32)
    c1 = jnp.maximum(acc1 + b1_ref[...], 0.0)               # (TB*24, 144)

    # ---- 2x2 max-pool #1, fully lane-packed ----
    # W direction: even-ow and odd-ow halves are contiguous 72-lane blocks -> slice + max.
    mw1 = jnp.maximum(c1[:, :72], c1[:, 72:])               # (TB*24, 72), col = pw*6 + ic
    # H direction: pair adjacent rows.
    m1 = mw1.reshape(tb, 12, 2, 72)
    m1 = jnp.maximum(m1[:, :, 0, :], m1[:, :, 1, :])        # (TB, 12, 72)

    # ---- conv2 (6->16, 5x5) + bias + ReLU: 5 banded lane-dense (N=128) matmuls ----
    # a2[kh] is (72, 128): col = (ow % 2) * 64 + (ow // 2) * 16 + oc,
    #   a2[kh][pw*6 + ic, col] = w2[oc, ic, kh, pw - ow].
    m1w = m1.astype(w_dt)
    acc2 = jnp.zeros((tb * 8, 128), jnp.float32)
    for kh in range(5):
        slab = m1w[:, kh:kh + 8, :].reshape(tb * 8, 72)
        acc2 = acc2 + jnp.dot(slab, a2_ref[kh], preferred_element_type=jnp.float32)
    c2 = jnp.maximum(acc2 + b2_ref[...], 0.0)               # (TB*8, 128)

    # ---- 2x2 max-pool #2, same trick ----
    mw2 = jnp.maximum(c2[:, :64], c2[:, 64:])               # (TB*8, 64), col = pw*16 + oc
    m2 = mw2.reshape(tb, 4, 2, 64)
    m2 = jnp.maximum(m2[:, :, 0, :], m2[:, :, 1, :])        # (TB, 4, 64)
    flat = m2.reshape(tb, 256)                              # col = ph*64 + pw*16 + oc

    # ---- fc1 -> ReLU -> fc2 -> ReLU -> fc3, all padded to 128 output lanes ----
    h = jnp.dot(flat.astype(w_dt), wf1_ref[...], preferred_element_type=jnp.float32)
    h = jnp.maximum(h + bf1_ref[...], 0.0)
    h = jnp.dot(h.astype(w_dt), wf2_ref[...], preferred_element_type=jnp.float32)
    h = jnp.maximum(h + bf2_ref[...], 0.0)
    o_ref[...] = (jnp.dot(h.astype(w_dt), wf3_ref[...], preferred_element_type=jnp.float32)
                  + bf3_ref[...]).astype(o_ref.dtype)


# ------------------------------ Pallas wrapper -------------------------------

def _lenet_pallas(x_pad, prepped, tb):
    b_pad = x_pad.shape[0]
    a1, b1r, a2, b2r, wf1, bf1, wf2, bf2, wf3, bf3 = prepped
    steps = b_pad // tb

    def _const(a):
        n = a.ndim
        return pl.BlockSpec(a.shape, lambda i, n=n: (0,) * n)   # resident across the grid

    # Advisory cost estimate so XLA can schedule/overlap this (tiny) custom call.
    flops = 2 * steps * tb * (5 * 24 * 28 * 144 + 5 * 8 * 72 * 128
                              + 256 * 128 + 128 * 128 + 128 * 128)
    weight_bytes = sum(int(np.prod(w.shape)) * int(w.dtype.itemsize) for w in prepped)
    bytes_accessed = steps * tb * (28 * 28 + 128) * 4 + weight_bytes
    cost = pl.CostEstimate(flops=int(flops), transcendentals=0,
                           bytes_accessed=int(bytes_accessed))

    return pl.pallas_call(
        _lenet_kernel,
        out_shape=jax.ShapeDtypeStruct((b_pad, 128), jnp.float32),
        grid=(steps,),
        in_specs=[
            pl.BlockSpec((tb, 28, 28), lambda i: (i, 0, 0)),
            _const(a1), _const(b1r), _const(a2), _const(b2r),
            _const(wf1), _const(bf1), _const(wf2), _const(bf2),
            _const(wf3), _const(bf3),
        ],
        out_specs=pl.BlockSpec((tb, 128), lambda i: (i, 0)),
        compiler_params=pltpu.CompilerParams(
            dimension_semantics=("parallel",),
            vmem_limit_bytes=32 * 1024 * 1024,
        ),
        cost_estimate=cost,
    )(x_pad, a1, b1r, a2, b2r, wf1, bf1, wf2, bf2, wf3, bf3)


@jax.jit
def net_forward(x, prepped):
    """x: (B, 1, 28, 28) NCHW float32 -> logits (B, 10)."""
    b = x.shape[0]
    tb = _pick_tile(b)
    b_pad = ((b + tb - 1) // tb) * tb
    x2 = x.reshape(b, 28, 28).astype(jnp.float32)
    x_pad = jnp.pad(x2, ((0, b_pad - b), (0, 0), (0, 0)))
    out = _lenet_pallas(x_pad, prepped, tb)
    return out[:b, :10]


# ----------------------- one-time host-side weight prep ----------------------

def prepare_params(params, dtype=jnp.float32):
    """Massage torch-layout parameters into kernel operands (runs once, host-side).

    dtype applies to the matmul RHS operands only (biases stay f32); pass
    jnp.bfloat16 on v6e/v7x if a looser (~1e-2) output tolerance is acceptable.
    """
    w1 = np.asarray(params["conv1_w"], np.float32)          # (6, 1, 5, 5)
    b1 = np.asarray(params["conv1_b"], np.float32)
    w2 = np.asarray(params["conv2_w"], np.float32)          # (16, 6, 5, 5)
    b2 = np.asarray(params["conv2_b"], np.float32)

    # conv1 banded RHS, parity-major output columns: col = (ow%2)*72 + (ow//2)*6 + oc
    a1 = np.zeros((5, 28, 144), np.float32)
    for kh in range(5):
        for ow in range(24):
            c0 = (ow % 2) * 72 + (ow // 2) * 6
            for kw in range(5):
                a1[kh, ow + kw, c0:c0 + 6] = w1[:, 0, kh, kw]
    b1r = np.tile(b1, 24).reshape(1, 144)                   # col % 6 == oc in every block

    # conv2 banded RHS, parity-major output columns: col = (ow%2)*64 + (ow//2)*16 + oc
    # row index of a2[kh] is pw*6 + ic (pooled width, input channel).
    a2 = np.zeros((5, 72, 128), np.float32)
    for kh in range(5):
        for ow in range(8):
            c0 = (ow % 2) * 64 + (ow // 2) * 16
            for kw in range(5):
                pw = ow + kw
                for ic in range(6):
                    a2[kh, pw * 6 + ic, c0:c0 + 16] = w2[:, ic, kh, kw]
    b2r = np.tile(b2, 8).reshape(1, 128)

    # fc1: permute columns from torch (c, h, w) flatten order to our (h, w, c) order, pad to 128
    fc1_w = np.asarray(params["fc1_w"], np.float32)          # (120, 256)
    j = np.arange(256)
    ph, pw, oc = j // 64, (j // 16) % 4, j % 16
    perm = oc * 16 + ph * 4 + pw
    wf1 = np.zeros((256, 128), np.float32)
    wf1[:, :120] = fc1_w.T[perm]
    bf1 = np.zeros((1, 128), np.float32)
    bf1[0, :120] = np.asarray(params["fc1_b"], np.float32)

    fc2_w = np.asarray(params["fc2_w"], np.float32)          # (84, 120)
    wf2 = np.zeros((128, 128), np.float32)
    wf2[:120, :84] = fc2_w.T
    bf2 = np.zeros((1, 128), np.float32)
    bf2[0, :84] = np.asarray(params["fc2_b"], np.float32)

    fc3_w = np.asarray(params["fc3_w"], np.float32)          # (10, 84)
    wf3 = np.zeros((128, 128), np.float32)
    wf3[:84, :10] = fc3_w.T
    bf3 = np.zeros((1, 128), np.float32)
    bf3[0, :10] = np.asarray(params["fc3_b"], np.float32)

    cast = lambda a: jnp.asarray(a, dtype)         # matmul operands
    keep = lambda a: jnp.asarray(a, jnp.float32)   # biases (accumulation stays f32)
    return (cast(a1), keep(b1r), cast(a2), keep(b2r),
            cast(wf1), keep(bf1), cast(wf2), keep(bf2), cast(wf3), keep(bf3))


# --------------------------- reference & params ------------------------------

def reference_forward(x, params):
    """Pure-JAX replica of the PyTorch forward (for validation)."""
    def conv2d(inp, w, b):
        out = jax.lax.conv_general_dilated(
            inp, w, (1, 1), "VALID",
            dimension_numbers=("NCHW", "OIHW", "NCHW"))
        return out + b[None, :, None, None]

    def maxpool2(inp):
        return jax.lax.reduce_window(inp, -jnp.inf, jax.lax.max,
                                     (1, 1, 2, 2), (1, 1, 2, 2), "VALID")

    h = maxpool2(jax.nn.relu(conv2d(x, params["conv1_w"], params["conv1_b"])))
    h = maxpool2(jax.nn.relu(conv2d(h, params["conv2_w"], params["conv2_b"])))
    h = h.reshape(x.shape[0], 16 * 4 * 4)
    h = jax.nn.relu(h @ params["fc1_w"].T + params["fc1_b"])
    h = jax.nn.relu(h @ params["fc2_w"].T + params["fc2_b"])
    return h @ params["fc3_w"].T + params["fc3_b"]


def init_params(key):
    ks = jax.random.split(key, 10)
    s = 0.1
    return {
        "conv1_w": s * jax.random.normal(ks[0], (6, 1, 5, 5), jnp.float32),
        "conv1_b": s * jax.random.normal(ks[1], (6,), jnp.float32),
        "conv2_w": s * jax.random.normal(ks[2], (16, 6, 5, 5), jnp.float32),
        "conv2_b": s * jax.random.normal(ks[3], (16,), jnp.float32),
        "fc1_w": s * jax.random.normal(ks[4], (120, 256), jnp.float32),
        "fc1_b": s * jax.random.normal(ks[5], (120,), jnp.float32),
        "fc2_w": s * jax.random.normal(ks[6], (84, 120), jnp.float32),
        "fc2_b": s * jax.random.normal(ks[7], (84,), jnp.float32),
        "fc3_w": s * jax.random.normal(ks[8], (10, 84), jnp.float32),
        "fc3_b": s * jax.random.normal(ks[9], (10,), jnp.float32),
    }


if __name__ == "__main__":
    key = jax.random.PRNGKey(0)
    kx, kp = jax.random.split(key)
    params = init_params(kp)
    # LeNet-style Net requires 28x28 single-channel input (fc1 expects 16*4*4).
    x = jax.random.normal(kx, (2, 1, 28, 28), dtype=jnp.float32)

    prepped = prepare_params(params)             # f32 operands -> exact 1e-3 validation
    out = jax.block_until_ready(net_forward(x, prepped))
    assert out.shape == (2, 10), out.shape

    ref = np.asarray(reference_forward(x, params))
    np.testing.assert_allclose(np.asarray(out), ref, rtol=1e-3, atol=1e-3)

    print("KERNEL_OK")
</pallas_src>

<mosaic_0001>
module attributes {stable_mosaic.version = 11 : i64} {
  func.func @_lenet_kernel(%arg0: i32, %arg1: memref<8x28x28xf32, #tpu.memory_space<vmem>>, %arg2: memref<5x28x144xf32, #tpu.memory_space<vmem>>, %arg3: memref<1x144xf32, #tpu.memory_space<vmem>>, %arg4: memref<5x72x128xf32, #tpu.memory_space<vmem>>, %arg5: memref<1x128xf32, #tpu.memory_space<vmem>>, %arg6: memref<256x128xf32, #tpu.memory_space<vmem>>, %arg7: memref<1x128xf32, #tpu.memory_space<vmem>>, %arg8: memref<128x128xf32, #tpu.memory_space<vmem>>, %arg9: memref<1x128xf32, #tpu.memory_space<vmem>>, %arg10: memref<128x128xf32, #tpu.memory_space<vmem>>, %arg11: memref<1x128xf32, #tpu.memory_space<vmem>>, %arg12: memref<8x128xf32, #tpu.memory_space<vmem>>) attributes {dimension_semantics = [#tpu.dimension_semantics<parallel>], iteration_bounds = array<i64: 1>, scalar_prefetch = 0 : i64, scratch_operands = 0 : i64, tpu.core_type = #tpu.core_type<tc>, window_params = [{transform_indices = @transform_0, window_bounds = array<i64: 8, 28, 28>}, {pipeline_mode = #tpu.pipeline_mode<synchronous>, transform_indices = @transform_1, window_bounds = array<i64: 5, 28, 144>}, {pipeline_mode = #tpu.pipeline_mode<synchronous>, transform_indices = @transform_2, window_bounds = array<i64: 1, 144>}, {pipeline_mode = #tpu.pipeline_mode<synchronous>, transform_indices = @transform_3, window_bounds = array<i64: 5, 72, 128>}, {pipeline_mode = #tpu.pipeline_mode<synchronous>, transform_indices = @transform_4, window_bounds = array<i64: 1, 128>}, {pipeline_mode = #tpu.pipeline_mode<synchronous>, transform_indices = @transform_5, window_bounds = array<i64: 256, 128>}, {pipeline_mode = #tpu.pipeline_mode<synchronous>, transform_indices = @transform_6, window_bounds = array<i64: 1, 128>}, {pipeline_mode = #tpu.pipeline_mode<synchronous>, transform_indices = @transform_7, window_bounds = array<i64: 128, 128>}, {pipeline_mode = #tpu.pipeline_mode<synchronous>, transform_indices = @transform_8, window_bounds = array<i64: 1, 128>}, {pipeline_mode = #tpu.pipeline_mode<synchronous>, transform_indices = @transform_9, window_bounds = array<i64: 128, 128>}, {pipeline_mode = #tpu.pipeline_mode<synchronous>, transform_indices = @transform_10, window_bounds = array<i64: 1, 128>}, {transform_indices = @transform_11, window_bounds = array<i64: 8, 128>}]} {
    %c0 = arith.constant 0 : index
    %c0_0 = arith.constant 0 : index
    %c0_1 = arith.constant 0 : index
    %0 = vector.load %arg1[%c0, %c0_0, %c0_1] : memref<8x28x28xf32, #tpu.memory_space<vmem>>, vector<8x28x28xf32>
    %cst = arith.constant 0.000000e+00 : f32
    %1 = vector.broadcast %cst : f32 to vector<192x144xf32>
    %2 = vector.extract_strided_slice %0 {offsets = [0, 0, 0], sizes = [8, 24, 28], strides = [1, 1, 1]} : vector<8x28x28xf32> to vector<8x24x28xf32>
    %3 = vector.shape_cast %2 : vector<8x24x28xf32> to vector<192x28xf32>
    %c0_2 = arith.constant 0 : index
    %c0_3 = arith.constant 0 : index
    %c0_4 = arith.constant 0 : index
    %4 = vector.load %arg2[%c0_2, %c0_3, %c0_4] : memref<5x28x144xf32, #tpu.memory_space<vmem>>, vector<1x28x144xf32>
    %5 = vector.shape_cast %4 : vector<1x28x144xf32> to vector<28x144xf32>
    %cst_5 = arith.constant dense<0.000000e+00> : vector<192x144xf32>
    %6 = tpu.matmul %3, %5, %cst_5 {dimension_numbers = #tpu.dot_dimension_numbers<[1], [0], [0], [1], [0, 0, 1, 1], [], []>} : vector<192x28xf32>, vector<28x144xf32>, vector<192x144xf32> -> vector<192x144xf32>
    %7 = arith.addf %1, %6 : vector<192x144xf32>
    %8 = vector.extract_strided_slice %0 {offsets = [0, 1, 0], sizes = [8, 24, 28], strides = [1, 1, 1]} : vector<8x28x28xf32> to vector<8x24x28xf32>
    %9 = vector.shape_cast %8 : vector<8x24x28xf32> to vector<192x28xf32>
    %c1 = arith.constant 1 : index
    %c0_6 = arith.constant 0 : index
    %c0_7 = arith.constant 0 : index
    %10 = vector.load %arg2[%c1, %c0_6, %c0_7] : memref<5x28x144xf32, #tpu.memory_space<vmem>>, vector<1x28x144xf32>
    %11 = vector.shape_cast %10 : vector<1x28x144xf32> to vector<28x144xf32>
    %cst_8 = arith.constant dense<0.000000e+00> : vector<192x144xf32>
    %12 = tpu.matmul %9, %11, %cst_8 {dimension_numbers = #tpu.dot_dimension_numbers<[1], [0], [0], [1], [0, 0, 1, 1], [], []>} : vector<192x28xf32>, vector<28x144xf32>, vector<192x144xf32> -> vector<192x144xf32>
    %13 = arith.addf %7, %12 : vector<192x144xf32>
    %14 = vector.extract_strided_slice %0 {offsets = [0, 2, 0], sizes = [8, 24, 28], strides = [1, 1, 1]} : vector<8x28x28xf32> to vector<8x24x28xf32>
    %15 = vector.shape_cast %14 : vector<8x24x28xf32> to vector<192x28xf32>
    %c2 = arith.constant 2 : index
    %c0_9 = arith.constant 0 : index
    %c0_10 = arith.constant 0 : index
    %16 = vector.load %arg2[%c2, %c0_9, %c0_10] : memref<5x28x144xf32, #tpu.memory_space<vmem>>, vector<1x28x144xf32>
    %17 = vector.shape_cast %16 : vector<1x28x144xf32> to vector<28x144xf32>
    %cst_11 = arith.constant dense<0.000000e+00> : vector<192x144xf32>
    %18 = tpu.matmul %15, %17, %cst_11 {dimension_numbers = #tpu.dot_dimension_numbers<[1], [0], [0], [1], [0, 0, 1, 1], [], []>} : vector<192x28xf32>, vector<28x144xf32>, vector<192x144xf32> -> vector<192x144xf32>
    %19 = arith.addf %13, %18 : vector<192x144xf32>
    %20 = vector.extract_strided_slice %0 {offsets = [0, 3, 0], sizes = [8, 24, 28], strides = [1, 1, 1]} : vector<8x28x28xf32> to vector<8x24x28xf32>
    %21 = vector.shape_cast %20 : vector<8x24x28xf32> to vector<192x28xf32>
    %c3 = arith.constant 3 : index
    %c0_12 = arith.constant 0 : index
    %c0_13 = arith.constant 0 : index
    %22 = vector.load %arg2[%c3, %c0_12, %c0_13] : memref<5x28x144xf32, #tpu.memory_space<vmem>>, vector<1x28x144xf32>
    %23 = vector.shape_cast %22 : vector<1x28x144xf32> to vector<28x144xf32>
    %cst_14 = arith.constant dense<0.000000e+00> : vector<192x144xf32>
    %24 = tpu.matmul %21, %23, %cst_14 {dimension_numbers = #tpu.dot_dimension_numbers<[1], [0], [0], [1], [0, 0, 1, 1], [], []>} : vector<192x28xf32>, vector<28x144xf32>, vector<192x144xf32> -> vector<192x144xf32>
    %25 = arith.addf %19, %24 : vector<192x144xf32>
    %26 = vector.extract_strided_slice %0 {offsets = [0, 4, 0], sizes = [8, 24, 28], strides = [1, 1, 1]} : vector<8x28x28xf32> to vector<8x24x28xf32>
    %27 = vector.shape_cast %26 : vector<8x24x28xf32> to vector<192x28xf32>
    %c4 = arith.constant 4 : index
    %c0_15 = arith.constant 0 : index
    %c0_16 = arith.constant 0 : index
    %28 = vector.load %arg2[%c4, %c0_15, %c0_16] : memref<5x28x144xf32, #tpu.memory_space<vmem>>, vector<1x28x144xf32>
    %29 = vector.shape_cast %28 : vector<1x28x144xf32> to vector<28x144xf32>
    %cst_17 = arith.constant dense<0.000000e+00> : vector<192x144xf32>
    %30 = tpu.matmul %27, %29, %cst_17 {dimension_numbers = #tpu.dot_dimension_numbers<[1], [0], [0], [1], [0, 0, 1, 1], [], []>} : vector<192x28xf32>, vector<28x144xf32>, vector<192x144xf32> -> vector<192x144xf32>
    %31 = arith.addf %25, %30 : vector<192x144xf32>
    %c0_18 = arith.constant 0 : index
    %c0_19 = arith.constant 0 : index
    %32 = vector.load %arg3[%c0_18, %c0_19] : memref<1x144xf32, #tpu.memory_space<vmem>>, vector<1x144xf32>
    %33 = vector.broadcast %32 : vector<1x144xf32> to vector<192x144xf32>
    %34 = arith.addf %31, %33 : vector<192x144xf32>
    %cst_20 = arith.constant 0.000000e+00 : f32
    %35 = vector.broadcast %cst_20 : f32 to vector<192x144xf32>
    %36 = arith.maximumf %34, %35 : vector<192x144xf32>
    %37 = vector.extract_strided_slice %36 {offsets = [0, 0], sizes = [192, 72], strides = [1, 1]} : vector<192x144xf32> to vector<192x72xf32>
    %38 = vector.extract_strided_slice %36 {offsets = [0, 72], sizes = [192, 72], strides = [1, 1]} : vector<192x144xf32> to vector<192x72xf32>
    %39 = arith.maximumf %37, %38 : vector<192x72xf32>
    %40 = vector.shape_cast %39 : vector<192x72xf32> to vector<8x12x2x72xf32>
    %41 = vector.extract_strided_slice %40 {offsets = [0, 0, 0, 0], sizes = [8, 12, 1, 72], strides = [1, 1, 1, 1]} : vector<8x12x2x72xf32> to vector<8x12x1x72xf32>
    %42 = vector.shape_cast %41 : vector<8x12x1x72xf32> to vector<8x12x72xf32>
    %43 = vector.extract_strided_slice %40 {offsets = [0, 0, 1, 0], sizes = [8, 12, 1, 72], strides = [1, 1, 1, 1]} : vector<8x12x2x72xf32> to vector<8x12x1x72xf32>
    %44 = vector.shape_cast %43 : vector<8x12x1x72xf32> to vector<8x12x72xf32>
    %45 = arith.maximumf %42, %44 : vector<8x12x72xf32>
    %cst_21 = arith.constant 0.000000e+00 : f32
    %46 = vector.broadcast %cst_21 : f32 to vector<64x128xf32>
    %47 = vector.extract_strided_slice %45 {offsets = [0, 0, 0], sizes = [8, 8, 72], strides = [1, 1, 1]} : vector<8x12x72xf32> to vector<8x8x72xf32>
    %48 = vector.shape_cast %47 : vector<8x8x72xf32> to vector<64x72xf32>
    %c0_22 = arith.constant 0 : index
    %c0_23 = arith.constant 0 : index
    %c0_24 = arith.constant 0 : index
    %49 = vector.load %arg4[%c0_22, %c0_23, %c0_24] : memref<5x72x128xf32, #tpu.memory_space<vmem>>, vector<1x72x128xf32>
    %50 = vector.shape_cast %49 : vector<1x72x128xf32> to vector<72x128xf32>
    %cst_25 = arith.constant dense<0.000000e+00> : vector<64x128xf32>
    %51 = tpu.matmul %48, %50, %cst_25 {dimension_numbers = #tpu.dot_dimension_numbers<[1], [0], [0], [1], [0, 0, 1, 1], [], []>} : vector<64x72xf32>, vector<72x128xf32>, vector<64x128xf32> -> vector<64x128xf32>
    %52 = arith.addf %46, %51 : vector<64x128xf32>
    %53 = vector.extract_strided_slice %45 {offsets = [0, 1, 0], sizes = [8, 8, 72], strides = [1, 1, 1]} : vector<8x12x72xf32> to vector<8x8x72xf32>
    %54 = vector.shape_cast %53 : vector<8x8x72xf32> to vector<64x72xf32>
    %c1_26 = arith.constant 1 : index
    %c0_27 = arith.constant 0 : index
    %c0_28 = arith.constant 0 : index
    %55 = vector.load %arg4[%c1_26, %c0_27, %c0_28] : memref<5x72x128xf32, #tpu.memory_space<vmem>>, vector<1x72x128xf32>
    %56 = vector.shape_cast %55 : vector<1x72x128xf32> to vector<72x128xf32>
    %cst_29 = arith.constant dense<0.000000e+00> : vector<64x128xf32>
    %57 = tpu.matmul %54, %56, %cst_29 {dimension_numbers = #tpu.dot_dimension_numbers<[1], [0], [0], [1], [0, 0, 1, 1], [], []>} : vector<64x72xf32>, vector<72x128xf32>, vector<64x128xf32> -> vector<64x128xf32>
    %58 = arith.addf %52, %57 : vector<64x128xf32>
    %59 = vector.extract_strided_slice %45 {offsets = [0, 2, 0], sizes = [8, 8, 72], strides = [1, 1, 1]} : vector<8x12x72xf32> to vector<8x8x72xf32>
    %60 = vector.shape_cast %59 : vector<8x8x72xf32> to vector<64x72xf32>
    %c2_30 = arith.constant 2 : index
    %c0_31 = arith.constant 0 : index
    %c0_32 = arith.constant 0 : index
    %61 = vector.load %arg4[%c2_30, %c0_31, %c0_32] : memref<5x72x128xf32, #tpu.memory_space<vmem>>, vector<1x72x128xf32>
    %62 = vector.shape_cast %61 : vector<1x72x128xf32> to vector<72x128xf32>
    %cst_33 = arith.constant dense<0.000000e+00> : vector<64x128xf32>
    %63 = tpu.matmul %60, %62, %cst_33 {dimension_numbers = #tpu.dot_dimension_numbers<[1], [0], [0], [1], [0, 0, 1, 1], [], []>} : vector<64x72xf32>, vector<72x128xf32>, vector<64x128xf32> -> vector<64x128xf32>
    %64 = arith.addf %58, %63 : vector<64x128xf32>
    %65 = vector.extract_strided_slice %45 {offsets = [0, 3, 0], sizes = [8, 8, 72], strides = [1, 1, 1]} : vector<8x12x72xf32> to vector<8x8x72xf32>
    %66 = vector.shape_cast %65 : vector<8x8x72xf32> to vector<64x72xf32>
    %c3_34 = arith.constant 3 : index
    %c0_35 = arith.constant 0 : index
    %c0_36 = arith.constant 0 : index
    %67 = vector.load %arg4[%c3_34, %c0_35, %c0_36] : memref<5x72x128xf32, #tpu.memory_space<vmem>>, vector<1x72x128xf32>
    %68 = vector.shape_cast %67 : vector<1x72x128xf32> to vector<72x128xf32>
    %cst_37 = arith.constant dense<0.000000e+00> : vector<64x128xf32>
    %69 = tpu.matmul %66, %68, %cst_37 {dimension_numbers = #tpu.dot_dimension_numbers<[1], [0], [0], [1], [0, 0, 1, 1], [], []>} : vector<64x72xf32>, vector<72x128xf32>, vector<64x128xf32> -> vector<64x128xf32>
    %70 = arith.addf %64, %69 : vector<64x128xf32>
    %71 = vector.extract_strided_slice %45 {offsets = [0, 4, 0], sizes = [8, 8, 72], strides = [1, 1, 1]} : vector<8x12x72xf32> to vector<8x8x72xf32>
    %72 = vector.shape_cast %71 : vector<8x8x72xf32> to vector<64x72xf32>
    %c4_38 = arith.constant 4 : index
    %c0_39 = arith.constant 0 : index
    %c0_40 = arith.constant 0 : index
    %73 = vector.load %arg4[%c4_38, %c0_39, %c0_40] : memref<5x72x128xf32, #tpu.memory_space<vmem>>, vector<1x72x128xf32>
    %74 = vector.shape_cast %73 : vector<1x72x128xf32> to vector<72x128xf32>
    %cst_41 = arith.constant dense<0.000000e+00> : vector<64x128xf32>
    %75 = tpu.matmul %72, %74, %cst_41 {dimension_numbers = #tpu.dot_dimension_numbers<[1], [0], [0], [1], [0, 0, 1, 1], [], []>} : vector<64x72xf32>, vector<72x128xf32>, vector<64x128xf32> -> vector<64x128xf32>
    %76 = arith.addf %70, %75 : vector<64x128xf32>
    %c0_42 = arith.constant 0 : index
    %c0_43 = arith.constant 0 : index
    %77 = vector.load %arg5[%c0_42, %c0_43] : memref<1x128xf32, #tpu.memory_space<vmem>>, vector<1x128xf32>
    %78 = vector.broadcast %77 : vector<1x128xf32> to vector<64x128xf32>
    %79 = arith.addf %76, %78 : vector<64x128xf32>
    %cst_44 = arith.constant 0.000000e+00 : f32
    %80 = vector.broadcast %cst_44 : f32 to vector<64x128xf32>
    %81 = arith.maximumf %79, %80 : vector<64x128xf32>
    %82 = vector.extract_strided_slice %81 {offsets = [0, 0], sizes = [64, 64], strides = [1, 1]} : vector<64x128xf32> to vector<64x64xf32>
    %83 = vector.extract_strided_slice %81 {offsets = [0, 64], sizes = [64, 64], strides = [1, 1]} : vector<64x128xf32> to vector<64x64xf32>
    %84 = arith.maximumf %82, %83 : vector<64x64xf32>
    %85 = vector.shape_cast %84 : vector<64x64xf32> to vector<8x4x2x64xf32>
    %86 = vector.extract_strided_slice %85 {offsets = [0, 0, 0, 0], sizes = [8, 4, 1, 64], strides = [1, 1, 1, 1]} : vector<8x4x2x64xf32> to vector<8x4x1x64xf32>
    %87 = vector.shape_cast %86 : vector<8x4x1x64xf32> to vector<8x4x64xf32>
    %88 = vector.extract_strided_slice %85 {offsets = [0, 0, 1, 0], sizes = [8, 4, 1, 64], strides = [1, 1, 1, 1]} : vector<8x4x2x64xf32> to vector<8x4x1x64xf32>
    %89 = vector.shape_cast %88 : vector<8x4x1x64xf32> to vector<8x4x64xf32>
    %90 = arith.maximumf %87, %89 : vector<8x4x64xf32>
    %91 = vector.shape_cast %90 : vector<8x4x64xf32> to vector<8x256xf32>
    %c0_45 = arith.constant 0 : index
    %c0_46 = arith.constant 0 : index
    %92 = vector.load %arg6[%c0_45, %c0_46] : memref<256x128xf32, #tpu.memory_space<vmem>>, vector<256x128xf32>
    %cst_47 = arith.constant dense<0.000000e+00> : vector<8x128xf32>
    %93 = tpu.matmul %91, %92, %cst_47 {dimension_numbers = #tpu.dot_dimension_numbers<[1], [0], [0], [1], [0, 0, 1, 1], [], []>} : vector<8x256xf32>, vector<256x128xf32>, vector<8x128xf32> -> vector<8x128xf32>
    %c0_48 = arith.constant 0 : index
    %c0_49 = arith.constant 0 : index
    %94 = vector.load %arg7[%c0_48, %c0_49] : memref<1x128xf32, #tpu.memory_space<vmem>>, vector<1x128xf32>
    %95 = vector.broadcast %94 : vector<1x128xf32> to vector<8x128xf32>
    %96 = arith.addf %93, %95 : vector<8x128xf32>
    %cst_50 = arith.constant 0.000000e+00 : f32
    %97 = vector.broadcast %cst_50 : f32 to vector<8x128xf32>
    %98 = arith.maximumf %96, %97 : vector<8x128xf32>
    %c0_51 = arith.constant 0 : index
    %c0_52 = arith.constant 0 : index
    %99 = vector.load %arg8[%c0_51, %c0_52] : memref<128x128xf32, #tpu.memory_space<vmem>>, vector<128x128xf32>
    %cst_53 = arith.constant dense<0.000000e+00> : vector<8x128xf32>
    %100 = tpu.matmul %98, %99, %cst_53 {dimension_numbers = #tpu.dot_dimension_numbers<[1], [0], [0], [1], [0, 0, 1, 1], [], []>} : vector<8x128xf32>, vector<128x128xf32>, vector<8x128xf32> -> vector<8x128xf32>
    %c0_54 = arith.constant 0 : index
    %c0_55 = arith.constant 0 : index
    %101 = vector.load %arg9[%c0_54, %c0_55] : memref<1x128xf32, #tpu.memory_space<vmem>>, vector<1x128xf32>
    %102 = vector.broadcast %101 : vector<1x128xf32> to vector<8x128xf32>
    %103 = arith.addf %100, %102 : vector<8x128xf32>
    %cst_56 = arith.constant 0.000000e+00 : f32
    %104 = vector.broadcast %cst_56 : f32 to vector<8x128xf32>
    %105 = arith.maximumf %103, %104 : vector<8x128xf32>
    %c0_57 = arith.constant 0 : index
    %c0_58 = arith.constant 0 : index
    %106 = vector.load %arg10[%c0_57, %c0_58] : memref<128x128xf32, #tpu.memory_space<vmem>>, vector<128x128xf32>
    %cst_59 = arith.constant dense<0.000000e+00> : vector<8x128xf32>
    %107 = tpu.matmul %105, %106, %cst_59 {dimension_numbers = #tpu.dot_dimension_numbers<[1], [0], [0], [1], [0, 0, 1, 1], [], []>} : vector<8x128xf32>, vector<128x128xf32>, vector<8x128xf32> -> vector<8x128xf32>
    %c0_60 = arith.constant 0 : index
    %c0_61 = arith.constant 0 : index
    %108 = vector.load %arg11[%c0_60, %c0_61] : memref<1x128xf32, #tpu.memory_space<vmem>>, vector<1x128xf32>
    %109 = vector.broadcast %108 : vector<1x128xf32> to vector<8x128xf32>
    %110 = arith.addf %107, %109 : vector<8x128xf32>
    %c0_62 = arith.constant 0 : index
    %c0_63 = arith.constant 0 : index
    %111 = vector.load %arg12[%c0_62, %c0_63] : memref<8x128xf32, #tpu.memory_space<vmem>>, vector<8x128xf32>
    tpu.vector_store %arg12[%c0_62, %c0_63], %110 {strides = array<i32>} : memref<8x128xf32, #tpu.memory_space<vmem>>, vector<8x128xf32>,
    return
  }
  func.func @transform_0(%arg0: i32) -> (i32, i32, i32) {
    %c0_i32 = arith.constant 0 : i32
    %c0_i32_0 = arith.constant 0 : i32
    %c0_i32_1 = arith.constant 0 : i32
    return %arg0, %c0_i32, %c0_i32_0 : i32, i32, i32
  }
  func.func @transform_1(%arg0: i32) -> (i32, i32, i32) {
    %c0_i32 = arith.constant 0 : i32
    %c0_i32_0 = arith.constant 0 : i32
    %c0_i32_1 = arith.constant 0 : i32
    %c0_i32_2 = arith.constant 0 : i32
    return %c0_i32, %c0_i32_0, %c0_i32_1 : i32, i32, i32
  }
  func.func @transform_2(%arg0: i32) -> (i32, i32) {
    %c0_i32 = arith.constant 0 : i32
    %c0_i32_0 = arith.constant 0 : i32
    %c0_i32_1 = arith.constant 0 : i32
    return %c0_i32, %c0_i32_0 : i32, i32
  }
  func.func @transform_3(%arg0: i32) -> (i32, i32, i32) {
    %c0_i32 = arith.constant 0 : i32
    %c0_i32_0 = arith.constant 0 : i32
    %c0_i32_1 = arith.constant 0 : i32
    %c0_i32_2 = arith.constant 0 : i32
    return %c0_i32, %c0_i32_0, %c0_i32_1 : i32, i32, i32
  }
  func.func @transform_4(%arg0: i32) -> (i32, i32) {
    %c0_i32 = arith.constant 0 : i32
    %c0_i32_0 = arith.constant 0 : i32
    %c0_i32_1 = arith.constant 0 : i32
    return %c0_i32, %c0_i32_0 : i32, i32
  }
  func.func @transform_5(%arg0: i32) -> (i32, i32) {
    %c0_i32 = arith.constant 0 : i32
    %c0_i32_0 = arith.constant 0 : i32
    %c0_i32_1 = arith.constant 0 : i32
    return %c0_i32, %c0_i32_0 : i32, i32
  }
  func.func @transform_6(%arg0: i32) -> (i32, i32) {
    %c0_i32 = arith.constant 0 : i32
    %c0_i32_0 = arith.constant 0 : i32
    %c0_i32_1 = arith.constant 0 : i32
    return %c0_i32, %c0_i32_0 : i32, i32
  }
  func.func @transform_7(%arg0: i32) -> (i32, i32) {
    %c0_i32 = arith.constant 0 : i32
    %c0_i32_0 = arith.constant 0 : i32
    %c0_i32_1 = arith.constant 0 : i32
    return %c0_i32, %c0_i32_0 : i32, i32
  }
  func.func @transform_8(%arg0: i32) -> (i32, i32) {
    %c0_i32 = arith.constant 0 : i32
    %c0_i32_0 = arith.constant 0 : i32
    %c0_i32_1 = arith.constant 0 : i32
    return %c0_i32, %c0_i32_0 : i32, i32
  }
  func.func @transform_9(%arg0: i32) -> (i32, i32) {
    %c0_i32 = arith.constant 0 : i32
    %c0_i32_0 = arith.constant 0 : i32
    %c0_i32_1 = arith.constant 0 : i32
    return %c0_i32, %c0_i32_0 : i32, i32
  }
  func.func @transform_10(%arg0: i32) -> (i32, i32) {
    %c0_i32 = arith.constant 0 : i32
    %c0_i32_0 = arith.constant 0 : i32
    %c0_i32_1 = arith.constant 0 : i32
    return %c0_i32, %c0_i32_0 : i32, i32
  }
  func.func @transform_11(%arg0: i32) -> (i32, i32) {
    %c0_i32 = arith.constant 0 : i32
    %c0_i32_0 = arith.constant 0 : i32
    return %arg0, %c0_i32 : i32, i32
  }
}

</mosaic_0001>

<llo_original>
// kernel: net_forward.1
$region0: #{net_forward.1}
  #allocation0 [shape = 'u32[]', space=smem, size = 0x4, offset = 0x4, fixed_abs, tag = 'smem constant byte address 0x4 - core index']
  #allocation1 [shape = 'u32[144,128]{1,0:T(1,128)}', space=vmem, size = 0x12000, scoped, tag = 'internal scratch']
  %s0 = inlined_call_operand.vmem [shape: f32[8,28,28], index: 0, kind: input, shape index: {}]
  %s1 = inlined_call_operand.hbm [shape: f32[5,28,144], index: 1, kind: input, shape index: {}]
  %s2 = inlined_call_operand.vmem [shape: f32[1,144], index: 2, kind: input, shape index: {}]
  %s3 = inlined_call_operand.vmem [shape: f32[5,72,128], index: 3, kind: input, shape index: {}]
  %s4 = inlined_call_operand.vmem [shape: f32[1,128], index: 4, kind: input, shape index: {}]
  %s5 = inlined_call_operand.hbm [shape: f32[256,128], index: 5, kind: input, shape index: {}]
  %s6 = inlined_call_operand.vmem [shape: f32[1,128], index: 6, kind: input, shape index: {}]
  %s7 = inlined_call_operand.vmem [shape: f32[128,128], index: 7, kind: input, shape index: {}]
  %s8 = inlined_call_operand.vmem [shape: f32[1,128], index: 8, kind: input, shape index: {}]
  %s9 = inlined_call_operand.hbm [shape: f32[128,128], index: 9, kind: input, shape index: {}]
  %s10 = inlined_call_operand.vmem [shape: f32[1,128], index: 10, kind: input, shape index: {}]
  %s11 = inlined_call_operand.vmem [shape: f32[8,128], index: 11, kind: output, shape index: {}]
  %s12 = sld [smem:[#allocation0]]
  $region66: #{net_forward.1} parent=0
    _
  %s14 = ssub.s32 1, %s12
  %s15 = scalar_select 0, %s14, %s12
  $region1: #{net_forward.1} parent=0
    #allocation2 [shape = 'u8[163840]{0}', space=vmem, size = 0x28000, scoped, tag = 'input window, operand 1, single buffered']
    #allocation3 [shape = 's32[1]{0}', space=sflag, size = 0x4, scoped, tag = 'scoped memory for net_forward.1']
    #allocation4 [shape = 'u8[131072]{0}', space=vmem, size = 0x20000, scoped, tag = 'input window, operand 5, single buffered']
    #allocation5 [shape = 's32[1]{0}', space=sflag, size = 0x4, scoped, tag = 'scoped memory for net_forward.1']
    #allocation6 [shape = 'u8[65536]{0}', space=vmem, size = 0x10000, scoped, tag = 'input window, operand 9, single buffered']
    %16 = vsyncpa [#allocation3], 0
    %17 = vsyncpa [#allocation5], 0
    // Predicated region
    $region2: #{net_forward.1} parent=1 // pred_check
      _
    $region3: #{net_forward.1} parent=1 // pred_check_branch
      %19 = sbr.rel (0) target = $region5
    $region4: #{net_forward.1} parent=1 // pred_region
      _
    $region5: #{net_forward.1} parent=1 // pred_fallthru
      _
    // Predicated region
    $region6: #{net_forward.1} parent=1 // pred_check
      _
    $region7: #{net_forward.1} parent=1 // pred_check_branch
      %21 = sbr.rel (0) target = $region9
    $region8: #{net_forward.1} parent=1 // pred_region
      %s23 = ssub.s32 5120, 5120
      %24 = vsyncadd [#allocation3], %s23
      %s25 = sshll.u32 [#allocation2], 4
      %s26 = int_to_ptr.vmem [resolvable:$true] %s25
      %31 = dma.hbm_to_vmem [thread:$0]  %s1, 5120, %s26, [#allocation3], 256, 256, 16
    $region9: #{net_forward.1} parent=1 // pred_fallthru
      _
    // Predicated region
    $region10: #{net_forward.1} parent=1 // pred_check
      _
    $region11: #{net_forward.1} parent=1 // pred_check_branch
      %33 = sbr.rel (0) target = $region13
    $region12: #{net_forward.1} parent=1 // pred_region
      _
    $region13: #{net_forward.1} parent=1 // pred_fallthru
      _
    // Predicated region
    $region14: #{net_forward.1} parent=1 // pred_check
      _
    $region15: #{net_forward.1} parent=1 // pred_check_branch
      %35 = sbr.rel (0) target = $region17
    $region16: #{net_forward.1} parent=1 // pred_region
      _
    $region17: #{net_forward.1} parent=1 // pred_fallthru
      _
    // Predicated region
    $region18: #{net_forward.1} parent=1 // pred_check
      _
    $region19: #{net_forward.1} parent=1 // pred_check_branch
      %37 = sbr.rel (0) target = $region21
    $region20: #{net_forward.1} parent=1 // pred_region
      _
    $region21: #{net_forward.1} parent=1 // pred_fallthru
      _
    // Predicated region
    $region22: #{net_forward.1} parent=1 // pred_check
      _
    $region23: #{net_forward.1} parent=1 // pred_check_branch
      %39 = sbr.rel (0) target = $region25
    $region24: #{net_forward.1} parent=1 // pred_region
      %s41 = ssub.s32 4096, 4096
      %42 = vsyncadd [#allocation5], %s41
      %s43 = sshll.u32 [#allocation4], 4
      %s44 = int_to_ptr.vmem [resolvable:$true] %s43
      %49 = dma.hbm_to_vmem [thread:$0]  %s5, 4096, %s44, [#allocation5], 128, 128, 8
    $region25: #{net_forward.1} parent=1 // pred_fallthru
      _
    // Predicated region
    $region26: #{net_forward.1} parent=1 // pred_check
      _
    $region27: #{net_forward.1} parent=1 // pred_check_branch
      %51 = sbr.rel (0) target = $region29
    $region28: #{net_forward.1} parent=1 // pred_region
      _
    $region29: #{net_forward.1} parent=1 // pred_fallthru
      _
    // Predicated region
    $region30: #{net_forward.1} parent=1 // pred_check
      _
    $region31: #{net_forward.1} parent=1 // pred_check_branch
      %53 = sbr.rel (0) target = $region33
    $region32: #{net_forward.1} parent=1 // pred_region
      _
    $region33: #{net_forward.1} parent=1 // pred_fallthru
      _
    // Predicated region
    $region34: #{net_forward.1} parent=1 // pred_check
      _
    $region35: #{net_forward.1} parent=1 // pred_check_branch
      %55 = sbr.rel (0) target = $region37
    $region36: #{net_forward.1} parent=1 // pred_region
      _
    $region37: #{net_forward.1} parent=1 // pred_fallthru
      _
    // Predicated region
    $region38: #{net_forward.1} parent=1 // pred_check
      _
    $region39: #{net_forward.1} parent=1 // pred_check_branch
      %57 = sbr.rel (0) target = $region41
    $region40: #{net_forward.1} parent=1 // pred_region
      %s59 = ssub.s32 2048, 2048
      %60 = vsyncadd [#allocation5], %s59
      %s61 = sshll.u32 [#allocation6], 4
      %s62 = int_to_ptr.vmem [resolvable:$true] %s61
      %67 = dma.hbm_to_vmem [thread:$0]  %s9, 2048, %s62, [#allocation5], 128, 128, 8
    $region41: #{net_forward.1} parent=1 // pred_fallthru
      _
    // Predicated region
    $region42: #{net_forward.1} parent=1 // pred_check
      _
    $region43: #{net_forward.1} parent=1 // pred_check_branch
      %69 = sbr.rel (0) target = $region45
    $region44: #{net_forward.1} parent=1 // pred_region
      _
    $region45: #{net_forward.1} parent=1 // pred_fallthru
      _
    // Predicated region
    $region46: #{net_forward.1} parent=1 // pred_check
      _
    $region47: #{net_forward.1} parent=1 // pred_check_branch
      %71 = sbr.rel (0) target = $region49
    $region48: #{net_forward.1} parent=1 // pred_region
      %72 = dma.done [#allocation3], 5120
    $region49: #{net_forward.1} parent=1 // pred_fallthru
      _
    // Predicated region
    $region50: #{net_forward.1} parent=1 // pred_check
      _
    $region51: #{net_forward.1} parent=1 // pred_check_branch
      %74 = sbr.rel (0) target = $region53
    $region52: #{net_forward.1} parent=1 // pred_region
      %75 = dma.done [#allocation5], 4096
    $region53: #{net_forward.1} parent=1 // pred_fallthru
      _
    // Predicated region
    $region54: #{net_forward.1} parent=1 // pred_check
      _
    $region55: #{net_forward.1} parent=1 // pred_check_branch
      %77 = sbr.rel (0) target = $region57
    $region56: #{net_forward.1} parent=1 // pred_region
      %78 = dma.done [#allocation5], 2048
    $region57: #{net_forward.1} parent=1 // pred_fallthru
      _
    %v79 = vld [vmem:[%s0] sm:$0xff]
    %v80 = vld [vmem:[%s0 + $0x8] sm:$0xff]
    %v81 = vld [vmem:[%s0 + $0x10] sm:$0xff]
    %v82 = vld [vmem:[%s0 + $0x18] sm:$0xf]
    %v83 = vld [vmem:[%s0 + $0x20] sm:$0xff]
    %v84 = vld [vmem:[%s0 + $0x28] sm:$0xff]
    %v85 = vld [vmem:[%s0 + $0x30] sm:$0xff]
    %v86 = vld [vmem:[%s0 + $0x38] sm:$0xf]
    %v87 = vld [vmem:[%s0 + $0x40] sm:$0xff]
    %v88 = vld [vmem:[%s0 + $0x48] sm:$0xff]
    %v89 = vld [vmem:[%s0 + $0x50] sm:$0xff]
    %v90 = vld [vmem:[%s0 + $0x58] sm:$0xf]
    %v91 = vld [vmem:[%s0 + $0x60] sm:$0xff]
    %v92 = vld [vmem:[%s0 + $0x68] sm:$0xff]
    %v93 = vld [vmem:[%s0 + $0x70] sm:$0xff]
    %v94 = vld [vmem:[%s0 + $0x78] sm:$0xf]
    %v95 = vld [vmem:[%s0 + $0x80] sm:$0xff]
    %v96 = vld [vmem:[%s0 + $0x88] sm:$0xff]
    %v97 = vld [vmem:[%s0 + $0x90] sm:$0xff]
    %v98 = vld [vmem:[%s0 + $0x98] sm:$0xf]
    %v99 = vld [vmem:[%s0 + $0xa0] sm:$0xff]
    %v100 = vld [vmem:[%s0 + $0xa8] sm:$0xff]
    %v101 = vld [vmem:[%s0 + $0xb0] sm:$0xff]
    %v102 = vld [vmem:[%s0 + $0xb8] sm:$0xf]
    %v103 = vld [vmem:[%s0 + $0xc0] sm:$0xff]
    %v104 = vld [vmem:[%s0 + $0xc8] sm:$0xff]
    %v105 = vld [vmem:[%s0 + $0xd0] sm:$0xff]
    %v106 = vld [vmem:[%s0 + $0xd8] sm:$0xf]
    %v107 = vld [vmem:[%s0 + $0xe0] sm:$0xff]
    %v108 = vld [vmem:[%s0 + $0xe8] sm:$0xff]
    %v109 = vld [vmem:[%s0 + $0xf0] sm:$0xff]
    %v110 = vld [vmem:[%s0 + $0xf8] sm:$0xf]
    %v111 = vld [vmem:[#allocation2] sm:$0xff]
    %v112 = vld [vmem:[#allocation2 + $0x8] sm:$0xff]
    %v113 = vld [vmem:[#allocation2 + $0x10] sm:$0xff]
    %v114 = vld [vmem:[#allocation2 + $0x18] sm:$0xff]
    %v115 = vld [vmem:[#allocation2 + $0x20] sm:$0xff]
    %v116 = vld [vmem:[#allocation2 + $0x28] sm:$0xff]
    %v117 = vld [vmem:[#allocation2 + $0x30] sm:$0xf]
    %v118 = vld [vmem:[#allocation2 + $0x38] sm:$0xf]
    %vm151 = vcmask 1046528
    %v152 = vrot.slane %v79, 1
    %v153 = vrot.slane %v80, 1
    %v154 = vsel %vm151, %v152, %v153
    %v155 = vrot.slane %v81, 1
    %v156 = vsel %vm151, %v153, %v155
    %v157 = vrot.slane %v82, 1
    %v158 = vsel %vm151, %v155, %v157
    %v159 = vrot.slane %v83, 1
    %v160 = vrot.slane %v84, 1
    %v161 = vsel %vm151, %v159, %v160
    %v162 = vrot.slane %v85, 1
    %v163 = vsel %vm151, %v160, %v162
    %v164 = vrot.slane %v86, 1
    %v165 = vsel %vm151, %v162, %v164
    %v166 = vrot.slane %v87, 1
    %v167 = vrot.slane %v88, 1
    %v168 = vsel %vm151, %v166, %v167
    %v169 = vrot.slane %v89, 1
    %v170 = vsel %vm151, %v167, %v169
    %v171 = vrot.slane %v90, 1
    %v172 = vsel %vm151, %v169, %v171
    %v173 = vrot.slane %v91, 1
    %v174 = vrot.slane %v92, 1
    %v175 = vsel %vm151, %v173, %v174
    %v176 = vrot.slane %v93, 1
    %v177 = vsel %vm151, %v174, %v176
    %v178 = vrot.slane %v94, 1
    %v179 = vsel %vm151, %v176, %v178
    %v180 = vrot.slane %v95, 1
    %v181 = vrot.slane %v96, 1
    %v182 = vsel %vm151, %v180, %v181
    %v183 = vrot.slane %v97, 1
    %v184 = vsel %vm151, %v181, %v183
    %v185 = vrot.slane %v98, 1
    %v186 = vsel %vm151, %v183, %v185
    %v187 = vrot.slane %v99, 1
    %v188 = vrot.slane %v100, 1
    %v189 = vsel %vm151, %v187, %v188
    %v190 = vrot.slane %v101, 1
    %v191 = vsel %vm151, %v188, %v190
    %v192 = vrot.slane %v102, 1
    %v193 = vsel %vm151, %v190, %v192
    %v194 = vrot.slane %v103, 1
    %v195 = vrot.slane %v104, 1
    %v196 = vsel %vm151, %v194, %v195
    %v197 = vrot.slane %v105, 1
    %v198 = vsel %vm151, %v195, %v197
    %v199 = vrot.slane %v106, 1
    %v200 = vsel %vm151, %v197, %v199
    %v201 = vrot.slane %v107, 1
    %v202 = vrot.slane %v108, 1
    %v203 = vsel %vm151, %v201, %v202
    %v204 = vrot.slane %v109, 1
    %v205 = vsel %vm151, %v202, %v204
    %v206 = vrot.slane %v110, 1
    %v207 = vsel %vm151, %v204, %v206
    %s208 = scalar_lea.vmem [#allocation2], 64
    %v209 = vld [vmem:[%s208] sm:$0xff]
    %v210 = vld [vmem:[%s208 + $0x8] sm:$0xff]
    %v211 = vld [vmem:[%s208 + $0x10] sm:$0xff]
    %v212 = vld [vmem:[%s208 + $0x18] sm:$0xff]
    %v213 = vld [vmem:[%s208 + $0x20] sm:$0xff]
    %v214 = vld [vmem:[%s208 + $0x28] sm:$0xff]
    %v215 = vld [vmem:[%s208 + $0x30] sm:$0xf]
    %v216 = vld [vmem:[%s208 + $0x38] sm:$0xf]
    %vm217 = vcmask 228352
    %v218 = vsel %vm217, %v154, 0
    %v220 = vsel %vm217, %v156, 0
    %v222 = vsel %vm217, %v158, 0
    %v224 = vsel %vm217, %v161, 0
    %v226 = vsel %vm217, %v163, 0
    %v228 = vsel %vm217, %v165, 0
    %v230 = vsel %vm217, %v168, 0
    %v232 = vsel %vm217, %v170, 0
    %v234 = vsel %vm217, %v172, 0
    %v236 = vsel %vm217, %v175, 0
    %v238 = vsel %vm217, %v177, 0
    %v240 = vsel %vm217, %v179, 0
    %v242 = vsel %vm217, %v182, 0
    %v244 = vsel %vm217, %v184, 0
    %v246 = vsel %vm217, %v186, 0
    %v248 = vsel %vm217, %v189, 0
    %v250 = vsel %vm217, %v191, 0
    %v252 = vsel %vm217, %v193, 0
    %v254 = vsel %vm217, %v196, 0
    %v256 = vsel %vm217, %v198, 0
    %v258 = vsel %vm217, %v200, 0
    %v260 = vsel %vm217, %v203, 0
    %v262 = vsel %vm217, %v205, 0
    %v264 = vsel %vm217, %v207, 0
    %vm266 = vcmask 1043456
    %v268 = vsel %vm266, %v215, 0
    %v271 = vsel %vm266, %v216, 0
    %273 = vmatprep.subr.mxu0 0.0
    %274 = vmatpush1.msra.mxu0 0.0
    %275 = vmatprep.subr.mxu0 0.0
    %276 = vmatpush1.msra.mxu0 0.0
    %277 = vmatprep.subr.mxu0 0.0
    %278 = vmatpush1.msra.mxu0 0.0
    %279 = vmatprep.subr.mxu0 0.0
    %280 = vmatpush1.msra.mxu0 0.0
    %281 = vmatprep.subr.mxu0 0.0
    %282 = vmatpush1.msra.mxu0 0.0
    %283 = vmatprep.subr.mxu0 0.0
    %284 = vmatpush1.msra.mxu0 0.0
    %285 = vmatprep.subr.mxu0 0.0
    %286 = vmatpush1.msra.mxu0 0.0
    %287 = vmatprep.subr.mxu0 0.0
    %288 = vmatpush1.msra.mxu0 0.0
    %289 = vmatprep.subr.mxu0 0.0
    %290 = vmatpush1.msra.mxu0 0.0
    %291 = vmatprep.subr.mxu0 0.0
    %292 = vmatpush1.msra.mxu0 0.0
    %293 = vmatprep.subr.mxu0 0.0
    %294 = vmatpush1.msra.mxu0 0.0
    %295 = vmatprep.subr.mxu0 0.0
    %296 = vmatpush1.msra.mxu0 0.0
    %297 = vmatprep.subr.mxu0 %v271
    %298 = vmatpush1.msra.mxu0 %v268
    %299 = vmatprep.subr.mxu0 %v214
    %300 = vmatpush1.msra.mxu0 %v213
    %301 = vmatprep.subr.mxu0 %v212
    %302 = vmatpush1.msra.mxu0 %v211
    %303 = vmatprep.subr.mxu0 %v210
    %304 = vmatpush1.msra.mxu0 %v209
    %305 = vmatprep.subr.mxu0 0.0
    %306 = vmatpush2.msra.mxu0 0.0
    %307 = vmatprep.subr.mxu0 0.0
    %308 = vmatpush2.msra.mxu0 0.0
    %309 = vmatprep.subr.mxu0 0.0
    %310 = vmatpush2.msra.mxu0 0.0
    %311 = vmatprep.subr.mxu0 0.0
    %312 = vmatpush2.msra.mxu0 0.0
    %313 = vmatprep.subr.mxu0 0.0
    %314 = vmatpush2.msra.mxu0 0.0
    %315 = vmatprep.subr.mxu0 0.0
    %316 = vmatpush2.msra.mxu0 0.0
    %317 = vmatprep.subr.mxu0 0.0
    %318 = vmatpush2.msra.mxu0 0.0
    %319 = vmatprep.subr.mxu0 0.0
    %320 = vmatpush2.msra.mxu0 0.0
    %321 = vmatprep.subr.mxu0 0.0
    %322 = vmatpush2.msra.mxu0 0.0
    %323 = vmatprep.subr.mxu0 0.0
    %324 = vmatpush2.msra.mxu0 0.0
    %325 = vmatprep.subr.mxu0 0.0
    %326 = vmatpush2.msra.mxu0 0.0
    %327 = vmatprep.subr.mxu0 0.0
    %328 = vmatpush2.msra.mxu0 0.0
    %329 = vmatprep.subr.mxu0 0.0
    %330 = vmatpush2.msra.mxu0 0.0
    %331 = vmatprep.subr.mxu0 0.0
    %332 = vmatpush2.msra.mxu0 0.0
    %333 = vmatprep.subr.mxu0 0.0
    %334 = vmatpush2.msra.mxu0 0.0
    %335 = vmatprep.subr.mxu0 0.0
    %336 = vmatpush2.msra.mxu0 0.0
    %337 = vmatprep.mubr.f32.mxu0 0.0
    %338 = vmatmul.mubr.f32.gmra.mxu0 %v218
    %v339 = vpop.f32.mrf.mxu0
    %v340 = vadd.f32 0.0, %v339
    %v341 = vpop.f32.mrf.mxu0
    %v342 = vadd.f32 0.0, %v341
    %343 = vmatprep.mubr.f32.mxu0 0.0
    %344 = vmatmul.mubr.f32.gmra.mxu0 %v220
    %v345 = vpop.f32.mrf.mxu0
    %v346 = vadd.f32 0.0, %v345
    %v347 = vpop.f32.mrf.mxu0
    %v348 = vadd.f32 0.0, %v347
    %349 = vmatprep.mubr.f32.mxu0 0.0
    %350 = vmatmul.mubr.f32.gmra.mxu0 %v222
    %v351 = vpop.f32.mrf.mxu0
    %v352 = vadd.f32 0.0, %v351
    %v353 = vpop.f32.mrf.mxu0
    %v354 = vadd.f32 0.0, %v353
    %355 = vmatprep.mubr.f32.mxu0 0.0
    %356 = vmatmul.mubr.f32.gmra.mxu0 %v224
    %v357 = vpop.f32.mrf.mxu0
    %v358 = vadd.f32 0.0, %v357
    %v359 = vpop.f32.mrf.mxu0
    %v360 = vadd.f32 0.0, %v359
    %361 = vmatprep.mubr.f32.mxu0 0.0
    %362 = vmatmul.mubr.f32.gmra.mxu0 %v226
    %v363 = vpop.f32.mrf.mxu0
    %v364 = vadd.f32 0.0, %v363
    %v365 = vpop.f32.mrf.mxu0
    %v366 = vadd.f32 0.0, %v365
    %367 = vmatprep.mubr.f32.mxu0 0.0
    %368 = vmatmul.mubr.f32.gmra.mxu0 %v228
    %v369 = vpop.f32.mrf.mxu0
    %v370 = vadd.f32 0.0, %v369
    %v371 = vpop.f32.mrf.mxu0
    %v372 = vadd.f32 0.0, %v371
    %373 = vmatprep.mubr.f32.mxu0 0.0
    %374 = vmatmul.mubr.f32.gmra.mxu0 %v230
    %v375 = vpop.f32.mrf.mxu0
    %v376 = vadd.f32 0.0, %v375
    %v377 = vpop.f32.mrf.mxu0
    %v378 = vadd.f32 0.0, %v377
    %379 = vmatprep.mubr.f32.mxu0 0.0
    %380 = vmatmul.mubr.f32.gmra.mxu0 %v232
    %v381 = vpop.f32.mrf.mxu0
    %v382 = vadd.f32 0.0, %v381
    %v383 = vpop.f32.mrf.mxu0
    %v384 = vadd.f32 0.0, %v383
    %385 = vmatprep.mubr.f32.mxu0 0.0
    %386 = vmatmul.mubr.f32.gmra.mxu0 %v234
    %v387 = vpop.f32.mrf.mxu0
    %v388 = vadd.f32 0.0, %v387
    %v389 = vpop.f32.mrf.mxu0
    %v390 = vadd.f32 0.0, %v389
    %391 = vmatprep.mubr.f32.mxu0 0.0
    %392 = vmatmul.mubr.f32.gmra.mxu0 %v236
    %v393 = vpop.f32.mrf.mxu0
    %v394 = vadd.f32 0.0, %v393
    %v395 = vpop.f32.mrf.mxu0
    %v396 = vadd.f32 0.0, %v395
    %397 = vmatprep.mubr.f32.mxu0 0.0
    %398 = vmatmul.mubr.f32.gmra.mxu0 %v238
    %v399 = vpop.f32.mrf.mxu0
    %v400 = vadd.f32 0.0, %v399
    %v401 = vpop.f32.mrf.mxu0
    %v402 = vadd.f32 0.0, %v401
    %403 = vmatprep.mubr.f32.mxu0 0.0
    %404 = vmatmul.mubr.f32.gmra.mxu0 %v240
    %v405 = vpop.f32.mrf.mxu0
    %v406 = vadd.f32 0.0, %v405
    %v407 = vpop.f32.mrf.mxu0
    %v408 = vadd.f32 0.0, %v407
    %409 = vmatprep.mubr.f32.mxu0 0.0
    %410 = vmatmul.mubr.f32.gmra.mxu0 %v242
    %v411 = vpop.f32.mrf.mxu0
    %v412 = vadd.f32 0.0, %v411
    %v413 = vpop.f32.mrf.mxu0
    %v414 = vadd.f32 0.0, %v413
    %415 = vmatprep.mubr.f32.mxu0 0.0
    %416 = vmatmul.mubr.f32.gmra.mxu0 %v244
    %v417 = vpop.f32.mrf.mxu0
    %v418 = vadd.f32 0.0, %v417
    %v419 = vpop.f32.mrf.mxu0
    %v420 = vadd.f32 0.0, %v419
    %421 = vmatprep.mubr.f32.mxu0 0.0
    %422 = vmatmul.mubr.f32.gmra.mxu0 %v246
    %v423 = vpop.f32.mrf.mxu0
    %v424 = vadd.f32 0.0, %v423
    %v425 = vpop.f32.mrf.mxu0
    %v426 = vadd.f32 0.0, %v425
    %427 = vmatprep.mubr.f32.mxu0 0.0
    %428 = vmatmul.mubr.f32.gmra.mxu0 %v248
    %v429 = vpop.f32.mrf.mxu0
    %v430 = vadd.f32 0.0, %v429
    %v431 = vpop.f32.mrf.mxu0
    %v432 = vadd.f32 0.0, %v431
    %433 = vmatprep.mubr.f32.mxu0 0.0
    %434 = vmatmul.mubr.f32.gmra.mxu0 %v250
    %v435 = vpop.f32.mrf.mxu0
    %v436 = vadd.f32 0.0, %v435
    %v437 = vpop.f32.mrf.mxu0
    %v438 = vadd.f32 0.0, %v437
    %439 = vmatprep.mubr.f32.mxu0 0.0
    %440 = vmatmul.mubr.f32.gmra.mxu0 %v252
    %v441 = vpop.f32.mrf.mxu0
    %v442 = vadd.f32 0.0, %v441
    %v443 = vpop.f32.mrf.mxu0
    %v444 = vadd.f32 0.0, %v443
    %445 = vmatprep.mubr.f32.mxu0 0.0
    %446 = vmatmul.mubr.f32.gmra.mxu0 %v254
    %v447 = vpop.f32.mrf.mxu0
    %v448 = vadd.f32 0.0, %v447
    %v449 = vpop.f32.mrf.mxu0
    %v450 = vadd.f32 0.0, %v449
    %451 = vmatprep.mubr.f32.mxu0 0.0
    %452 = vmatmul.mubr.f32.gmra.mxu0 %v256
    %v453 = vpop.f32.mrf.mxu0
    %v454 = vadd.f32 0.0, %v453
    %v455 = vpop.f32.mrf.mxu0
    %v456 = vadd.f32 0.0, %v455
    %457 = vmatprep.mubr.f32.mxu0 0.0
    %458 = vmatmul.mubr.f32.gmra.mxu0 %v258
    %v459 = vpop.f32.mrf.mxu0
    %v460 = vadd.f32 0.0, %v459
    %v461 = vpop.f32.mrf.mxu0
    %v462 = vadd.f32 0.0, %v461
    %463 = vmatprep.mubr.f32.mxu0 0.0
    %464 = vmatmul.mubr.f32.gmra.mxu0 %v260
    %v465 = vpop.f32.mrf.mxu0
    %v466 = vadd.f32 0.0, %v465
    %v467 = vpop.f32.mrf.mxu0
    %v468 = vadd.f32 0.0, %v467
    %469 = vmatprep.mubr.f32.mxu0 0.0
    %470 = vmatmul.mubr.f32.gmra.mxu0 %v262
    %v471 = vpop.f32.mrf.mxu0
    %v472 = vadd.f32 0.0, %v471
    %v473 = vpop.f32.mrf.mxu0
    %v474 = vadd.f32 0.0, %v473
    %475 = vmatprep.mubr.f32.mxu0 0.0
    %476 = vmatmul.mubr.f32.gmra.mxu0 %v264
    %v477 = vpop.f32.mrf.mxu0
    %v478 = vadd.f32 0.0, %v477
    %v479 = vpop.f32.mrf.mxu0
    %v480 = vadd.f32 0.0, %v479
    %481 = vdwg.mxu0
    %v482 = vsel %vm217, %v79, 0
    %v484 = vsel %vm217, %v80, 0
    %v486 = vsel %vm217, %v81, 0
    %v488 = vsel %vm217, %v83, 0
    %v490 = vsel %vm217, %v84, 0
    %v492 = vsel %vm217, %v85, 0
    %v494 = vsel %vm217, %v87, 0
    %v496 = vsel %vm217, %v88, 0
    %v498 = vsel %vm217, %v89, 0
    %v500 = vsel %vm217, %v91, 0
    %v502 = vsel %vm217, %v92, 0
    %v504 = vsel %vm217, %v93, 0
    %v506 = vsel %vm217, %v95, 0
    %v508 = vsel %vm217, %v96, 0
    %v510 = vsel %vm217, %v97, 0
    %v512 = vsel %vm217, %v99, 0
    %v514 = vsel %vm217, %v100, 0
    %v516 = vsel %vm217, %v101, 0
    %v518 = vsel %vm217, %v103, 0
    %v520 = vsel %vm217, %v104, 0
    %v522 = vsel %vm217, %v105, 0
    %v524 = vsel %vm217, %v107, 0
    %v526 = vsel %vm217, %v108, 0
    %v528 = vsel %vm217, %v109, 0
    %v531 = vsel %vm266, %v117, 0
    %v534 = vsel %vm266, %v118, 0
    %536 = vmatprep.subr.mxu0 0.0
    %537 = vmatpush1.msra.mxu0 0.0
    %538 = vmatprep.subr.mxu0 0.0
    %539 = vmatpush1.msra.mxu0 0.0
    %540 = vmatprep.subr.mxu0 0.0
    %541 = vmatpush1.msra.mxu0 0.0
    %542 = vmatprep.subr.mxu0 0.0
    %543 = vmatpush1.msra.mxu0 0.0
    %544 = vmatprep.subr.mxu0 0.0
    %545 = vmatpush1.msra.mxu0 0.0
    %546 = vmatprep.subr.mxu0 0.0
    %547 = vmatpush1.msra.mxu0 0.0
    %548 = vmatprep.subr.mxu0 0.0
    %549 = vmatpush1.msra.mxu0 0.0
    %550 = vmatprep.subr.mxu0 0.0
    %551 = vmatpush1.msra.mxu0 0.0
    %552 = vmatprep.subr.mxu0 0.0
    %553 = vmatpush1.msra.mxu0 0.0
    %554 = vmatprep.subr.mxu0 0.0
    %555 = vmatpush1.msra.mxu0 0.0
    %556 = vmatprep.subr.mxu0 0.0
    %557 = vmatpush1.msra.mxu0 0.0
    %558 = vmatprep.subr.mxu0 0.0
    %559 = vmatpush1.msra.mxu0 0.0
    %560 = vmatprep.subr.mxu0 %v534
    %561 = vmatpush1.msra.mxu0 %v531
    %562 = vmatprep.subr.mxu0 %v116
    %563 = vmatpush1.msra.mxu0 %v115
    %564 = vmatprep.subr.mxu0 %v114
    %565 = vmatpush1.msra.mxu0 %v113
    %566 = vmatprep.subr.mxu0 %v112
    %567 = vmatpush1.msra.mxu0 %v111
    %568 = vmatprep.subr.mxu0 0.0
    %569 = vmatpush2.msra.mxu0 0.0
    %570 = vmatprep.subr.mxu0 0.0
    %571 = vmatpush2.msra.mxu0 0.0
    %572 = vmatprep.subr.mxu0 0.0
    %573 = vmatpush2.msra.mxu0 0.0
    %574 = vmatprep.subr.mxu0 0.0
    %575 = vmatpush2.msra.mxu0 0.0
    %576 = vmatprep.subr.mxu0 0.0
    %577 = vmatpush2.msra.mxu0 0.0
    %578 = vmatprep.subr.mxu0 0.0
    %579 = vmatpush2.msra.mxu0 0.0
    %580 = vmatprep.subr.mxu0 0.0
    %581 = vmatpush2.msra.mxu0 0.0
    %582 = vmatprep.subr.mxu0 0.0
    %583 = vmatpush2.msra.mxu0 0.0
    %584 = vmatprep.subr.mxu0 0.0
    %585 = vmatpush2.msra.mxu0 0.0
    %586 = vmatprep.subr.mxu0 0.0
    %587 = vmatpush2.msra.mxu0 0.0
    %588 = vmatprep.subr.mxu0 0.0
    %589 = vmatpush2.msra.mxu0 0.0
    %590 = vmatprep.subr.mxu0 0.0
    %591 = vmatpush2.msra.mxu0 0.0
    %592 = vmatprep.subr.mxu0 0.0
    %593 = vmatpush2.msra.mxu0 0.0
    %594 = vmatprep.subr.mxu0 0.0
    %595 = vmatpush2.msra.mxu0 0.0
    %596 = vmatprep.subr.mxu0 0.0
    %597 = vmatpush2.msra.mxu0 0.0
    %598 = vmatprep.subr.mxu0 0.0
    %599 = vmatpush2.msra.mxu0 0.0
    %600 = vmatprep.mubr.f32.mxu0 0.0
    %601 = vmatmul.mubr.f32.gmra.mxu0 %v482
    %v602 = vpop.f32.mrf.mxu0
    %v603 = vadd.f32 %v340, %v602
    %v604 = vpop.f32.mrf.mxu0
    %v605 = vadd.f32 %v342, %v604
    %606 = vmatprep.mubr.f32.mxu0 0.0
    %607 = vmatmul.mubr.f32.gmra.mxu0 %v484
    %v608 = vpop.f32.mrf.mxu0
    %v609 = vadd.f32 %v346, %v608
    %v610 = vpop.f32.mrf.mxu0
    %v611 = vadd.f32 %v348, %v610
    %612 = vmatprep.mubr.f32.mxu0 0.0
    %613 = vmatmul.mubr.f32.gmra.mxu0 %v486
    %v614 = vpop.f32.mrf.mxu0
    %v615 = vadd.f32 %v352, %v614
    %v616 = vpop.f32.mrf.mxu0
    %v617 = vadd.f32 %v354, %v616
    %618 = vmatprep.mubr.f32.mxu0 0.0
    %619 = vmatmul.mubr.f32.gmra.mxu0 %v488
    %v620 = vpop.f32.mrf.mxu0
    %v621 = vadd.f32 %v358, %v620
    %v622 = vpop.f32.mrf.mxu0
    %v623 = vadd.f32 %v360, %v622
    %624 = vmatprep.mubr.f32.mxu0 0.0
    %625 = vmatmul.mubr.f32.gmra.mxu0 %v490
    %v626 = vpop.f32.mrf.mxu0
    %v627 = vadd.f32 %v364, %v626
    %v628 = vpop.f32.mrf.mxu0
    %v629 = vadd.f32 %v366, %v628
    %630 = vmatprep.mubr.f32.mxu0 0.0
    %631 = vmatmul.mubr.f32.gmra.mxu0 %v492
    %v632 = vpop.f32.mrf.mxu0
    %v633 = vadd.f32 %v370, %v632
    %v634 = vpop.f32.mrf.mxu0
    %v635 = vadd.f32 %v372, %v634
    %636 = vmatprep.mubr.f32.mxu0 0.0
    %637 = vmatmul.mubr.f32.gmra.mxu0 %v494
    %v638 = vpop.f32.mrf.mxu0
    %v639 = vadd.f32 %v376, %v638
    %v640 = vpop.f32.mrf.mxu0
    %v641 = vadd.f32 %v378, %v640
    %642 = vmatprep.mubr.f32.mxu0 0.0
    %643 = vmatmul.mubr.f32.gmra.mxu0 %v496
    %v644 = vpop.f32.mrf.mxu0
    %v645 = vadd.f32 %v382, %v644
    %v646 = vpop.f32.mrf.mxu0
    %v647 = vadd.f32 %v384, %v646
    %648 = vmatprep.mubr.f32.mxu0 0.0
    %649 = vmatmul.mubr.f32.gmra.mxu0 %v498
    %v650 = vpop.f32.mrf.mxu0
    %v651 = vadd.f32 %v388, %v650
    %v652 = vpop.f32.mrf.mxu0
    %v653 = vadd.f32 %v390, %v652
    %654 = vmatprep.mubr.f32.mxu0 0.0
    %655 = vmatmul.mubr.f32.gmra.mxu0 %v500
    %v656 = vpop.f32.mrf.mxu0
    %v657 = vadd.f32 %v394, %v656
    %v658 = vpop.f32.mrf.mxu0
    %v659 = vadd.f32 %v396, %v658
    %660 = vmatprep.mubr.f32.mxu0 0.0
    %661 = vmatmul.mubr.f32.gmra.mxu0 %v502
    %v662 = vpop.f32.mrf.mxu0
    %v663 = vadd.f32 %v400, %v662
    %v664 = vpop.f32.mrf.mxu0
    %v665 = vadd.f32 %v402, %v664
    %666 = vmatprep.mubr.f32.mxu0 0.0
    %667 = vmatmul.mubr.f32.gmra.mxu0 %v504
    %v668 = vpop.f32.mrf.mxu0
    %v669 = vadd.f32 %v406, %v668
    %v670 = vpop.f32.mrf.mxu0
    %v671 = vadd.f32 %v408, %v670
    %672 = vmatprep.mubr.f32.mxu0 0.0
    %673 = vmatmul.mubr.f32.gmra.mxu0 %v506
    %v674 = vpop.f32.mrf.mxu0
    %v675 = vadd.f32 %v412, %v674
    %v676 = vpop.f32.mrf.mxu0
    %v677 = vadd.f32 %v414, %v676
    %678 = vmatprep.mubr.f32.mxu0 0.0
    %679 = vmatmul.mubr.f32.gmra.mxu0 %v508
    %v680 = vpop.f32.mrf.mxu0
    %v681 = vadd.f32 %v418, %v680
    %v682 = vpop.f32.mrf.mxu0
    %v683 = vadd.f32 %v420, %v682
    %684 = vmatprep.mubr.f32.mxu0 0.0
    %685 = vmatmul.mubr.f32.gmra.mxu0 %v510
    %v686 = vpop.f32.mrf.mxu0
    %v687 = vadd.f32 %v424, %v686
    %v688 = vpop.f32.mrf.mxu0
    %v689 = vadd.f32 %v426, %v688
    %690 = vmatprep.mubr.f32.mxu0 0.0
    %691 = vmatmul.mubr.f32.gmra.mxu0 %v512
    %v692 = vpop.f32.mrf.mxu0
    %v693 = vadd.f32 %v430, %v692
    %v694 = vpop.f32.mrf.mxu0
    %v695 = vadd.f32 %v432, %v694
    %696 = vmatprep.mubr.f32.mxu0 0.0
    %697 = vmatmul.mubr.f32.gmra.mxu0 %v514
    %v698 = vpop.f32.mrf.mxu0
    %v699 = vadd.f32 %v436, %v698
    %v700 = vpop.f32.mrf.mxu0
    %v701 = vadd.f32 %v438, %v700
    %702 = vmatprep.mubr.f32.mxu0 0.0
    %703 = vmatmul.mubr.f32.gmra.mxu0 %v516
    %v704 = vpop.f32.mrf.mxu0
    %v705 = vadd.f32 %v442, %v704
    %v706 = vpop.f32.mrf.mxu0
    %v707 = vadd.f32 %v444, %v706
    %708 = vmatprep.mubr.f32.mxu0 0.0
    %709 = vmatmul.mubr.f32.gmra.mxu0 %v518
    %v710 = vpop.f32.mrf.mxu0
    %v711 = vadd.f32 %v448, %v710
    %v712 = vpop.f32.mrf.mxu0
    %v713 = vadd.f32 %v450, %v712
    %714 = vmatprep.mubr.f32.mxu0 0.0
    %715 = vmatmul.mubr.f32.gmra.mxu0 %v520
    %v716 = vpop.f32.mrf.mxu0
    %v717 = vadd.f32 %v454, %v716
    %v718 = vpop.f32.mrf.mxu0
    %v719 = vadd.f32 %v456, %v718
    %720 = vmatprep.mubr.f32.mxu0 0.0
    %721 = vmatmul.mubr.f32.gmra.mxu0 %v522
    %v722 = vpop.f32.mrf.mxu0
    %v723 = vadd.f32 %v460, %v722
    %v724 = vpop.f32.mrf.mxu0
    %v725 = vadd.f32 %v462, %v724
    %726 = vmatprep.mubr.f32.mxu0 0.0
    %727 = vmatmul.mubr.f32.gmra.mxu0 %v524
    %v728 = vpop.f32.mrf.mxu0
    %v729 = vadd.f32 %v466, %v728
    %v730 = vpop.f32.mrf.mxu0
    %v731 = vadd.f32 %v468, %v730
    %732 = vmatprep.mubr.f32.mxu0 0.0
    %733 = vmatmul.mubr.f32.gmra.mxu0 %v526
    %v734 = vpop.f32.mrf.mxu0
    %v735 = vadd.f32 %v472, %v734
    %v736 = vpop.f32.mrf.mxu0
    %v737 = vadd.f32 %v474, %v736
    %738 = vmatprep.mubr.f32.mxu0 0.0
    %739 = vmatmul.mubr.f32.gmra.mxu0 %v528
    %v740 = vpop.f32.mrf.mxu0
    %v741 = vadd.f32 %v478, %v740
    %v742 = vpop.f32.mrf.mxu0
    %v743 = vadd.f32 %v480, %v742
    %744 = vdwg.mxu0
    %vm745 = vcmask 1045504
    %v746 = vrot.slane %v79, 2
    %v747 = vrot.slane %v80, 2
    %v748 = vsel %vm745, %v746, %v747
    %v749 = vrot.slane %v81, 2
    %v750 = vsel %vm745, %v747, %v749
    %v751 = vrot.slane %v82, 2
    %v752 = vsel %vm745, %v749, %v751
    %v753 = vrot.slane %v83, 2
    %v754 = vrot.slane %v84, 2
    %v755 = vsel %vm745, %v753, %v754
    %v756 = vrot.slane %v85, 2
    %v757 = vsel %vm745, %v754, %v756
    %v758 = vrot.slane %v86, 2
    %v759 = vsel %vm745, %v756, %v758
    %v760 = vrot.slane %v87, 2
    %v761 = vrot.slane %v88, 2
    %v762 = vsel %vm745, %v760, %v761
    %v763 = vrot.slane %v89, 2
    %v764 = vsel %vm745, %v761, %v763
    %v765 = vrot.slane %v90, 2
    %v766 = vsel %vm745, %v763, %v765
    %v767 = vrot.slane %v91, 2
    %v768 = vrot.slane %v92, 2
    %v769 = vsel %vm745, %v767, %v768
    %v770 = vrot.slane %v93, 2
    %v771 = vsel %vm745, %v768, %v770
    %v772 = vrot.slane %v94, 2
    %v773 = vsel %vm745, %v770, %v772
    %v774 = vrot.slane %v95, 2
    %v775 = vrot.slane %v96, 2
    %v776 = vsel %vm745, %v774, %v775
    %v777 = vrot.slane %v97, 2
    %v778 = vsel %vm745, %v775, %v777
    %v779 = vrot.slane %v98, 2
    %v780 = vsel %vm745, %v777, %v779
    %v781 = vrot.slane %v99, 2
    %v782 = vrot.slane %v100, 2
    %v783 = vsel %vm745, %v781, %v782
    %v784 = vrot.slane %v101, 2
    %v785 = vsel %vm745, %v782, %v784
    %v786 = vrot.slane %v102, 2
    %v787 = vsel %vm745, %v784, %v786
    %v788 = vrot.slane %v103, 2
    %v789 = vrot.slane %v104, 2
    %v790 = vsel %vm745, %v788, %v789
    %v791 = vrot.slane %v105, 2
    %v792 = vsel %vm745, %v789, %v791
    %v793 = vrot.slane %v106, 2
    %v794 = vsel %vm745, %v791, %v793
    %v795 = vrot.slane %v107, 2
    %v796 = vrot.slane %v108, 2
    %v797 = vsel %vm745, %v795, %v796
    %v798 = vrot.slane %v109, 2
    %v799 = vsel %vm745, %v796, %v798
    %v800 = vrot.slane %v110, 2
    %v801 = vsel %vm745, %v798, %v800
    %s802 = scalar_lea.vmem [#allocation2], 128
    %v803 = vld [vmem:[%s802] sm:$0xff]
    %v804 = vld [vmem:[%s802 + $0x8] sm:$0xff]
    %v805 = vld [vmem:[%s802 + $0x10] sm:$0xff]
    %v806 = vld [vmem:[%s802 + $0x18] sm:$0xff]
    %v807 = vld [vmem:[%s802 + $0x20] sm:$0xff]
    %v808 = vld [vmem:[%s802 + $0x28] sm:$0xff]
    %v809 = vld [vmem:[%s802 + $0x30] sm:$0xf]
    %v810 = vld [vmem:[%s802 + $0x38] sm:$0xf]
    %v811 = vsel %vm217, %v748, 0
    %v813 = vsel %vm217, %v750, 0
    %v815 = vsel %vm217, %v752, 0
    %v817 = vsel %vm217, %v755, 0
    %v819 = vsel %vm217, %v757, 0
    %v821 = vsel %vm217, %v759, 0
    %v823 = vsel %vm217, %v762, 0
    %v825 = vsel %vm217, %v764, 0
    %v827 = vsel %vm217, %v766, 0
    %v829 = vsel %vm217, %v769, 0
    %v831 = vsel %vm217, %v771, 0
    %v833 = vsel %vm217, %v773, 0
    %v835 = vsel %vm217, %v776, 0
    %v837 = vsel %vm217, %v778, 0
    %v839 = vsel %vm217, %v780, 0
    %v841 = vsel %vm217, %v783, 0
    %v843 = vsel %vm217, %v785, 0
    %v845 = vsel %vm217, %v787, 0
    %v847 = vsel %vm217, %v790, 0
    %v849 = vsel %vm217, %v792, 0
    %v851 = vsel %vm217, %v794, 0
    %v853 = vsel %vm217, %v797, 0
    %v855 = vsel %vm217, %v799, 0
    %v857 = vsel %vm217, %v801, 0
    %v860 = vsel %vm266, %v809, 0
    %v863 = vsel %vm266, %v810, 0
    %865 = vmatprep.subr.mxu0 0.0
    %866 = vmatpush1.msra.mxu0 0.0
    %867 = vmatprep.subr.mxu0 0.0
    %868 = vmatpush1.msra.mxu0 0.0
    %869 = vmatprep.subr.mxu0 0.0
    %870 = vmatpush1.msra.mxu0 0.0
    %871 = vmatprep.subr.mxu0 0.0
    %872 = vmatpush1.msra.mxu0 0.0
    %873 = vmatprep.subr.mxu0 0.0
    %874 = vmatpush1.msra.mxu0 0.0
    %875 = vmatprep.subr.mxu0 0.0
    %876 = vmatpush1.msra.mxu0 0.0
    %877 = vmatprep.subr.mxu0 0.0
    %878 = vmatpush1.msra.mxu0 0.0
    %879 = vmatprep.subr.mxu0 0.0
    %880 = vmatpush1.msra.mxu0 0.0
    %881 = vmatprep.subr.mxu0 0.0
    %882 = vmatpush1.msra.mxu0 0.0
    %883 = vmatprep.subr.mxu0 0.0
    %884 = vmatpush1.msra.mxu0 0.0
    %885 = vmatprep.subr.mxu0 0.0
    %886 = vmatpush1.msra.mxu0 0.0
    %887 = vmatprep.subr.mxu0 0.0
    %888 = vmatpush1.msra.mxu0 0.0
    %889 = vmatprep.subr.mxu0 %v863
    %890 = vmatpush1.msra.mxu0 %v860
    %891 = vmatprep.subr.mxu0 %v808
    %892 = vmatpush1.msra.mxu0 %v807
    %893 = vmatprep.subr.mxu0 %v806
    %894 = vmatpush1.msra.mxu0 %v805
    %895 = vmatprep.subr.mxu0 %v804
    %896 = vmatpush1.msra.mxu0 %v803
    %897 = vmatprep.subr.mxu0 0.0
    %898 = vmatpush2.msra.mxu0 0.0
    %899 = vmatprep.subr.mxu0 0.0
    %900 = vmatpush2.msra.mxu0 0.0
    %901 = vmatprep.subr.mxu0 0.0
    %902 = vmatpush2.msra.mxu0 0.0
    %903 = vmatprep.subr.mxu0 0.0
    %904 = vmatpush2.msra.mxu0 0.0
    %905 = vmatprep.subr.mxu0 0.0
    %906 = vmatpush2.msra.mxu0 0.0
    %907 = vmatprep.subr.mxu0 0.0
    %908 = vmatpush2.msra.mxu0 0.0
    %909 = vmatprep.subr.mxu0 0.0
    %910 = vmatpush2.msra.mxu0 0.0
    %911 = vmatprep.subr.mxu0 0.0
    %912 = vmatpush2.msra.mxu0 0.0
    %913 = vmatprep.subr.mxu0 0.0
    %914 = vmatpush2.msra.mxu0 0.0
    %915 = vmatprep.subr.mxu0 0.0
    %916 = vmatpush2.msra.mxu0 0.0
    %917 = vmatprep.subr.mxu0 0.0
    %918 = vmatpush2.msra.mxu0 0.0
    %919 = vmatprep.subr.mxu0 0.0
    %920 = vmatpush2.msra.mxu0 0.0
    %921 = vmatprep.subr.mxu0 0.0
    %922 = vmatpush2.msra.mxu0 0.0
    %923 = vmatprep.subr.mxu0 0.0
    %924 = vmatpush2.msra.mxu0 0.0
    %925 = vmatprep.subr.mxu0 0.0
    %926 = vmatpush2.msra.mxu0 0.0
    %927 = vmatprep.subr.mxu0 0.0
    %928 = vmatpush2.msra.mxu0 0.0
    %929 = vmatprep.mubr.f32.mxu0 0.0
    %930 = vmatmul.mubr.f32.gmra.mxu0 %v811
    %v931 = vpop.f32.mrf.mxu0
    %v932 = vadd.f32 0.0, %v931
    %v933 = vpop.f32.mrf.mxu0
    %v934 = vadd.f32 0.0, %v933
    %935 = vmatprep.mubr.f32.mxu0 0.0
    %936 = vmatmul.mubr.f32.gmra.mxu0 %v813
    %v937 = vpop.f32.mrf.mxu0
    %v938 = vadd.f32 0.0, %v937
    %v939 = vpop.f32.mrf.mxu0
    %v940 = vadd.f32 0.0, %v939
    %941 = vmatprep.mubr.f32.mxu0 0.0
    %942 = vmatmul.mubr.f32.gmra.mxu0 %v815
    %v943 = vpop.f32.mrf.mxu0
    %v944 = vadd.f32 0.0, %v943
    %v945 = vpop.f32.mrf.mxu0
    %v946 = vadd.f32 0.0, %v945
    %947 = vmatprep.mubr.f32.mxu0 0.0
    %948 = vmatmul.mubr.f32.gmra.mxu0 %v817
    %v949 = vpop.f32.mrf.mxu0
    %v950 = vadd.f32 0.0, %v949
    %v951 = vpop.f32.mrf.mxu0
    %v952 = vadd.f32 0.0, %v951
    %953 = vmatprep.mubr.f32.mxu0 0.0
    %954 = vmatmul.mubr.f32.gmra.mxu0 %v819
    %v955 = vpop.f32.mrf.mxu0
    %v956 = vadd.f32 0.0, %v955
    %v957 = vpop.f32.mrf.mxu0
    %v958 = vadd.f32 0.0, %v957
    %959 = vmatprep.mubr.f32.mxu0 0.0
    %960 = vmatmul.mubr.f32.gmra.mxu0 %v821
    %v961 = vpop.f32.mrf.mxu0
    %v962 = vadd.f32 0.0, %v961
    %v963 = vpop.f32.mrf.mxu0
    %v964 = vadd.f32 0.0, %v963
    %965 = vmatprep.mubr.f32.mxu0 0.0
    %966 = vmatmul.mubr.f32.gmra.mxu0 %v823
    %v967 = vpop.f32.mrf.mxu0
    %v968 = vadd.f32 0.0, %v967
    %v969 = vpop.f32.mrf.mxu0
    %v970 = vadd.f32 0.0, %v969
    %971 = vmatprep.mubr.f32.mxu0 0.0
    %972 = vmatmul.mubr.f32.gmra.mxu0 %v825
    %v973 = vpop.f32.mrf.mxu0
    %v974 = vadd.f32 0.0, %v973
    %v975 = vpop.f32.mrf.mxu0
    %v976 = vadd.f32 0.0, %v975
    %977 = vmatprep.mubr.f32.mxu0 0.0
    %978 = vmatmul.mubr.f32.gmra.mxu0 %v827
    %v979 = vpop.f32.mrf.mxu0
    %v980 = vadd.f32 0.0, %v979
    %v981 = vpop.f32.mrf.mxu0
    %v982 = vadd.f32 0.0, %v981
    %983 = vmatprep.mubr.f32.mxu0 0.0
    %984 = vmatmul.mubr.f32.gmra.mxu0 %v829
    %v985 = vpop.f32.mrf.mxu0
    %v986 = vadd.f32 0.0, %v985
    %v987 = vpop.f32.mrf.mxu0
    %v988 = vadd.f32 0.0, %v987
    %989 = vmatprep.mubr.f32.mxu0 0.0
    %990 = vmatmul.mubr.f32.gmra.mxu0 %v831
    %v991 = vpop.f32.mrf.mxu0
    %v992 = vadd.f32 0.0, %v991
    %v993 = vpop.f32.mrf.mxu0
    %v994 = vadd.f32 0.0, %v993
    %995 = vmatprep.mubr.f32.mxu0 0.0
    %996 = vmatmul.mubr.f32.gmra.mxu0 %v833
    %v997 = vpop.f32.mrf.mxu0
    %v998 = vadd.f32 0.0, %v997
    %v999 = vpop.f32.mrf.mxu0
    %v1000 = vadd.f32 0.0, %v999
    %1001 = vmatprep.mubr.f32.mxu0 0.0
    %1002 = vmatmul.mubr.f32.gmra.mxu0 %v835
    %v1003 = vpop.f32.mrf.mxu0
    %v1004 = vadd.f32 0.0, %v1003
    %v1005 = vpop.f32.mrf.mxu0
    %v1006 = vadd.f32 0.0, %v1005
    %1007 = vmatprep.mubr.f32.mxu0 0.0
    %1008 = vmatmul.mubr.f32.gmra.mxu0 %v837
    %v1009 = vpop.f32.mrf.mxu0
    %v1010 = vadd.f32 0.0, %v1009
    %v1011 = vpop.f32.mrf.mxu0
    %v1012 = vadd.f32 0.0, %v1011
    %1013 = vmatprep.mubr.f32.mxu0 0.0
    %1014 = vmatmul.mubr.f32.gmra.mxu0 %v839
    %v1015 = vpop.f32.mrf.mxu0
    %v1016 = vadd.f32 0.0, %v1015
    %v1017 = vpop.f32.mrf.mxu0
    %v1018 = vadd.f32 0.0, %v1017
    %1019 = vmatprep.mubr.f32.mxu0 0.0
    %1020 = vmatmul.mubr.f32.gmra.mxu0 %v841
    %v1021 = vpop.f32.mrf.mxu0
    %v1022 = vadd.f32 0.0, %v1021
    %v1023 = vpop.f32.mrf.mxu0
    %v1024 = vadd.f32 0.0, %v1023
    %1025 = vmatprep.mubr.f32.mxu0 0.0
    %1026 = vmatmul.mubr.f32.gmra.mxu0 %v843
    %v1027 = vpop.f32.mrf.mxu0
    %v1028 = vadd.f32 0.0, %v1027
    %v1029 = vpop.f32.mrf.mxu0
    %v1030 = vadd.f32 0.0, %v1029
    %1031 = vmatprep.mubr.f32.mxu0 0.0
    %1032 = vmatmul.mubr.f32.gmra.mxu0 %v845
    %v1033 = vpop.f32.mrf.mxu0
    %v1034 = vadd.f32 0.0, %v1033
    %v1035 = vpop.f32.mrf.mxu0
    %v1036 = vadd.f32 0.0, %v1035
    %1037 = vmatprep.mubr.f32.mxu0 0.0
    %1038 = vmatmul.mubr.f32.gmra.mxu0 %v847
    %v1039 = vpop.f32.mrf.mxu0
    %v1040 = vadd.f32 0.0, %v1039
    %v1041 = vpop.f32.mrf.mxu0
    %v1042 = vadd.f32 0.0, %v1041
    %1043 = vmatprep.mubr.f32.mxu0 0.0
    %1044 = vmatmul.mubr.f32.gmra.mxu0 %v849
    %v1045 = vpop.f32.mrf.mxu0
    %v1046 = vadd.f32 0.0, %v1045
    %v1047 = vpop.f32.mrf.mxu0
    %v1048 = vadd.f32 0.0, %v1047
    %1049 = vmatprep.mubr.f32.mxu0 0.0
    %1050 = vmatmul.mubr.f32.gmra.mxu0 %v851
    %v1051 = vpop.f32.mrf.mxu0
    %v1052 = vadd.f32 0.0, %v1051
    %v1053 = vpop.f32.mrf.mxu0
    %v1054 = vadd.f32 0.0, %v1053
    %1055 = vmatprep.mubr.f32.mxu0 0.0
    %1056 = vmatmul.mubr.f32.gmra.mxu0 %v853
    %v1057 = vpop.f32.mrf.mxu0
    %v1058 = vadd.f32 0.0, %v1057
    %v1059 = vpop.f32.mrf.mxu0
    %v1060 = vadd.f32 0.0, %v1059
    %1061 = vmatprep.mubr.f32.mxu0 0.0
    %1062 = vmatmul.mubr.f32.gmra.mxu0 %v855
    %v1063 = vpop.f32.mrf.mxu0
    %v1064 = vadd.f32 0.0, %v1063
    %v1065 = vpop.f32.mrf.mxu0
    %v1066 = vadd.f32 0.0, %v1065
    %1067 = vmatprep.mubr.f32.mxu0 0.0
    %1068 = vmatmul.mubr.f32.gmra.mxu0 %v857
    %v1069 = vpop.f32.mrf.mxu0
    %v1070 = vadd.f32 0.0, %v1069
    %v1071 = vpop.f32.mrf.mxu0
    %v1072 = vadd.f32 0.0, %v1071
    %1073 = vdwg.mxu0
    %v1074 = vadd.f32 %v603, %v932
    %v1075 = vadd.f32 %v605, %v934
    %v1076 = vadd.f32 %v609, %v938
    %v1077 = vadd.f32 %v611, %v940
    %v1078 = vadd.f32 %v615, %v944
    %v1079 = vadd.f32 %v617, %v946
    %v1080 = vadd.f32 %v621, %v950
    %v1081 = vadd.f32 %v623, %v952
    %v1082 = vadd.f32 %v627, %v956
    %v1083 = vadd.f32 %v629, %v958
    %v1084 = vadd.f32 %v633, %v962
    %v1085 = vadd.f32 %v635, %v964
    %v1086 = vadd.f32 %v639, %v968
    %v1087 = vadd.f32 %v641, %v970
    %v1088 = vadd.f32 %v645, %v974
    %v1089 = vadd.f32 %v647, %v976
    %v1090 = vadd.f32 %v651, %v980
    %v1091 = vadd.f32 %v653, %v982
    %v1092 = vadd.f32 %v657, %v986
    %v1093 = vadd.f32 %v659, %v988
    %v1094 = vadd.f32 %v663, %v992
    %v1095 = vadd.f32 %v665, %v994
    %v1096 = vadd.f32 %v669, %v998
    %v1097 = vadd.f32 %v671, %v1000
    %v1098 = vadd.f32 %v675, %v1004
    %v1099 = vadd.f32 %v677, %v1006
    %v1100 = vadd.f32 %v681, %v1010
    %v1101 = vadd.f32 %v683, %v1012
    %v1102 = vadd.f32 %v687, %v1016
    %v1103 = vadd.f32 %v689, %v1018
    %v1104 = vadd.f32 %v693, %v1022
    %v1105 = vadd.f32 %v695, %v1024
    %v1106 = vadd.f32 %v699, %v1028
    %v1107 = vadd.f32 %v701, %v1030
    %v1108 = vadd.f32 %v705, %v1034
    %v1109 = vadd.f32 %v707, %v1036
    %v1110 = vadd.f32 %v711, %v1040
    %v1111 = vadd.f32 %v713, %v1042
    %v1112 = vadd.f32 %v717, %v1046
    %v1113 = vadd.f32 %v719, %v1048
    %v1114 = vadd.f32 %v723, %v1052
    %v1115 = vadd.f32 %v725, %v1054
    %v1116 = vadd.f32 %v729, %v1058
    %v1117 = vadd.f32 %v731, %v1060
    %v1118 = vadd.f32 %v735, %v1064
    %v1119 = vadd.f32 %v737, %v1066
    %v1120 = vadd.f32 %v741, %v1070
    %v1121 = vadd.f32 %v743, %v1072
    %vm1122 = vcmask 1044480
    %v1123 = vrot.slane %v79, 3
    %v1124 = vrot.slane %v80, 3
    %v1125 = vsel %vm1122, %v1123, %v1124
    %v1126 = vrot.slane %v81, 3
    %v1127 = vsel %vm1122, %v1124, %v1126
    %v1128 = vrot.slane %v82, 3
    %v1129 = vsel %vm1122, %v1126, %v1128
    %v1130 = vrot.slane %v83, 3
    %v1131 = vrot.slane %v84, 3
    %v1132 = vsel %vm1122, %v1130, %v1131
    %v1133 = vrot.slane %v85, 3
    %v1134 = vsel %vm1122, %v1131, %v1133
    %v1135 = vrot.slane %v86, 3
    %v1136 = vsel %vm1122, %v1133, %v1135
    %v1137 = vrot.slane %v87, 3
    %v1138 = vrot.slane %v88, 3
    %v1139 = vsel %vm1122, %v1137, %v1138
    %v1140 = vrot.slane %v89, 3
    %v1141 = vsel %vm1122, %v1138, %v1140
    %v1142 = vrot.slane %v90, 3
    %v1143 = vsel %vm1122, %v1140, %v1142
    %v1144 = vrot.slane %v91, 3
    %v1145 = vrot.slane %v92, 3
    %v1146 = vsel %vm1122, %v1144, %v1145
    %v1147 = vrot.slane %v93, 3
    %v1148 = vsel %vm1122, %v1145, %v1147
    %v1149 = vrot.slane %v94, 3
    %v1150 = vsel %vm1122, %v1147, %v1149
    %v1151 = vrot.slane %v95, 3
    %v1152 = vrot.slane %v96, 3
    %v1153 = vsel %vm1122, %v1151, %v1152
    %v1154 = vrot.slane %v97, 3
    %v1155 = vsel %vm1122, %v1152, %v1154
    %v1156 = vrot.slane %v98, 3
    %v1157 = vsel %vm1122, %v1154, %v1156
    %v1158 = vrot.slane %v99, 3
    %v1159 = vrot.slane %v100, 3
    %v1160 = vsel %vm1122, %v1158, %v1159
    %v1161 = vrot.slane %v101, 3
    %v1162 = vsel %vm1122, %v1159, %v1161
    %v1163 = vrot.slane %v102, 3
    %v1164 = vsel %vm1122, %v1161, %v1163
    %v1165 = vrot.slane %v103, 3
    %v1166 = vrot.slane %v104, 3
    %v1167 = vsel %vm1122, %v1165, %v1166
    %v1168 = vrot.slane %v105, 3
    %v1169 = vsel %vm1122, %v1166, %v1168
    %v1170 = vrot.slane %v106, 3
    %v1171 = vsel %vm1122, %v1168, %v1170
    %v1172 = vrot.slane %v107, 3
    %v1173 = vrot.slane %v108, 3
    %v1174 = vsel %vm1122, %v1172, %v1173
    %v1175 = vrot.slane %v109, 3
    %v1176 = vsel %vm1122, %v1173, %v1175
    %v1177 = vrot.slane %v110, 3
    %v1178 = vsel %vm1122, %v1175, %v1177
    %s1179 = scalar_lea.vmem [#allocation2], 192
    %v1180 = vld [vmem:[%s1179] sm:$0xff]
    %v1181 = vld [vmem:[%s1179 + $0x8] sm:$0xff]
    %v1182 = vld [vmem:[%s1179 + $0x10] sm:$0xff]
    %v1183 = vld [vmem:[%s1179 + $0x18] sm:$0xff]
    %v1184 = vld [vmem:[%s1179 + $0x20] sm:$0xff]
    %v1185 = vld [vmem:[%s1179 + $0x28] sm:$0xff]
    %v1186 = vld [vmem:[%s1179 + $0x30] sm:$0xf]
    %v1187 = vld [vmem:[%s1179 + $0x38] sm:$0xf]
    %v1188 = vsel %vm217, %v1125, 0
    %v1190 = vsel %vm217, %v1127, 0
    %v1192 = vsel %vm217, %v1129, 0
    %v1194 = vsel %vm217, %v1132, 0
    %v1196 = vsel %vm217, %v1134, 0
    %v1198 = vsel %vm217, %v1136, 0
    %v1200 = vsel %vm217, %v1139, 0
    %v1202 = vsel %vm217, %v1141, 0
    %v1204 = vsel %vm217, %v1143, 0
    %v1206 = vsel %vm217, %v1146, 0
    %v1208 = vsel %vm217, %v1148, 0
    %v1210 = vsel %vm217, %v1150, 0
    %v1212 = vsel %vm217, %v1153, 0
    %v1214 = vsel %vm217, %v1155, 0
    %v1216 = vsel %vm217, %v1157, 0
    %v1218 = vsel %vm217, %v1160, 0
    %v1220 = vsel %vm217, %v1162, 0
    %v1222 = vsel %vm217, %v1164, 0
    %v1224 = vsel %vm217, %v1167, 0
    %v1226 = vsel %vm217, %v1169, 0
    %v1228 = vsel %vm217, %v1171, 0
    %v1230 = vsel %vm217, %v1174, 0
    %v1232 = vsel %vm217, %v1176, 0
    %v1234 = vsel %vm217, %v1178, 0
    %v1237 = vsel %vm266, %v1186, 0
    %v1240 = vsel %vm266, %v1187, 0
    %1242 = vmatprep.subr.mxu0 0.0
    %1243 = vmatpush1.msra.mxu0 0.0
    %1244 = vmatprep.subr.mxu0 0.0
    %1245 = vmatpush1.msra.mxu0 0.0
    %1246 = vmatprep.subr.mxu0 0.0
    %1247 = vmatpush1.msra.mxu0 0.0
    %1248 = vmatprep.subr.mxu0 0.0
    %1249 = vmatpush1.msra.mxu0 0.0
    %1250 = vmatprep.subr.mxu0 0.0
    %1251 = vmatpush1.msra.mxu0 0.0
    %1252 = vmatprep.subr.mxu0 0.0
    %1253 = vmatpush1.msra.mxu0 0.0
    %1254 = vmatprep.subr.mxu0 0.0
    %1255 = vmatpush1.msra.mxu0 0.0
    %1256 = vmatprep.subr.mxu0 0.0
    %1257 = vmatpush1.msra.mxu0 0.0
    %1258 = vmatprep.subr.mxu0 0.0
    %1259 = vmatpush1.msra.mxu0 0.0
    %1260 = vmatprep.subr.mxu0 0.0
    %1261 = vmatpush1.msra.mxu0 0.0
    %1262 = vmatprep.subr.mxu0 0.0
    %1263 = vmatpush1.msra.mxu0 0.0
    %1264 = vmatprep.subr.mxu0 0.0
    %1265 = vmatpush1.msra.mxu0 0.0
    %1266 = vmatprep.subr.mxu0 %v1240
    %1267 = vmatpush1.msra.mxu0 %v1237
    %1268 = vmatprep.subr.mxu0 %v1185
    %1269 = vmatpush1.msra.mxu0 %v1184
    %1270 = vmatprep.subr.mxu0 %v1183
    %1271 = vmatpush1.msra.mxu0 %v1182
    %1272 = vmatprep.subr.mxu0 %v1181
    %1273 = vmatpush1.msra.mxu0 %v1180
    %1274 = vmatprep.subr.mxu0 0.0
    %1275 = vmatpush2.msra.mxu0 0.0
    %1276 = vmatprep.subr.mxu0 0.0
    %1277 = vmatpush2.msra.mxu0 0.0
    %1278 = vmatprep.subr.mxu0 0.0
    %1279 = vmatpush2.msra.mxu0 0.0
    %1280 = vmatprep.subr.mxu0 0.0
    %1281 = vmatpush2.msra.mxu0 0.0
    %1282 = vmatprep.subr.mxu0 0.0
    %1283 = vmatpush2.msra.mxu0 0.0
    %1284 = vmatprep.subr.mxu0 0.0
    %1285 = vmatpush2.msra.mxu0 0.0
    %1286 = vmatprep.subr.mxu0 0.0
    %1287 = vmatpush2.msra.mxu0 0.0
    %1288 = vmatprep.subr.mxu0 0.0
    %1289 = vmatpush2.msra.mxu0 0.0
    %1290 = vmatprep.subr.mxu0 0.0
    %1291 = vmatpush2.msra.mxu0 0.0
    %1292 = vmatprep.subr.mxu0 0.0
    %1293 = vmatpush2.msra.mxu0 0.0
    %1294 = vmatprep.subr.mxu0 0.0
    %1295 = vmatpush2.msra.mxu0 0.0
    %1296 = vmatprep.subr.mxu0 0.0
    %1297 = vmatpush2.msra.mxu0 0.0
    %1298 = vmatprep.subr.mxu0 0.0
    %1299 = vmatpush2.msra.mxu0 0.0
    %1300 = vmatprep.subr.mxu0 0.0
    %1301 = vmatpush2.msra.mxu0 0.0
    %1302 = vmatprep.subr.mxu0 0.0
    %1303 = vmatpush2.msra.mxu0 0.0
    %1304 = vmatprep.subr.mxu0 0.0
    %1305 = vmatpush2.msra.mxu0 0.0
    %1306 = vmatprep.mubr.f32.mxu0 0.0
    %1307 = vmatmul.mubr.f32.gmra.mxu0 %v1188
    %v1308 = vpop.f32.mrf.mxu0
    %v1309 = vadd.f32 0.0, %v1308
    %v1310 = vpop.f32.mrf.mxu0
    %v1311 = vadd.f32 0.0, %v1310
    %1312 = vmatprep.mubr.f32.mxu0 0.0
    %1313 = vmatmul.mubr.f32.gmra.mxu0 %v1190
    %v1314 = vpop.f32.mrf.mxu0
    %v1315 = vadd.f32 0.0, %v1314
    %v1316 = vpop.f32.mrf.mxu0
    %v1317 = vadd.f32 0.0, %v1316
    %1318 = vmatprep.mubr.f32.mxu0 0.0
    %1319 = vmatmul.mubr.f32.gmra.mxu0 %v1192
    %v1320 = vpop.f32.mrf.mxu0
    %v1321 = vadd.f32 0.0, %v1320
    %v1322 = vpop.f32.mrf.mxu0
    %v1323 = vadd.f32 0.0, %v1322
    %1324 = vmatprep.mubr.f32.mxu0 0.0
    %1325 = vmatmul.mubr.f32.gmra.mxu0 %v1194
    %v1326 = vpop.f32.mrf.mxu0
    %v1327 = vadd.f32 0.0, %v1326
    %v1328 = vpop.f32.mrf.mxu0
    %v1329 = vadd.f32 0.0, %v1328
    %1330 = vmatprep.mubr.f32.mxu0 0.0
    %1331 = vmatmul.mubr.f32.gmra.mxu0 %v1196
    %v1332 = vpop.f32.mrf.mxu0
    %v1333 = vadd.f32 0.0, %v1332
    %v1334 = vpop.f32.mrf.mxu0
    %v1335 = vadd.f32 0.0, %v1334
    %1336 = vmatprep.mubr.f32.mxu0 0.0
    %1337 = vmatmul.mubr.f32.gmra.mxu0 %v1198
    %v1338 = vpop.f32.mrf.mxu0
    %v1339 = vadd.f32 0.0, %v1338
    %v1340 = vpop.f32.mrf.mxu0
    %v1341 = vadd.f32 0.0, %v1340
    %1342 = vmatprep.mubr.f32.mxu0 0.0
    %1343 = vmatmul.mubr.f32.gmra.mxu0 %v1200
    %v1344 = vpop.f32.mrf.mxu0
    %v1345 = vadd.f32 0.0, %v1344
    %v1346 = vpop.f32.mrf.mxu0
    %v1347 = vadd.f32 0.0, %v1346
    %1348 = vmatprep.mubr.f32.mxu0 0.0
    %1349 = vmatmul.mubr.f32.gmra.mxu0 %v1202
    %v1350 = vpop.f32.mrf.mxu0
    %v1351 = vadd.f32 0.0, %v1350
    %v1352 = vpop.f32.mrf.mxu0
    %v1353 = vadd.f32 0.0, %v1352
    %1354 = vmatprep.mubr.f32.mxu0 0.0
    %1355 = vmatmul.mubr.f32.gmra.mxu0 %v1204
    %v1356 = vpop.f32.mrf.mxu0
    %v1357 = vadd.f32 0.0, %v1356
    %v1358 = vpop.f32.mrf.mxu0
    %v1359 = vadd.f32 0.0, %v1358
    %1360 = vmatprep.mubr.f32.mxu0 0.0
    %1361 = vmatmul.mubr.f32.gmra.mxu0 %v1206
    %v1362 = vpop.f32.mrf.mxu0
    %v1363 = vadd.f32 0.0, %v1362
    %v1364 = vpop.f32.mrf.mxu0
    %v1365 = vadd.f32 0.0, %v1364
    %1366 = vmatprep.mubr.f32.mxu0 0.0
    %1367 = vmatmul.mubr.f32.gmra.mxu0 %v1208
    %v1368 = vpop.f32.mrf.mxu0
    %v1369 = vadd.f32 0.0, %v1368
    %v1370 = vpop.f32.mrf.mxu0
    %v1371 = vadd.f32 0.0, %v1370
    %1372 = vmatprep.mubr.f32.mxu0 0.0
    %1373 = vmatmul.mubr.f32.gmra.mxu0 %v1210
    %v1374 = vpop.f32.mrf.mxu0
    %v1375 = vadd.f32 0.0, %v1374
    %v1376 = vpop.f32.mrf.mxu0
    %v1377 = vadd.f32 0.0, %v1376
    %1378 = vmatprep.mubr.f32.mxu0 0.0
    %1379 = vmatmul.mubr.f32.gmra.mxu0 %v1212
    %v1380 = vpop.f32.mrf.mxu0
    %v1381 = vadd.f32 0.0, %v1380
    %v1382 = vpop.f32.mrf.mxu0
    %v1383 = vadd.f32 0.0, %v1382
    %1384 = vmatprep.mubr.f32.mxu0 0.0
    %1385 = vmatmul.mubr.f32.gmra.mxu0 %v1214
    %v1386 = vpop.f32.mrf.mxu0
    %v1387 = vadd.f32 0.0, %v1386
    %v1388 = vpop.f32.mrf.mxu0
    %v1389 = vadd.f32 0.0, %v1388
    %1390 = vmatprep.mubr.f32.mxu0 0.0
    %1391 = vmatmul.mubr.f32.gmra.mxu0 %v1216
    %v1392 = vpop.f32.mrf.mxu0
    %v1393 = vadd.f32 0.0, %v1392
    %v1394 = vpop.f32.mrf.mxu0
    %v1395 = vadd.f32 0.0, %v1394
    %1396 = vmatprep.mubr.f32.mxu0 0.0
    %1397 = vmatmul.mubr.f32.gmra.mxu0 %v1218
    %v1398 = vpop.f32.mrf.mxu0
    %v1399 = vadd.f32 0.0, %v1398
    %v1400 = vpop.f32.mrf.mxu0
    %v1401 = vadd.f32 0.0, %v1400
    %1402 = vmatprep.mubr.f32.mxu0 0.0
    %1403 = vmatmul.mubr.f32.gmra.mxu0 %v1220
    %v1404 = vpop.f32.mrf.mxu0
    %v1405 = vadd.f32 0.0, %v1404
    %v1406 = vpop.f32.mrf.mxu0
    %v1407 = vadd.f32 0.0, %v1406
    %1408 = vmatprep.mubr.f32.mxu0 0.0
    %1409 = vmatmul.mubr.f32.gmra.mxu0 %v1222
    %v1410 = vpop.f32.mrf.mxu0
    %v1411 = vadd.f32 0.0, %v1410
    %v1412 = vpop.f32.mrf.mxu0
    %v1413 = vadd.f32 0.0, %v1412
    %1414 = vmatprep.mubr.f32.mxu0 0.0
    %1415 = vmatmul.mubr.f32.gmra.mxu0 %v1224
    %v1416 = vpop.f32.mrf.mxu0
    %v1417 = vadd.f32 0.0, %v1416
    %v1418 = vpop.f32.mrf.mxu0
    %v1419 = vadd.f32 0.0, %v1418
    %1420 = vmatprep.mubr.f32.mxu0 0.0
    %1421 = vmatmul.mubr.f32.gmra.mxu0 %v1226
    %v1422 = vpop.f32.mrf.mxu0
    %v1423 = vadd.f32 0.0, %v1422
    %v1424 = vpop.f32.mrf.mxu0
    %v1425 = vadd.f32 0.0, %v1424
    %1426 = vmatprep.mubr.f32.mxu0 0.0
    %1427 = vmatmul.mubr.f32.gmra.mxu0 %v1228
    %v1428 = vpop.f32.mrf.mxu0
    %v1429 = vadd.f32 0.0, %v1428
    %v1430 = vpop.f32.mrf.mxu0
    %v1431 = vadd.f32 0.0, %v1430
    %1432 = vmatprep.mubr.f32.mxu0 0.0
    %1433 = vmatmul.mubr.f32.gmra.mxu0 %v1230
    %v1434 = vpop.f32.mrf.mxu0
    %v1435 = vadd.f32 0.0, %v1434
    %v1436 = vpop.f32.mrf.mxu0
    %v1437 = vadd.f32 0.0, %v1436
    %1438 = vmatprep.mubr.f32.mxu0 0.0
    %1439 = vmatmul.mubr.f32.gmra.mxu0 %v1232
    %v1440 = vpop.f32.mrf.mxu0
    %v1441 = vadd.f32 0.0, %v1440
    %v1442 = vpop.f32.mrf.mxu0
    %v1443 = vadd.f32 0.0, %v1442
    %1444 = vmatprep.mubr.f32.mxu0 0.0
    %1445 = vmatmul.mubr.f32.gmra.mxu0 %v1234
    %v1446 = vpop.f32.mrf.mxu0
    %v1447 = vadd.f32 0.0, %v1446
    %v1448 = vpop.f32.mrf.mxu0
    %v1449 = vadd.f32 0.0, %v1448
    %1450 = vdwg.mxu0
    %v1451 = vadd.f32 %v1074, %v1309
    %v1452 = vadd.f32 %v1075, %v1311
    %v1453 = vadd.f32 %v1076, %v1315
    %v1454 = vadd.f32 %v1077, %v1317
    %v1455 = vadd.f32 %v1078, %v1321
    %v1456 = vadd.f32 %v1079, %v1323
    %v1457 = vadd.f32 %v1080, %v1327
    %v1458 = vadd.f32 %v1081, %v1329
    %v1459 = vadd.f32 %v1082, %v1333
    %v1460 = vadd.f32 %v1083, %v1335
    %v1461 = vadd.f32 %v1084, %v1339
    %v1462 = vadd.f32 %v1085, %v1341
    %v1463 = vadd.f32 %v1086, %v1345
    %v1464 = vadd.f32 %v1087, %v1347
    %v1465 = vadd.f32 %v1088, %v1351
    %v1466 = vadd.f32 %v1089, %v1353
    %v1467 = vadd.f32 %v1090, %v1357
    %v1468 = vadd.f32 %v1091, %v1359
    %v1469 = vadd.f32 %v1092, %v1363
    %v1470 = vadd.f32 %v1093, %v1365
    %v1471 = vadd.f32 %v1094, %v1369
    %v1472 = vadd.f32 %v1095, %v1371
    %v1473 = vadd.f32 %v1096, %v1375
    %v1474 = vadd.f32 %v1097, %v1377
    %v1475 = vadd.f32 %v1098, %v1381
    %v1476 = vadd.f32 %v1099, %v1383
    %v1477 = vadd.f32 %v1100, %v1387
    %v1478 = vadd.f32 %v1101, %v1389
    %v1479 = vadd.f32 %v1102, %v1393
    %v1480 = vadd.f32 %v1103, %v1395
    %v1481 = vadd.f32 %v1104, %v1399
    %v1482 = vadd.f32 %v1105, %v1401
    %v1483 = vadd.f32 %v1106, %v1405
    %v1484 = vadd.f32 %v1107, %v1407
    %v1485 = vadd.f32 %v1108, %v1411
    %v1486 = vadd.f32 %v1109, %v1413
    %v1487 = vadd.f32 %v1110, %v1417
    %v1488 = vadd.f32 %v1111, %v1419
    %v1489 = vadd.f32 %v1112, %v1423
    %v1490 = vadd.f32 %v1113, %v1425
    %v1491 = vadd.f32 %v1114, %v1429
    %v1492 = vadd.f32 %v1115, %v1431
    %v1493 = vadd.f32 %v1116, %v1435
    %v1494 = vadd.f32 %v1117, %v1437
    %v1495 = vadd.f32 %v1118, %v1441
    %v1496 = vadd.f32 %v1119, %v1443
    %v1497 = vadd.f32 %v1120, %v1447
    %v1498 = vadd.f32 %v1121, %v1449
    %v1499 = vrot.slane %v79, 4
    %v1500 = vrot.slane %v80, 4
    %v1501 = vsel %vm266, %v1499, %v1500
    %v1502 = vrot.slane %v81, 4
    %v1503 = vsel %vm266, %v1500, %v1502
    %v1504 = vrot.slane %v82, 4
    %v1505 = vsel %vm266, %v1502, %v1504
    %v1506 = vrot.slane %v83, 4
    %v1507 = vrot.slane %v84, 4
    %v1508 = vsel %vm266, %v1506, %v1507
    %v1509 = vrot.slane %v85, 4
    %v1510 = vsel %vm266, %v1507, %v1509
    %v1511 = vrot.slane %v86, 4
    %v1512 = vsel %vm266, %v1509, %v1511
    %v1513 = vrot.slane %v87, 4
    %v1514 = vrot.slane %v88, 4
    %v1515 = vsel %vm266, %v1513, %v1514
    %v1516 = vrot.slane %v89, 4
    %v1517 = vsel %vm266, %v1514, %v1516
    %v1518 = vrot.slane %v90, 4
    %v1519 = vsel %vm266, %v1516, %v1518
    %v1520 = vrot.slane %v91, 4
    %v1521 = vrot.slane %v92, 4
    %v1522 = vsel %vm266, %v1520, %v1521
    %v1523 = vrot.slane %v93, 4
    %v1524 = vsel %vm266, %v1521, %v1523
    %v1525 = vrot.slane %v94, 4
    %v1526 = vsel %vm266, %v1523, %v1525
    %v1527 = vrot.slane %v95, 4
    %v1528 = vrot.slane %v96, 4
    %v1529 = vsel %vm266, %v1527, %v1528
    %v1530 = vrot.slane %v97, 4
    %v1531 = vsel %vm266, %v1528, %v1530
    %v1532 = vrot.slane %v98, 4
    %v1533 = vsel %vm266, %v1530, %v1532
    %v1534 = vrot.slane %v99, 4
    %v1535 = vrot.slane %v100, 4
    %v1536 = vsel %vm266, %v1534, %v1535
    %v1537 = vrot.slane %v101, 4
    %v1538 = vsel %vm266, %v1535, %v1537
    %v1539 = vrot.slane %v102, 4
    %v1540 = vsel %vm266, %v1537, %v1539
    %v1541 = vrot.slane %v103, 4
    %v1542 = vrot.slane %v104, 4
    %v1543 = vsel %vm266, %v1541, %v1542
    %v1544 = vrot.slane %v105, 4
    %v1545 = vsel %vm266, %v1542, %v1544
    %v1546 = vrot.slane %v106, 4
    %v1547 = vsel %vm266, %v1544, %v1546
    %v1548 = vrot.slane %v107, 4
    %v1549 = vrot.slane %v108, 4
    %v1550 = vsel %vm266, %v1548, %v1549
    %v1551 = vrot.slane %v109, 4
    %v1552 = vsel %vm266, %v1549, %v1551
    %v1553 = vrot.slane %v110, 4
    %v1554 = vsel %vm266, %v1551, %v1553
    %s1555 = scalar_lea.vmem [#allocation2], 256
    %v1556 = vld [vmem:[%s1555] sm:$0xff]
    %v1557 = vld [vmem:[%s1555 + $0x8] sm:$0xff]
    %v1558 = vld [vmem:[%s1555 + $0x10] sm:$0xff]
    %v1559 = vld [vmem:[%s1555 + $0x18] sm:$0xff]
    %v1560 = vld [vmem:[%s1555 + $0x20] sm:$0xff]
    %v1561 = vld [vmem:[%s1555 + $0x28] sm:$0xff]
    %v1562 = vld [vmem:[%s1555 + $0x30] sm:$0xf]
    %v1563 = vld [vmem:[%s1555 + $0x38] sm:$0xf]
    %v1564 = vsel %vm217, %v1501, 0
    %v1566 = vsel %vm217, %v1503, 0
    %v1568 = vsel %vm217, %v1505, 0
    %v1570 = vsel %vm217, %v1508, 0
    %v1572 = vsel %vm217, %v1510, 0
    %v1574 = vsel %vm217, %v1512, 0
    %v1576 = vsel %vm217, %v1515, 0
    %v1578 = vsel %vm217, %v1517, 0
    %v1580 = vsel %vm217, %v1519, 0
    %v1582 = vsel %vm217, %v1522, 0
    %v1584 = vsel %vm217, %v1524, 0
    %v1586 = vsel %vm217, %v1526, 0
    %v1588 = vsel %vm217, %v1529, 0
    %v1590 = vsel %vm217, %v1531, 0
    %v1592 = vsel %vm217, %v1533, 0
    %v1594 = vsel %vm217, %v1536, 0
    %v1596 = vsel %vm217, %v1538, 0
    %v1598 = vsel %vm217, %v1540, 0
    %v1600 = vsel %vm217, %v1543, 0
    %v1602 = vsel %vm217, %v1545, 0
    %v1604 = vsel %vm217, %v1547, 0
    %v1606 = vsel %vm217, %v1550, 0
    %v1608 = vsel %vm217, %v1552, 0
    %v1610 = vsel %vm217, %v1554, 0
    %v1613 = vsel %vm266, %v1562, 0
    %v1616 = vsel %vm266, %v1563, 0
    %1618 = vmatprep.subr.mxu0 0.0
    %1619 = vmatpush1.msra.mxu0 0.0
    %1620 = vmatprep.subr.mxu0 0.0
    %1621 = vmatpush1.msra.mxu0 0.0
    %1622 = vmatprep.subr.mxu0 0.0
    %1623 = vmatpush1.msra.mxu0 0.0
    %1624 = vmatprep.subr.mxu0 0.0
    %1625 = vmatpush1.msra.mxu0 0.0
    %1626 = vmatprep.subr.mxu0 0.0
    %1627 = vmatpush1.msra.mxu0 0.0
    %1628 = vmatprep.subr.mxu0 0.0
    %1629 = vmatpush1.msra.mxu0 0.0
    %1630 = vmatprep.subr.mxu0 0.0
    %1631 = vmatpush1.msra.mxu0 0.0
    %1632 = vmatprep.subr.mxu0 0.0
    %1633 = vmatpush1.msra.mxu0 0.0
    %1634 = vmatprep.subr.mxu0 0.0
    %1635 = vmatpush1.msra.mxu0 0.0
    %1636 = vmatprep.subr.mxu0 0.0
    %1637 = vmatpush1.msra.mxu0 0.0
    %1638 = vmatprep.subr.mxu0 0.0
    %1639 = vmatpush1.msra.mxu0 0.0
    %1640 = vmatprep.subr.mxu0 0.0
    %1641 = vmatpush1.msra.mxu0 0.0
    %1642 = vmatprep.subr.mxu0 %v1616
    %1643 = vmatpush1.msra.mxu0 %v1613
    %1644 = vmatprep.subr.mxu0 %v1561
    %1645 = vmatpush1.msra.mxu0 %v1560
    %1646 = vmatprep.subr.mxu0 %v1559
    %1647 = vmatpush1.msra.mxu0 %v1558
    %1648 = vmatprep.subr.mxu0 %v1557
    %1649 = vmatpush1.msra.mxu0 %v1556
    %1650 = vmatprep.subr.mxu0 0.0
    %1651 = vmatpush2.msra.mxu0 0.0
    %1652 = vmatprep.subr.mxu0 0.0
    %1653 = vmatpush2.msra.mxu0 0.0
    %1654 = vmatprep.subr.mxu0 0.0
    %1655 = vmatpush2.msra.mxu0 0.0
    %1656 = vmatprep.subr.mxu0 0.0
    %1657 = vmatpush2.msra.mxu0 0.0
    %1658 = vmatprep.subr.mxu0 0.0
    %1659 = vmatpush2.msra.mxu0 0.0
    %1660 = vmatprep.subr.mxu0 0.0
    %1661 = vmatpush2.msra.mxu0 0.0
    %1662 = vmatprep.subr.mxu0 0.0
    %1663 = vmatpush2.msra.mxu0 0.0
    %1664 = vmatprep.subr.mxu0 0.0
    %1665 = vmatpush2.msra.mxu0 0.0
    %1666 = vmatprep.subr.mxu0 0.0
    %1667 = vmatpush2.msra.mxu0 0.0
    %1668 = vmatprep.subr.mxu0 0.0
    %1669 = vmatpush2.msra.mxu0 0.0
    %1670 = vmatprep.subr.mxu0 0.0
    %1671 = vmatpush2.msra.mxu0 0.0
    %1672 = vmatprep.subr.mxu0 0.0
    %1673 = vmatpush2.msra.mxu0 0.0
    %1674 = vmatprep.subr.mxu0 0.0
    %1675 = vmatpush2.msra.mxu0 0.0
    %1676 = vmatprep.subr.mxu0 0.0
    %1677 = vmatpush2.msra.mxu0 0.0
    %1678 = vmatprep.subr.mxu0 0.0
    %1679 = vmatpush2.msra.mxu0 0.0
    %1680 = vmatprep.subr.mxu0 0.0
    %1681 = vmatpush2.msra.mxu0 0.0
    %1682 = vmatprep.mubr.f32.mxu0 0.0
    %1683 = vmatmul.mubr.f32.gmra.mxu0 %v1564
    %v1684 = vpop.f32.mrf.mxu0
    %v1685 = vadd.f32 0.0, %v1684
    %v1686 = vpop.f32.mrf.mxu0
    %v1687 = vadd.f32 0.0, %v1686
    %1688 = vmatprep.mubr.f32.mxu0 0.0
    %1689 = vmatmul.mubr.f32.gmra.mxu0 %v1566
    %v1690 = vpop.f32.mrf.mxu0
    %v1691 = vadd.f32 0.0, %v1690
    %v1692 = vpop.f32.mrf.mxu0
    %v1693 = vadd.f32 0.0, %v1692
    %1694 = vmatprep.mubr.f32.mxu0 0.0
    %1695 = vmatmul.mubr.f32.gmra.mxu0 %v1568
    %v1696 = vpop.f32.mrf.mxu0
    %v1697 = vadd.f32 0.0, %v1696
    %v1698 = vpop.f32.mrf.mxu0
    %v1699 = vadd.f32 0.0, %v1698
    %1700 = vmatprep.mubr.f32.mxu0 0.0
    %1701 = vmatmul.mubr.f32.gmra.mxu0 %v1570
    %v1702 = vpop.f32.mrf.mxu0
    %v1703 = vadd.f32 0.0, %v1702
    %v1704 = vpop.f32.mrf.mxu0
    %v1705 = vadd.f32 0.0, %v1704
    %1706 = vmatprep.mubr.f32.mxu0 0.0
    %1707 = vmatmul.mubr.f32.gmra.mxu0 %v1572
    %v1708 = vpop.f32.mrf.mxu0
    %v1709 = vadd.f32 0.0, %v1708
    %v1710 = vpop.f32.mrf.mxu0
    %v1711 = vadd.f32 0.0, %v1710
    %1712 = vmatprep.mubr.f32.mxu0 0.0
    %1713 = vmatmul.mubr.f32.gmra.mxu0 %v1574
    %v1714 = vpop.f32.mrf.mxu0
    %v1715 = vadd.f32 0.0, %v1714
    %v1716 = vpop.f32.mrf.mxu0
    %v1717 = vadd.f32 0.0, %v1716
    %1718 = vmatprep.mubr.f32.mxu0 0.0
    %1719 = vmatmul.mubr.f32.gmra.mxu0 %v1576
    %v1720 = vpop.f32.mrf.mxu0
    %v1721 = vadd.f32 0.0, %v1720
    %v1722 = vpop.f32.mrf.mxu0
    %v1723 = vadd.f32 0.0, %v1722
    %1724 = vmatprep.mubr.f32.mxu0 0.0
    %1725 = vmatmul.mubr.f32.gmra.mxu0 %v1578
    %v1726 = vpop.f32.mrf.mxu0
    %v1727 = vadd.f32 0.0, %v1726
    %v1728 = vpop.f32.mrf.mxu0
    %v1729 = vadd.f32 0.0, %v1728
    %1730 = vmatprep.mubr.f32.mxu0 0.0
    %1731 = vmatmul.mubr.f32.gmra.mxu0 %v1580
    %v1732 = vpop.f32.mrf.mxu0
    %v1733 = vadd.f32 0.0, %v1732
    %v1734 = vpop.f32.mrf.mxu0
    %v1735 = vadd.f32 0.0, %v1734
    %1736 = vmatprep.mubr.f32.mxu0 0.0
    %1737 = vmatmul.mubr.f32.gmra.mxu0 %v1582
    %v1738 = vpop.f32.mrf.mxu0
    %v1739 = vadd.f32 0.0, %v1738
    %v1740 = vpop.f32.mrf.mxu0
    %v1741 = vadd.f32 0.0, %v1740
    %1742 = vmatprep.mubr.f32.mxu0 0.0
    %1743 = vmatmul.mubr.f32.gmra.mxu0 %v1584
    %v1744 = vpop.f32.mrf.mxu0
    %v1745 = vadd.f32 0.0, %v1744
    %v1746 = vpop.f32.mrf.mxu0
    %v1747 = vadd.f32 0.0, %v1746
    %1748 = vmatprep.mubr.f32.mxu0 0.0
    %1749 = vmatmul.mubr.f32.gmra.mxu0 %v1586
    %v1750 = vpop.f32.mrf.mxu0
    %v1751 = vadd.f32 0.0, %v1750
    %v1752 = vpop.f32.mrf.mxu0
    %v1753 = vadd.f32 0.0, %v1752
    %1754 = vmatprep.mubr.f32.mxu0 0.0
    %1755 = vmatmul.mubr.f32.gmra.mxu0 %v1588
    %v1756 = vpop.f32.mrf.mxu0
    %v1757 = vadd.f32 0.0, %v1756
    %v1758 = vpop.f32.mrf.mxu0
    %v1759 = vadd.f32 0.0, %v1758
    %1760 = vmatprep.mubr.f32.mxu0 0.0
    %1761 = vmatmul.mubr.f32.gmra.mxu0 %v1590
    %v1762 = vpop.f32.mrf.mxu0
    %v1763 = vadd.f32 0.0, %v1762
    %v1764 = vpop.f32.mrf.mxu0
    %v1765 = vadd.f32 0.0, %v1764
    %1766 = vmatprep.mubr.f32.mxu0 0.0
    %1767 = vmatmul.mubr.f32.gmra.mxu0 %v1592
    %v1768 = vpop.f32.mrf.mxu0
    %v1769 = vadd.f32 0.0, %v1768
    %v1770 = vpop.f32.mrf.mxu0
    %v1771 = vadd.f32 0.0, %v1770
    %1772 = vmatprep.mubr.f32.mxu0 0.0
    %1773 = vmatmul.mubr.f32.gmra.mxu0 %v1594
    %v1774 = vpop.f32.mrf.mxu0
    %v1775 = vadd.f32 0.0, %v1774
    %v1776 = vpop.f32.mrf.mxu0
    %v1777 = vadd.f32 0.0, %v1776
    %1778 = vmatprep.mubr.f32.mxu0 0.0
    %1779 = vmatmul.mubr.f32.gmra.mxu0 %v1596
    %v1780 = vpop.f32.mrf.mxu0
    %v1781 = vadd.f32 0.0, %v1780
    %v1782 = vpop.f32.mrf.mxu0
    %v1783 = vadd.f32 0.0, %v1782
    %1784 = vmatprep.mubr.f32.mxu0 0.0
    %1785 = vmatmul.mubr.f32.gmra.mxu0 %v1598
    %v1786 = vpop.f32.mrf.mxu0
    %v1787 = vadd.f32 0.0, %v1786
    %v1788 = vpop.f32.mrf.mxu0
    %v1789 = vadd.f32 0.0, %v1788
    %1790 = vmatprep.mubr.f32.mxu0 0.0
    %1791 = vmatmul.mubr.f32.gmra.mxu0 %v1600
    %v1792 = vpop.f32.mrf.mxu0
    %v1793 = vadd.f32 0.0, %v1792
    %v1794 = vpop.f32.mrf.mxu0
    %v1795 = vadd.f32 0.0, %v1794
    %1796 = vmatprep.mubr.f32.mxu0 0.0
    %1797 = vmatmul.mubr.f32.gmra.mxu0 %v1602
    %v1798 = vpop.f32.mrf.mxu0
    %v1799 = vadd.f32 0.0, %v1798
    %v1800 = vpop.f32.mrf.mxu0
    %v1801 = vadd.f32 0.0, %v1800
    %1802 = vmatprep.mubr.f32.mxu0 0.0
    %1803 = vmatmul.mubr.f32.gmra.mxu0 %v1604
    %v1804 = vpop.f32.mrf.mxu0
    %v1805 = vadd.f32 0.0, %v1804
    %v1806 = vpop.f32.mrf.mxu0
    %v1807 = vadd.f32 0.0, %v1806
    %1808 = vmatprep.mubr.f32.mxu0 0.0
    %1809 = vmatmul.mubr.f32.gmra.mxu0 %v1606
    %v1810 = vpop.f32.mrf.mxu0
    %v1811 = vadd.f32 0.0, %v1810
    %v1812 = vpop.f32.mrf.mxu0
    %v1813 = vadd.f32 0.0, %v1812
    %1814 = vmatprep.mubr.f32.mxu0 0.0
    %1815 = vmatmul.mubr.f32.gmra.mxu0 %v1608
    %v1816 = vpop.f32.mrf.mxu0
    %v1817 = vadd.f32 0.0, %v1816
    %v1818 = vpop.f32.mrf.mxu0
    %v1819 = vadd.f32 0.0, %v1818
    %1820 = vmatprep.mubr.f32.mxu0 0.0
    %1821 = vmatmul.mubr.f32.gmra.mxu0 %v1610
    %v1822 = vpop.f32.mrf.mxu0
    %v1823 = vadd.f32 0.0, %v1822
    %v1824 = vpop.f32.mrf.mxu0
    %v1825 = vadd.f32 0.0, %v1824
    %1826 = vdwg.mxu0
    %v1827 = vadd.f32 %v1451, %v1685
    %v1828 = vadd.f32 %v1452, %v1687
    %v1829 = vadd.f32 %v1453, %v1691
    %v1830 = vadd.f32 %v1454, %v1693
    %v1831 = vadd.f32 %v1455, %v1697
    %v1832 = vadd.f32 %v1456, %v1699
    %v1833 = vadd.f32 %v1457, %v1703
    %v1834 = vadd.f32 %v1458, %v1705
    %v1835 = vadd.f32 %v1459, %v1709
    %v1836 = vadd.f32 %v1460, %v1711
    %v1837 = vadd.f32 %v1461, %v1715
    %v1838 = vadd.f32 %v1462, %v1717
    %v1839 = vadd.f32 %v1463, %v1721
    %v1840 = vadd.f32 %v1464, %v1723
    %v1841 = vadd.f32 %v1465, %v1727
    %v1842 = vadd.f32 %v1466, %v1729
    %v1843 = vadd.f32 %v1467, %v1733
    %v1844 = vadd.f32 %v1468, %v1735
    %v1845 = vadd.f32 %v1469, %v1739
    %v1846 = vadd.f32 %v1470, %v1741
    %v1847 = vadd.f32 %v1471, %v1745
    %v1848 = vadd.f32 %v1472, %v1747
    %v1849 = vadd.f32 %v1473, %v1751
    %v1850 = vadd.f32 %v1474, %v1753
    %v1851 = vadd.f32 %v1475, %v1757
    %v1852 = vadd.f32 %v1476, %v1759
    %v1853 = vadd.f32 %v1477, %v1763
    %v1854 = vadd.f32 %v1478, %v1765
    %v1855 = vadd.f32 %v1479, %v1769
    %v1856 = vadd.f32 %v1480, %v1771
    %v1857 = vadd.f32 %v1481, %v1775
    %v1858 = vadd.f32 %v1482, %v1777
    %v1859 = vadd.f32 %v1483, %v1781
    %v1860 = vadd.f32 %v1484, %v1783
    %v1861 = vadd.f32 %v1485, %v1787
    %v1862 = vadd.f32 %v1486, %v1789
    %v1863 = vadd.f32 %v1487, %v1793
    %v1864 = vadd.f32 %v1488, %v1795
    %v1865 = vadd.f32 %v1489, %v1799
    %v1866 = vadd.f32 %v1490, %v1801
    %v1867 = vadd.f32 %v1491, %v1805
    %v1868 = vadd.f32 %v1492, %v1807
    %v1869 = vadd.f32 %v1493, %v1811
    %v1870 = vadd.f32 %v1494, %v1813
    %v1871 = vadd.f32 %v1495, %v1817
    %v1872 = vadd.f32 %v1496, %v1819
    %v1873 = vadd.f32 %v1497, %v1823
    %v1874 = vadd.f32 %v1498, %v1825
    %v1875 = vld [vmem:[%s2] sm:$0x3]
    %v1877 = vlaneseq
    %v1878 = vshrl.u32 %v1877, 7
    %v1879 = vsub.s32 0, %v1878
    %v1880 = vrot.slane %v1875, %v1879
    %v1881 = vlaneseq
    %v1882 = vshrl.u32 %v1881, 7
    %v1883 = vsub.s32 1, %v1882
    %v1884 = vrot.slane %v1875, %v1883
    %v1887 = vadd.f32 %v1827, %v1880
    %v1888 = vadd.f32 %v1828, %v1884
    %v1889 = vadd.f32 %v1829, %v1880
    %v1890 = vadd.f32 %v1830, %v1884
    %v1891 = vadd.f32 %v1831, %v1880
    %v1892 = vadd.f32 %v1832, %v1884
    %v1893 = vadd.f32 %v1833, %v1880
    %v1894 = vadd.f32 %v1834, %v1884
    %v1895 = vadd.f32 %v1835, %v1880
    %v1896 = vadd.f32 %v1836, %v1884
    %v1897 = vadd.f32 %v1837, %v1880
    %v1898 = vadd.f32 %v1838, %v1884
    %v1899 = vadd.f32 %v1839, %v1880
    %v1900 = vadd.f32 %v1840, %v1884
    %v1901 = vadd.f32 %v1841, %v1880
    %v1902 = vadd.f32 %v1842, %v1884
    %v1903 = vadd.f32 %v1843, %v1880
    %v1904 = vadd.f32 %v1844, %v1884
    %v1905 = vadd.f32 %v1845, %v1880
    %v1906 = vadd.f32 %v1846, %v1884
    %v1907 = vadd.f32 %v1847, %v1880
    %v1908 = vadd.f32 %v1848, %v1884
    %v1909 = vadd.f32 %v1849, %v1880
    %v1910 = vadd.f32 %v1850, %v1884
    %v1911 = vadd.f32 %v1851, %v1880
    %v1912 = vadd.f32 %v1852, %v1884
    %v1913 = vadd.f32 %v1853, %v1880
    %v1914 = vadd.f32 %v1854, %v1884
    %v1915 = vadd.f32 %v1855, %v1880
    %v1916 = vadd.f32 %v1856, %v1884
    %v1917 = vadd.f32 %v1857, %v1880
    %v1918 = vadd.f32 %v1858, %v1884
    %v1919 = vadd.f32 %v1859, %v1880
    %v1920 = vadd.f32 %v1860, %v1884
    %v1921 = vadd.f32 %v1861, %v1880
    %v1922 = vadd.f32 %v1862, %v1884
    %v1923 = vadd.f32 %v1863, %v1880
    %v1924 = vadd.f32 %v1864, %v1884
    %v1925 = vadd.f32 %v1865, %v1880
    %v1926 = vadd.f32 %v1866, %v1884
    %v1927 = vadd.f32 %v1867, %v1880
    %v1928 = vadd.f32 %v1868, %v1884
    %v1929 = vadd.f32 %v1869, %v1880
    %v1930 = vadd.f32 %v1870, %v1884
    %v1931 = vadd.f32 %v1871, %v1880
    %v1932 = vadd.f32 %v1872, %v1884
    %v1933 = vadd.f32 %v1873, %v1880
    %v1934 = vadd.f32 %v1874, %v1884
    %v1935 = vmax.f32 %v1887, 0.0
    %v1936 = vmax.f32 %v1888, 0.0
    %v1937 = vmax.f32 %v1889, 0.0
    %v1938 = vmax.f32 %v1890, 0.0
    %v1939 = vmax.f32 %v1891, 0.0
    %v1940 = vmax.f32 %v1892, 0.0
    %v1941 = vmax.f32 %v1893, 0.0
    %v1942 = vmax.f32 %v1894, 0.0
    %v1943 = vmax.f32 %v1895, 0.0
    %v1944 = vmax.f32 %v1896, 0.0
    %v1945 = vmax.f32 %v1897, 0.0
    %v1946 = vmax.f32 %v1898, 0.0
    %v1947 = vmax.f32 %v1899, 0.0
    %v1948 = vmax.f32 %v1900, 0.0
    %v1949 = vmax.f32 %v1901, 0.0
    %v1950 = vmax.f32 %v1902, 0.0
    %v1951 = vmax.f32 %v1903, 0.0
    %v1952 = vmax.f32 %v1904, 0.0
    %v1953 = vmax.f32 %v1905, 0.0
    %v1954 = vmax.f32 %v1906, 0.0
    %v1955 = vmax.f32 %v1907, 0.0
    %v1956 = vmax.f32 %v1908, 0.0
    %v1957 = vmax.f32 %v1909, 0.0
    %v1958 = vmax.f32 %v1910, 0.0
    %v1959 = vmax.f32 %v1911, 0.0
    %v1960 = vmax.f32 %v1912, 0.0
    %v1961 = vmax.f32 %v1913, 0.0
    %v1962 = vmax.f32 %v1914, 0.0
    %v1963 = vmax.f32 %v1915, 0.0
    %v1964 = vmax.f32 %v1916, 0.0
    %v1965 = vmax.f32 %v1917, 0.0
    %v1966 = vmax.f32 %v1918, 0.0
    %v1967 = vmax.f32 %v1919, 0.0
    %v1968 = vmax.f32 %v1920, 0.0
    %v1969 = vmax.f32 %v1921, 0.0
    %v1970 = vmax.f32 %v1922, 0.0
    %v1971 = vmax.f32 %v1923, 0.0
    %v1972 = vmax.f32 %v1924, 0.0
    %v1973 = vmax.f32 %v1925, 0.0
    %v1974 = vmax.f32 %v1926, 0.0
    %v1975 = vmax.f32 %v1927, 0.0
    %v1976 = vmax.f32 %v1928, 0.0
    %v1977 = vmax.f32 %v1929, 0.0
    %v1978 = vmax.f32 %v1930, 0.0
    %v1979 = vmax.f32 %v1931, 0.0
    %v1980 = vmax.f32 %v1932, 0.0
    %v1981 = vmax.f32 %v1933, 0.0
    %v1982 = vmax.f32 %v1934, 0.0
    %2031 = vrot.lane.b32.xlu0 %v1935, 56
    %v2032 = vpop.permute.xlu0 %2031
    %2033 = vrot.lane.b32.xlu0 %v1936, 56
    %v2034 = vpop.permute.xlu0 %2033
    %2035 = vrot.lane.b32.xlu0 %v1937, 56
    %v2036 = vpop.permute.xlu0 %2035
    %2037 = vrot.lane.b32.xlu0 %v1938, 56
    %v2038 = vpop.permute.xlu0 %2037
    %2039 = vrot.lane.b32.xlu0 %v1939, 56
    %v2040 = vpop.permute.xlu0 %2039
    %2041 = vrot.lane.b32.xlu0 %v1940, 56
    %v2042 = vpop.permute.xlu0 %2041
    %2043 = vrot.lane.b32.xlu0 %v1941, 56
    %v2044 = vpop.permute.xlu0 %2043
    %2045 = vrot.lane.b32.xlu0 %v1942, 56
    %v2046 = vpop.permute.xlu0 %2045
    %2047 = vrot.lane.b32.xlu0 %v1943, 56
    %v2048 = vpop.permute.xlu0 %2047
    %2049 = vrot.lane.b32.xlu0 %v1944, 56
    %v2050 = vpop.permute.xlu0 %2049
    %2051 = vrot.lane.b32.xlu0 %v1945, 56
    %v2052 = vpop.permute.xlu0 %2051
    %2053 = vrot.lane.b32.xlu0 %v1946, 56
    %v2054 = vpop.permute.xlu0 %2053
    %2055 = vrot.lane.b32.xlu0 %v1947, 56
    %v2056 = vpop.permute.xlu0 %2055
    %2057 = vrot.lane.b32.xlu0 %v1948, 56
    %v2058 = vpop.permute.xlu0 %2057
    %2059 = vrot.lane.b32.xlu0 %v1949, 56
    %v2060 = vpop.permute.xlu0 %2059
    %2061 = vrot.lane.b32.xlu0 %v1950, 56
    %v2062 = vpop.permute.xlu0 %2061
    %2063 = vrot.lane.b32.xlu0 %v1951, 56
    %v2064 = vpop.permute.xlu0 %2063
    %2065 = vrot.lane.b32.xlu0 %v1952, 56
    %v2066 = vpop.permute.xlu0 %2065
    %2067 = vrot.lane.b32.xlu0 %v1953, 56
    %v2068 = vpop.permute.xlu0 %2067
    %2069 = vrot.lane.b32.xlu0 %v1954, 56
    %v2070 = vpop.permute.xlu0 %2069
    %2071 = vrot.lane.b32.xlu0 %v1955, 56
    %v2072 = vpop.permute.xlu0 %2071
    %2073 = vrot.lane.b32.xlu0 %v1956, 56
    %v2074 = vpop.permute.xlu0 %2073
    %2075 = vrot.lane.b32.xlu0 %v1957, 56
    %v2076 = vpop.permute.xlu0 %2075
    %2077 = vrot.lane.b32.xlu0 %v1958, 56
    %v2078 = vpop.permute.xlu0 %2077
    %2079 = vrot.lane.b32.xlu0 %v1959, 56
    %v2080 = vpop.permute.xlu0 %2079
    %2081 = vrot.lane.b32.xlu0 %v1960, 56
    %v2082 = vpop.permute.xlu0 %2081
    %2083 = vrot.lane.b32.xlu0 %v1961, 56
    %v2084 = vpop.permute.xlu0 %2083
    %2085 = vrot.lane.b32.xlu0 %v1962, 56
    %v2086 = vpop.permute.xlu0 %2085
    %2087 = vrot.lane.b32.xlu0 %v1963, 56
    %v2088 = vpop.permute.xlu0 %2087
    %2089 = vrot.lane.b32.xlu0 %v1964, 56
    %v2090 = vpop.permute.xlu0 %2089
    %2091 = vrot.lane.b32.xlu0 %v1965, 56
    %v2092 = vpop.permute.xlu0 %2091
    %2093 = vrot.lane.b32.xlu0 %v1966, 56
    %v2094 = vpop.permute.xlu0 %2093
    %2095 = vrot.lane.b32.xlu0 %v1967, 56
    %v2096 = vpop.permute.xlu0 %2095
    %2097 = vrot.lane.b32.xlu0 %v1968, 56
    %v2098 = vpop.permute.xlu0 %2097
    %2099 = vrot.lane.b32.xlu0 %v1969, 56
    %v2100 = vpop.permute.xlu0 %2099
    %2101 = vrot.lane.b32.xlu0 %v1970, 56
    %v2102 = vpop.permute.xlu0 %2101
    %2103 = vrot.lane.b32.xlu0 %v1971, 56
    %v2104 = vpop.permute.xlu0 %2103
    %2105 = vrot.lane.b32.xlu0 %v1972, 56
    %v2106 = vpop.permute.xlu0 %2105
    %2107 = vrot.lane.b32.xlu0 %v1973, 56
    %v2108 = vpop.permute.xlu0 %2107
    %2109 = vrot.lane.b32.xlu0 %v1974, 56
    %v2110 = vpop.permute.xlu0 %2109
    %2111 = vrot.lane.b32.xlu0 %v1975, 56
    %v2112 = vpop.permute.xlu0 %2111
    %2113 = vrot.lane.b32.xlu0 %v1976, 56
    %v2114 = vpop.permute.xlu0 %2113
    %2115 = vrot.lane.b32.xlu0 %v1977, 56
    %v2116 = vpop.permute.xlu0 %2115
    %2117 = vrot.lane.b32.xlu0 %v1978, 56
    %v2118 = vpop.permute.xlu0 %2117
    %2119 = vrot.lane.b32.xlu0 %v1979, 56
    %v2120 = vpop.permute.xlu0 %2119
    %2121 = vrot.lane.b32.xlu0 %v1980, 56
    %v2122 = vpop.permute.xlu0 %2121
    %2123 = vrot.lane.b32.xlu0 %v1981, 56
    %v2124 = vpop.permute.xlu0 %2123
    %2125 = vrot.lane.b32.xlu0 %v1982, 56
    %v2126 = vpop.permute.xlu0 %2125
    %vm2127 = vcmask 457728
    %v2128 = vsel %vm2127, %v2032, %v2034
    %v2129 = vsel %vm2127, %v2036, %v2038
    %v2130 = vsel %vm2127, %v2040, %v2042
    %v2131 = vsel %vm2127, %v2044, %v2046
    %v2132 = vsel %vm2127, %v2048, %v2050
    %v2133 = vsel %vm2127, %v2052, %v2054
    %v2134 = vsel %vm2127, %v2056, %v2058
    %v2135 = vsel %vm2127, %v2060, %v2062
    %v2136 = vsel %vm2127, %v2064, %v2066
    %v2137 = vsel %vm2127, %v2068, %v2070
    %v2138 = vsel %vm2127, %v2072, %v2074
    %v2139 = vsel %vm2127, %v2076, %v2078
    %v2140 = vsel %vm2127, %v2080, %v2082
    %v2141 = vsel %vm2127, %v2084, %v2086
    %v2142 = vsel %vm2127, %v2088, %v2090
    %v2143 = vsel %vm2127, %v2092, %v2094
    %v2144 = vsel %vm2127, %v2096, %v2098
    %v2145 = vsel %vm2127, %v2100, %v2102
    %v2146 = vsel %vm2127, %v2104, %v2106
    %v2147 = vsel %vm2127, %v2108, %v2110
    %v2148 = vsel %vm2127, %v2112, %v2114
    %v2149 = vsel %vm2127, %v2116, %v2118
    %v2150 = vsel %vm2127, %v2120, %v2122
    %v2151 = vsel %vm2127, %v2124, %v2126
    %v2176 = vmax.f32 %v1935, %v2128
    %v2177 = vmax.f32 %v1937, %v2129
    %v2178 = vmax.f32 %v1939, %v2130
    %v2179 = vmax.f32 %v1941, %v2131
    %v2180 = vmax.f32 %v1943, %v2132
    %v2181 = vmax.f32 %v1945, %v2133
    %v2182 = vmax.f32 %v1947, %v2134
    %v2183 = vmax.f32 %v1949, %v2135
    %v2184 = vmax.f32 %v1951, %v2136
    %v2185 = vmax.f32 %v1953, %v2137
    %v2186 = vmax.f32 %v1955, %v2138
    %v2187 = vmax.f32 %v1957, %v2139
    %v2188 = vmax.f32 %v1959, %v2140
    %v2189 = vmax.f32 %v1961, %v2141
    %v2190 = vmax.f32 %v1963, %v2142
    %v2191 = vmax.f32 %v1965, %v2143
    %v2192 = vmax.f32 %v1967, %v2144
    %v2193 = vmax.f32 %v1969, %v2145
    %v2194 = vmax.f32 %v1971, %v2146
    %v2195 = vmax.f32 %v1973, %v2147
    %v2196 = vmax.f32 %v1975, %v2148
    %v2197 = vmax.f32 %v1977, %v2149
    %v2198 = vmax.f32 %v1979, %v2150
    %v2199 = vmax.f32 %v1981, %v2151
    %v2224 = vcombine.high %v2176, %v2176
    %v2226 = vunpack.c.l.s4 1983009808
    %v2227 = vunpack.c.0.s8 %v2226
    %v2228 = vlaneseq
    %v2229 = vshrl.u32 %v2228, 7
    %v2230 = vsub.s32 %v2227, %v2229
    %v2231 = vrot.slane %v2176, %v2230
    %v2233 = vunpack.c.l.s4 1983009808
    %v2234 = vunpack.c.0.s8 %v2233
    %v2235 = vlaneseq
    %v2236 = vshrl.u32 %v2235, 7
    %v2237 = vsub.s32 %v2234, %v2236
    %v2238 = vrot.slane %v2224, %v2237
    %v2239 = vcombine.high %v2231, %v2231
    %v2240 = vcombine.high %v2238, %v2238
    %v2241 = vcombine.high %v2177, %v2177
    %v2243 = vunpack.c.l.s4 1983009808
    %v2244 = vunpack.c.0.s8 %v2243
    %v2245 = vlaneseq
    %v2246 = vshrl.u32 %v2245, 7
    %v2247 = vsub.s32 %v2244, %v2246
    %v2248 = vrot.slane %v2177, %v2247
    %v2250 = vunpack.c.l.s4 1983009808
    %v2251 = vunpack.c.0.s8 %v2250
    %v2252 = vlaneseq
    %v2253 = vshrl.u32 %v2252, 7
    %v2254 = vsub.s32 %v2251, %v2253
    %v2255 = vrot.slane %v2241, %v2254
    %v2256 = vcombine.high %v2248, %v2248
    %v2257 = vcombine.high %v2255, %v2255
    %v2258 = vcombine.high %v2178, %v2178
    %v2260 = vunpack.c.l.s4 1983009808
    %v2261 = vunpack.c.0.s8 %v2260
    %v2262 = vlaneseq
    %v2263 = vshrl.u32 %v2262, 7
    %v2264 = vsub.s32 %v2261, %v2263
    %v2265 = vrot.slane %v2178, %v2264
    %v2267 = vunpack.c.l.s4 1983009808
    %v2268 = vunpack.c.0.s8 %v2267
    %v2269 = vlaneseq
    %v2270 = vshrl.u32 %v2269, 7
    %v2271 = vsub.s32 %v2268, %v2270
    %v2272 = vrot.slane %v2258, %v2271
    %v2273 = vcombine.high %v2265, %v2265
    %v2274 = vcombine.high %v2272, %v2272
    %v2275 = vcombine.high %v2179, %v2179
    %v2277 = vunpack.c.l.s4 1983009808
    %v2278 = vunpack.c.0.s8 %v2277
    %v2279 = vlaneseq
    %v2280 = vshrl.u32 %v2279, 7
    %v2281 = vsub.s32 %v2278, %v2280
    %v2282 = vrot.slane %v2179, %v2281
    %v2284 = vunpack.c.l.s4 1983009808
    %v2285 = vunpack.c.0.s8 %v2284
    %v2286 = vlaneseq
    %v2287 = vshrl.u32 %v2286, 7
    %v2288 = vsub.s32 %v2285, %v2287
    %v2289 = vrot.slane %v2275, %v2288
    %v2290 = vcombine.high %v2282, %v2282
    %v2291 = vcombine.high %v2289, %v2289
    %v2292 = vcombine.high %v2180, %v2180
    %v2294 = vunpack.c.l.s4 1983009808
    %v2295 = vunpack.c.0.s8 %v2294
    %v2296 = vlaneseq
    %v2297 = vshrl.u32 %v2296, 7
    %v2298 = vsub.s32 %v2295, %v2297
    %v2299 = vrot.slane %v2180, %v2298
    %v2301 = vunpack.c.l.s4 1983009808
    %v2302 = vunpack.c.0.s8 %v2301
    %v2303 = vlaneseq
    %v2304 = vshrl.u32 %v2303, 7
    %v2305 = vsub.s32 %v2302, %v2304
    %v2306 = vrot.slane %v2292, %v2305
    %v2307 = vcombine.high %v2299, %v2299
    %v2308 = vcombine.high %v2306, %v2306
    %v2309 = vcombine.high %v2181, %v2181
    %v2311 = vunpack.c.l.s4 1983009808
    %v2312 = vunpack.c.0.s8 %v2311
    %v2313 = vlaneseq
    %v2314 = vshrl.u32 %v2313, 7
    %v2315 = vsub.s32 %v2312, %v2314
    %v2316 = vrot.slane %v2181, %v2315
    %v2318 = vunpack.c.l.s4 1983009808
    %v2319 = vunpack.c.0.s8 %v2318
    %v2320 = vlaneseq
    %v2321 = vshrl.u32 %v2320, 7
    %v2322 = vsub.s32 %v2319, %v2321
    %v2323 = vrot.slane %v2309, %v2322
    %v2324 = vcombine.high %v2316, %v2316
    %v2325 = vcombine.high %v2323, %v2323
    %v2326 = vcombine.high %v2182, %v2182
    %v2328 = vunpack.c.l.s4 1983009808
    %v2329 = vunpack.c.0.s8 %v2328
    %v2330 = vlaneseq
    %v2331 = vshrl.u32 %v2330, 7
    %v2332 = vsub.s32 %v2329, %v2331
    %v2333 = vrot.slane %v2182, %v2332
    %v2335 = vunpack.c.l.s4 1983009808
    %v2336 = vunpack.c.0.s8 %v2335
    %v2337 = vlaneseq
    %v2338 = vshrl.u32 %v2337, 7
    %v2339 = vsub.s32 %v2336, %v2338
    %v2340 = vrot.slane %v2326, %v2339
    %v2341 = vcombine.high %v2333, %v2333
    %v2342 = vcombine.high %v2340, %v2340
    %v2343 = vcombine.high %v2183, %v2183
    %v2345 = vunpack.c.l.s4 1983009808
    %v2346 = vunpack.c.0.s8 %v2345
    %v2347 = vlaneseq
    %v2348 = vshrl.u32 %v2347, 7
    %v2349 = vsub.s32 %v2346, %v2348
    %v2350 = vrot.slane %v2183, %v2349
    %v2352 = vunpack.c.l.s4 1983009808
    %v2353 = vunpack.c.0.s8 %v2352
    %v2354 = vlaneseq
    %v2355 = vshrl.u32 %v2354, 7
    %v2356 = vsub.s32 %v2353, %v2355
    %v2357 = vrot.slane %v2343, %v2356
    %v2358 = vcombine.high %v2350, %v2350
    %v2359 = vcombine.high %v2357, %v2357
    %v2360 = vcombine.high %v2184, %v2184
    %v2362 = vunpack.c.l.s4 1983009808
    %v2363 = vunpack.c.0.s8 %v2362
    %v2364 = vlaneseq
    %v2365 = vshrl.u32 %v2364, 7
    %v2366 = vsub.s32 %v2363, %v2365
    %v2367 = vrot.slane %v2184, %v2366
    %v2369 = vunpack.c.l.s4 1983009808
    %v2370 = vunpack.c.0.s8 %v2369
    %v2371 = vlaneseq
    %v2372 = vshrl.u32 %v2371, 7
    %v2373 = vsub.s32 %v2370, %v2372
    %v2374 = vrot.slane %v2360, %v2373
    %v2375 = vcombine.high %v2367, %v2367
    %v2376 = vcombine.high %v2374, %v2374
    %v2377 = vcombine.high %v2185, %v2185
    %v2379 = vunpack.c.l.s4 1983009808
    %v2380 = vunpack.c.0.s8 %v2379
    %v2381 = vlaneseq
    %v2382 = vshrl.u32 %v2381, 7
    %v2383 = vsub.s32 %v2380, %v2382
    %v2384 = vrot.slane %v2185, %v2383
    %v2386 = vunpack.c.l.s4 1983009808
    %v2387 = vunpack.c.0.s8 %v2386
    %v2388 = vlaneseq
    %v2389 = vshrl.u32 %v2388, 7
    %v2390 = vsub.s32 %v2387, %v2389
    %v2391 = vrot.slane %v2377, %v2390
    %v2392 = vcombine.high %v2384, %v2384
    %v2393 = vcombine.high %v2391, %v2391
    %v2394 = vcombine.high %v2186, %v2186
    %v2396 = vunpack.c.l.s4 1983009808
    %v2397 = vunpack.c.0.s8 %v2396
    %v2398 = vlaneseq
    %v2399 = vshrl.u32 %v2398, 7
    %v2400 = vsub.s32 %v2397, %v2399
    %v2401 = vrot.slane %v2186, %v2400
    %v2403 = vunpack.c.l.s4 1983009808
    %v2404 = vunpack.c.0.s8 %v2403
    %v2405 = vlaneseq
    %v2406 = vshrl.u32 %v2405, 7
    %v2407 = vsub.s32 %v2404, %v2406
    %v2408 = vrot.slane %v2394, %v2407
    %v2409 = vcombine.high %v2401, %v2401
    %v2410 = vcombine.high %v2408, %v2408
    %v2411 = vcombine.high %v2187, %v2187
    %v2413 = vunpack.c.l.s4 1983009808
    %v2414 = vunpack.c.0.s8 %v2413
    %v2415 = vlaneseq
    %v2416 = vshrl.u32 %v2415, 7
    %v2417 = vsub.s32 %v2414, %v2416
    %v2418 = vrot.slane %v2187, %v2417
    %v2420 = vunpack.c.l.s4 1983009808
    %v2421 = vunpack.c.0.s8 %v2420
    %v2422 = vlaneseq
    %v2423 = vshrl.u32 %v2422, 7
    %v2424 = vsub.s32 %v2421, %v2423
    %v2425 = vrot.slane %v2411, %v2424
    %v2426 = vcombine.high %v2418, %v2418
    %v2427 = vcombine.high %v2425, %v2425
    %v2428 = vcombine.high %v2188, %v2188
    %v2430 = vunpack.c.l.s4 1983009808
    %v2431 = vunpack.c.0.s8 %v2430
    %v2432 = vlaneseq
    %v2433 = vshrl.u32 %v2432, 7
    %v2434 = vsub.s32 %v2431, %v2433
    %v2435 = vrot.slane %v2188, %v2434
    %v2437 = vunpack.c.l.s4 1983009808
    %v2438 = vunpack.c.0.s8 %v2437
    %v2439 = vlaneseq
    %v2440 = vshrl.u32 %v2439, 7
    %v2441 = vsub.s32 %v2438, %v2440
    %v2442 = vrot.slane %v2428, %v2441
    %v2443 = vcombine.high %v2435, %v2435
    %v2444 = vcombine.high %v2442, %v2442
    %v2445 = vcombine.high %v2189, %v2189
    %v2447 = vunpack.c.l.s4 1983009808
    %v2448 = vunpack.c.0.s8 %v2447
    %v2449 = vlaneseq
    %v2450 = vshrl.u32 %v2449, 7
    %v2451 = vsub.s32 %v2448, %v2450
    %v2452 = vrot.slane %v2189, %v2451
    %v2454 = vunpack.c.l.s4 1983009808
    %v2455 = vunpack.c.0.s8 %v2454
    %v2456 = vlaneseq
    %v2457 = vshrl.u32 %v2456, 7
    %v2458 = vsub.s32 %v2455, %v2457
    %v2459 = vrot.slane %v2445, %v2458
    %v2460 = vcombine.high %v2452, %v2452
    %v2461 = vcombine.high %v2459, %v2459
    %v2462 = vcombine.high %v2190, %v2190
    %v2464 = vunpack.c.l.s4 1983009808
    %v2465 = vunpack.c.0.s8 %v2464
    %v2466 = vlaneseq
    %v2467 = vshrl.u32 %v2466, 7
    %v2468 = vsub.s32 %v2465, %v2467
    %v2469 = vrot.slane %v2190, %v2468
    %v2471 = vunpack.c.l.s4 1983009808
    %v2472 = vunpack.c.0.s8 %v2471
    %v2473 = vlaneseq
    %v2474 = vshrl.u32 %v2473, 7
    %v2475 = vsub.s32 %v2472, %v2474
    %v2476 = vrot.slane %v2462, %v2475
    %v2477 = vcombine.high %v2469, %v2469
    %v2478 = vcombine.high %v2476, %v2476
    %v2479 = vcombine.high %v2191, %v2191
    %v2481 = vunpack.c.l.s4 1983009808
    %v2482 = vunpack.c.0.s8 %v2481
    %v2483 = vlaneseq
    %v2484 = vshrl.u32 %v2483, 7
    %v2485 = vsub.s32 %v2482, %v2484
    %v2486 = vrot.slane %v2191, %v2485
    %v2488 = vunpack.c.l.s4 1983009808
    %v2489 = vunpack.c.0.s8 %v2488
    %v2490 = vlaneseq
    %v2491 = vshrl.u32 %v2490, 7
    %v2492 = vsub.s32 %v2489, %v2491
    %v2493 = vrot.slane %v2479, %v2492
    %v2494 = vcombine.high %v2486, %v2486
    %v2495 = vcombine.high %v2493, %v2493
    %v2496 = vcombine.high %v2192, %v2192
    %v2498 = vunpack.c.l.s4 1983009808
    %v2499 = vunpack.c.0.s8 %v2498
    %v2500 = vlaneseq
    %v2501 = vshrl.u32 %v2500, 7
    %v2502 = vsub.s32 %v2499, %v2501
    %v2503 = vrot.slane %v2192, %v2502
    %v2505 = vunpack.c.l.s4 1983009808
    %v2506 = vunpack.c.0.s8 %v2505
    %v2507 = vlaneseq
    %v2508 = vshrl.u32 %v2507, 7
    %v2509 = vsub.s32 %v2506, %v2508
    %v2510 = vrot.slane %v2496, %v2509
    %v2511 = vcombine.high %v2503, %v2503
    %v2512 = vcombine.high %v2510, %v2510
    %v2513 = vcombine.high %v2193, %v2193
    %v2515 = vunpack.c.l.s4 1983009808
    %v2516 = vunpack.c.0.s8 %v2515
    %v2517 = vlaneseq
    %v2518 = vshrl.u32 %v2517, 7
    %v2519 = vsub.s32 %v2516, %v2518
    %v2520 = vrot.slane %v2193, %v2519
    %v2522 = vunpack.c.l.s4 1983009808
    %v2523 = vunpack.c.0.s8 %v2522
    %v2524 = vlaneseq
    %v2525 = vshrl.u32 %v2524, 7
    %v2526 = vsub.s32 %v2523, %v2525
    %v2527 = vrot.slane %v2513, %v2526
    %v2528 = vcombine.high %v2520, %v2520
    %v2529 = vcombine.high %v2527, %v2527
    %v2530 = vcombine.high %v2194, %v2194
    %v2532 = vunpack.c.l.s4 1983009808
    %v2533 = vunpack.c.0.s8 %v2532
    %v2534 = vlaneseq
    %v2535 = vshrl.u32 %v2534, 7
    %v2536 = vsub.s32 %v2533, %v2535
    %v2537 = vrot.slane %v2194, %v2536
    %v2539 = vunpack.c.l.s4 1983009808
    %v2540 = vunpack.c.0.s8 %v2539
    %v2541 = vlaneseq
    %v2542 = vshrl.u32 %v2541, 7
    %v2543 = vsub.s32 %v2540, %v2542
    %v2544 = vrot.slane %v2530, %v2543
    %v2545 = vcombine.high %v2537, %v2537
    %v2546 = vcombine.high %v2544, %v2544
    %v2547 = vcombine.high %v2195, %v2195
    %v2549 = vunpack.c.l.s4 1983009808
    %v2550 = vunpack.c.0.s8 %v2549
    %v2551 = vlaneseq
    %v2552 = vshrl.u32 %v2551, 7
    %v2553 = vsub.s32 %v2550, %v2552
    %v2554 = vrot.slane %v2195, %v2553
    %v2556 = vunpack.c.l.s4 1983009808
    %v2557 = vunpack.c.0.s8 %v2556
    %v2558 = vlaneseq
    %v2559 = vshrl.u32 %v2558, 7
    %v2560 = vsub.s32 %v2557, %v2559
    %v2561 = vrot.slane %v2547, %v2560
    %v2562 = vcombine.high %v2554, %v2554
    %v2563 = vcombine.high %v2561, %v2561
    %v2564 = vcombine.high %v2196, %v2196
    %v2566 = vunpack.c.l.s4 1983009808
    %v2567 = vunpack.c.0.s8 %v2566
    %v2568 = vlaneseq
    %v2569 = vshrl.u32 %v2568, 7
    %v2570 = vsub.s32 %v2567, %v2569
    %v2571 = vrot.slane %v2196, %v2570
    %v2573 = vunpack.c.l.s4 1983009808
    %v2574 = vunpack.c.0.s8 %v2573
    %v2575 = vlaneseq
    %v2576 = vshrl.u32 %v2575, 7
    %v2577 = vsub.s32 %v2574, %v2576
    %v2578 = vrot.slane %v2564, %v2577
    %v2579 = vcombine.high %v2571, %v2571
    %v2580 = vcombine.high %v2578, %v2578
    %v2581 = vcombine.high %v2197, %v2197
    %v2583 = vunpack.c.l.s4 1983009808
    %v2584 = vunpack.c.0.s8 %v2583
    %v2585 = vlaneseq
    %v2586 = vshrl.u32 %v2585, 7
    %v2587 = vsub.s32 %v2584, %v2586
    %v2588 = vrot.slane %v2197, %v2587
    %v2590 = vunpack.c.l.s4 1983009808
    %v2591 = vunpack.c.0.s8 %v2590
    %v2592 = vlaneseq
    %v2593 = vshrl.u32 %v2592, 7
    %v2594 = vsub.s32 %v2591, %v2593
    %v2595 = vrot.slane %v2581, %v2594
    %v2596 = vcombine.high %v2588, %v2588
    %v2597 = vcombine.high %v2595, %v2595
    %v2598 = vcombine.high %v2198, %v2198
    %v2600 = vunpack.c.l.s4 1983009808
    %v2601 = vunpack.c.0.s8 %v2600
    %v2602 = vlaneseq
    %v2603 = vshrl.u32 %v2602, 7
    %v2604 = vsub.s32 %v2601, %v2603
    %v2605 = vrot.slane %v2198, %v2604
    %v2607 = vunpack.c.l.s4 1983009808
    %v2608 = vunpack.c.0.s8 %v2607
    %v2609 = vlaneseq
    %v2610 = vshrl.u32 %v2609, 7
    %v2611 = vsub.s32 %v2608, %v2610
    %v2612 = vrot.slane %v2598, %v2611
    %v2613 = vcombine.high %v2605, %v2605
    %v2614 = vcombine.high %v2612, %v2612
    %v2615 = vcombine.high %v2199, %v2199
    %v2617 = vunpack.c.l.s4 1983009808
    %v2618 = vunpack.c.0.s8 %v2617
    %v2619 = vlaneseq
    %v2620 = vshrl.u32 %v2619, 7
    %v2621 = vsub.s32 %v2618, %v2620
    %v2622 = vrot.slane %v2199, %v2621
    %v2624 = vunpack.c.l.s4 1983009808
    %v2625 = vunpack.c.0.s8 %v2624
    %v2626 = vlaneseq
    %v2627 = vshrl.u32 %v2626, 7
    %v2628 = vsub.s32 %v2625, %v2627
    %v2629 = vrot.slane %v2615, %v2628
    %v2630 = vcombine.high %v2622, %v2622
    %v2631 = vcombine.high %v2629, %v2629
    %v2728 = vrot.slane %v2231, 7
    %v2729 = vrot.slane %v2728, 2
    %v2730 = vrot.slane %v2239, 7
    %v2731 = vrot.slane %v2730, 2
    %v2732 = vrot.slane %v2238, 7
    %v2733 = vrot.slane %v2732, 2
    %v2734 = vrot.slane %v2240, 7
    %v2735 = vrot.slane %v2734, 2
    %v2736 = vrot.slane %v2248, 7
    %v2737 = vrot.slane %v2736, 2
    %v2738 = vrot.slane %v2256, 7
    %v2739 = vrot.slane %v2738, 2
    %v2740 = vrot.slane %v2255, 7
    %v2741 = vrot.slane %v2740, 2
    %v2742 = vrot.slane %v2257, 7
    %v2743 = vrot.slane %v2742, 2
    %v2744 = vrot.slane %v2265, 7
    %v2745 = vrot.slane %v2744, 2
    %v2746 = vrot.slane %v2273, 7
    %v2747 = vrot.slane %v2746, 2
    %v2748 = vrot.slane %v2272, 7
    %v2749 = vrot.slane %v2748, 2
    %v2750 = vrot.slane %v2274, 7
    %v2751 = vrot.slane %v2750, 2
    %v2752 = vrot.slane %v2282, 7
    %v2753 = vrot.slane %v2752, 2
    %v2754 = vrot.slane %v2290, 7
    %v2755 = vrot.slane %v2754, 2
    %v2756 = vrot.slane %v2289, 7
    %v2757 = vrot.slane %v2756, 2
    %v2758 = vrot.slane %v2291, 7
    %v2759 = vrot.slane %v2758, 2
    %v2760 = vrot.slane %v2299, 7
    %v2761 = vrot.slane %v2760, 2
    %v2762 = vrot.slane %v2307, 7
    %v2763 = vrot.slane %v2762, 2
    %v2764 = vrot.slane %v2306, 7
    %v2765 = vrot.slane %v2764, 2
    %v2766 = vrot.slane %v2308, 7
    %v2767 = vrot.slane %v2766, 2
    %v2768 = vrot.slane %v2316, 7
    %v2769 = vrot.slane %v2768, 2
    %v2770 = vrot.slane %v2324, 7
    %v2771 = vrot.slane %v2770, 2
    %v2772 = vrot.slane %v2323, 7
    %v2773 = vrot.slane %v2772, 2
    %v2774 = vrot.slane %v2325, 7
    %v2775 = vrot.slane %v2774, 2
    %v2776 = vrot.slane %v2333, 7
    %v2777 = vrot.slane %v2776, 2
    %v2778 = vrot.slane %v2341, 7
    %v2779 = vrot.slane %v2778, 2
    %v2780 = vrot.slane %v2340, 7
    %v2781 = vrot.slane %v2780, 2
    %v2782 = vrot.slane %v2342, 7
    %v2783 = vrot.slane %v2782, 2
    %v2784 = vrot.slane %v2350, 7
    %v2785 = vrot.slane %v2784, 2
    %v2786 = vrot.slane %v2358, 7
    %v2787 = vrot.slane %v2786, 2
    %v2788 = vrot.slane %v2357, 7
    %v2789 = vrot.slane %v2788, 2
    %v2790 = vrot.slane %v2359, 7
    %v2791 = vrot.slane %v2790, 2
    %v2792 = vrot.slane %v2367, 7
    %v2793 = vrot.slane %v2792, 2
    %v2794 = vrot.slane %v2375, 7
    %v2795 = vrot.slane %v2794, 2
    %v2796 = vrot.slane %v2374, 7
    %v2797 = vrot.slane %v2796, 2
    %v2798 = vrot.slane %v2376, 7
    %v2799 = vrot.slane %v2798, 2
    %v2800 = vrot.slane %v2384, 7
    %v2801 = vrot.slane %v2800, 2
    %v2802 = vrot.slane %v2392, 7
    %v2803 = vrot.slane %v2802, 2
    %v2804 = vrot.slane %v2391, 7
    %v2805 = vrot.slane %v2804, 2
    %v2806 = vrot.slane %v2393, 7
    %v2807 = vrot.slane %v2806, 2
    %v2808 = vrot.slane %v2401, 7
    %v2809 = vrot.slane %v2808, 2
    %v2810 = vrot.slane %v2409, 7
    %v2811 = vrot.slane %v2810, 2
    %v2812 = vrot.slane %v2408, 7
    %v2813 = vrot.slane %v2812, 2
    %v2814 = vrot.slane %v2410, 7
    %v2815 = vrot.slane %v2814, 2
    %v2816 = vrot.slane %v2418, 7
    %v2817 = vrot.slane %v2816, 2
    %v2818 = vrot.slane %v2426, 7
    %v2819 = vrot.slane %v2818, 2
    %v2820 = vrot.slane %v2425, 7
    %v2821 = vrot.slane %v2820, 2
    %v2822 = vrot.slane %v2427, 7
    %v2823 = vrot.slane %v2822, 2
    %v2824 = vrot.slane %v2435, 7
    %v2825 = vrot.slane %v2824, 2
    %v2826 = vrot.slane %v2443, 7
    %v2827 = vrot.slane %v2826, 2
    %v2828 = vrot.slane %v2442, 7
    %v2829 = vrot.slane %v2828, 2
    %v2830 = vrot.slane %v2444, 7
    %v2831 = vrot.slane %v2830, 2
    %v2832 = vrot.slane %v2452, 7
    %v2833 = vrot.slane %v2832, 2
    %v2834 = vrot.slane %v2460, 7
    %v2835 = vrot.slane %v2834, 2
    %v2836 = vrot.slane %v2459, 7
    %v2837 = vrot.slane %v2836, 2
    %v2838 = vrot.slane %v2461, 7
    %v2839 = vrot.slane %v2838, 2
    %v2840 = vrot.slane %v2469, 7
    %v2841 = vrot.slane %v2840, 2
    %v2842 = vrot.slane %v2477, 7
    %v2843 = vrot.slane %v2842, 2
    %v2844 = vrot.slane %v2476, 7
    %v2845 = vrot.slane %v2844, 2
    %v2846 = vrot.slane %v2478, 7
    %v2847 = vrot.slane %v2846, 2
    %v2848 = vrot.slane %v2486, 7
    %v2849 = vrot.slane %v2848, 2
    %v2850 = vrot.slane %v2494, 7
    %v2851 = vrot.slane %v2850, 2
    %v2852 = vrot.slane %v2493, 7
    %v2853 = vrot.slane %v2852, 2
    %v2854 = vrot.slane %v2495, 7
    %v2855 = vrot.slane %v2854, 2
    %v2856 = vrot.slane %v2503, 7
    %v2857 = vrot.slane %v2856, 2
    %v2858 = vrot.slane %v2511, 7
    %v2859 = vrot.slane %v2858, 2
    %v2860 = vrot.slane %v2510, 7
    %v2861 = vrot.slane %v2860, 2
    %v2862 = vrot.slane %v2512, 7
    %v2863 = vrot.slane %v2862, 2
    %v2864 = vrot.slane %v2520, 7
    %v2865 = vrot.slane %v2864, 2
    %v2866 = vrot.slane %v2528, 7
    %v2867 = vrot.slane %v2866, 2
    %v2868 = vrot.slane %v2527, 7
    %v2869 = vrot.slane %v2868, 2
    %v2870 = vrot.slane %v2529, 7
    %v2871 = vrot.slane %v2870, 2
    %v2872 = vrot.slane %v2537, 7
    %v2873 = vrot.slane %v2872, 2
    %v2874 = vrot.slane %v2545, 7
    %v2875 = vrot.slane %v2874, 2
    %v2876 = vrot.slane %v2544, 7
    %v2877 = vrot.slane %v2876, 2
    %v2878 = vrot.slane %v2546, 7
    %v2879 = vrot.slane %v2878, 2
    %v2880 = vrot.slane %v2554, 7
    %v2881 = vrot.slane %v2880, 2
    %v2882 = vrot.slane %v2562, 7
    %v2883 = vrot.slane %v2882, 2
    %v2884 = vrot.slane %v2561, 7
    %v2885 = vrot.slane %v2884, 2
    %v2886 = vrot.slane %v2563, 7
    %v2887 = vrot.slane %v2886, 2
    %v2888 = vrot.slane %v2571, 7
    %v2889 = vrot.slane %v2888, 2
    %v2890 = vrot.slane %v2579, 7
    %v2891 = vrot.slane %v2890, 2
    %v2892 = vrot.slane %v2578, 7
    %v2893 = vrot.slane %v2892, 2
    %v2894 = vrot.slane %v2580, 7
    %v2895 = vrot.slane %v2894, 2
    %v2896 = vrot.slane %v2588, 7
    %v2897 = vrot.slane %v2896, 2
    %v2898 = vrot.slane %v2596, 7
    %v2899 = vrot.slane %v2898, 2
    %v2900 = vrot.slane %v2595, 7
    %v2901 = vrot.slane %v2900, 2
    %v2902 = vrot.slane %v2597, 7
    %v2903 = vrot.slane %v2902, 2
    %v2904 = vrot.slane %v2605, 7
    %v2905 = vrot.slane %v2904, 2
    %v2906 = vrot.slane %v2613, 7
    %v2907 = vrot.slane %v2906, 2
    %v2908 = vrot.slane %v2612, 7
    %v2909 = vrot.slane %v2908, 2
    %v2910 = vrot.slane %v2614, 7
    %v2911 = vrot.slane %v2910, 2
    %v2912 = vrot.slane %v2622, 7
    %v2913 = vrot.slane %v2912, 2
    %v2914 = vrot.slane %v2630, 7
    %v2915 = vrot.slane %v2914, 2
    %v2916 = vrot.slane %v2629, 7
    %v2917 = vrot.slane %v2916, 2
    %v2918 = vrot.slane %v2631, 7
    %v2919 = vrot.slane %v2918, 2
    %v3016 = vmax.f32 %v2231, %v2729
    %v3017 = vmax.f32 %v2239, %v2731
    %v3018 = vmax.f32 %v2238, %v2733
    %v3019 = vmax.f32 %v2240, %v2735
    %v3020 = vmax.f32 %v2248, %v2737
    %v3021 = vmax.f32 %v2256, %v2739
    %v3022 = vmax.f32 %v2255, %v2741
    %v3023 = vmax.f32 %v2257, %v2743
    %v3024 = vmax.f32 %v2265, %v2745
    %v3025 = vmax.f32 %v2273, %v2747
    %v3026 = vmax.f32 %v2272, %v2749
    %v3027 = vmax.f32 %v2274, %v2751
    %v3028 = vmax.f32 %v2282, %v2753
    %v3029 = vmax.f32 %v2290, %v2755
    %v3030 = vmax.f32 %v2289, %v2757
    %v3031 = vmax.f32 %v2291, %v2759
    %v3032 = vmax.f32 %v2299, %v2761
    %v3033 = vmax.f32 %v2307, %v2763
    %v3034 = vmax.f32 %v2306, %v2765
    %v3035 = vmax.f32 %v2308, %v2767
    %v3036 = vmax.f32 %v2316, %v2769
    %v3037 = vmax.f32 %v2324, %v2771
    %v3038 = vmax.f32 %v2323, %v2773
    %v3039 = vmax.f32 %v2325, %v2775
    %v3040 = vmax.f32 %v2333, %v2777
    %v3041 = vmax.f32 %v2341, %v2779
    %v3042 = vmax.f32 %v2340, %v2781
    %v3043 = vmax.f32 %v2342, %v2783
    %v3044 = vmax.f32 %v2350, %v2785
    %v3045 = vmax.f32 %v2358, %v2787
    %v3046 = vmax.f32 %v2357, %v2789
    %v3047 = vmax.f32 %v2359, %v2791
    %v3048 = vmax.f32 %v2367, %v2793
    %v3049 = vmax.f32 %v2375, %v2795
    %v3050 = vmax.f32 %v2374, %v2797
    %v3051 = vmax.f32 %v2376, %v2799
    %v3052 = vmax.f32 %v2384, %v2801
    %v3053 = vmax.f32 %v2392, %v2803
    %v3054 = vmax.f32 %v2391, %v2805
    %v3055 = vmax.f32 %v2393, %v2807
    %v3056 = vmax.f32 %v2401, %v2809
    %v3057 = vmax.f32 %v2409, %v2811
    %v3058 = vmax.f32 %v2408, %v2813
    %v3059 = vmax.f32 %v2410, %v2815
    %v3060 = vmax.f32 %v2418, %v2817
    %v3061 = vmax.f32 %v2426, %v2819
    %v3062 = vmax.f32 %v2425, %v2821
    %v3063 = vmax.f32 %v2427, %v2823
    %v3064 = vmax.f32 %v2435, %v2825
    %v3065 = vmax.f32 %v2443, %v2827
    %v3066 = vmax.f32 %v2442, %v2829
    %v3067 = vmax.f32 %v2444, %v2831
    %v3068 = vmax.f32 %v2452, %v2833
    %v3069 = vmax.f32 %v2460, %v2835
    %v3070 = vmax.f32 %v2459, %v2837
    %v3071 = vmax.f32 %v2461, %v2839
    %v3072 = vmax.f32 %v2469, %v2841
    %v3073 = vmax.f32 %v2477, %v2843
    %v3074 = vmax.f32 %v2476, %v2845
    %v3075 = vmax.f32 %v2478, %v2847
    %v3076 = vmax.f32 %v2486, %v2849
    %v3077 = vmax.f32 %v2494, %v2851
    %v3078 = vmax.f32 %v2493, %v2853
    %v3079 = vmax.f32 %v2495, %v2855
    %v3080 = vmax.f32 %v2503, %v2857
    %v3081 = vmax.f32 %v2511, %v2859
    %v3082 = vmax.f32 %v2510, %v2861
    %v3083 = vmax.f32 %v2512, %v2863
    %v3084 = vmax.f32 %v2520, %v2865
    %v3085 = vmax.f32 %v2528, %v2867
    %v3086 = vmax.f32 %v2527, %v2869
    %v3087 = vmax.f32 %v2529, %v2871
    %v3088 = vmax.f32 %v2537, %v2873
    %v3089 = vmax.f32 %v2545, %v2875
    %v3090 = vmax.f32 %v2544, %v2877
    %v3091 = vmax.f32 %v2546, %v2879
    %v3092 = vmax.f32 %v2554, %v2881
    %v3093 = vmax.f32 %v2562, %v2883
    %v3094 = vmax.f32 %v2561, %v2885
    %v3095 = vmax.f32 %v2563, %v2887
    %v3096 = vmax.f32 %v2571, %v2889
    %v3097 = vmax.f32 %v2579, %v2891
    %v3098 = vmax.f32 %v2578, %v2893
    %v3099 = vmax.f32 %v2580, %v2895
    %v3100 = vmax.f32 %v2588, %v2897
    %v3101 = vmax.f32 %v2596, %v2899
    %v3102 = vmax.f32 %v2595, %v2901
    %v3103 = vmax.f32 %v2597, %v2903
    %v3104 = vmax.f32 %v2605, %v2905
    %v3105 = vmax.f32 %v2613, %v2907
    %v3106 = vmax.f32 %v2612, %v2909
    %v3107 = vmax.f32 %v2614, %v2911
    %v3108 = vmax.f32 %v2622, %v2913
    %v3109 = vmax.f32 %v2630, %v2915
    %v3110 = vmax.f32 %v2629, %v2917
    %v3111 = vmax.f32 %v2631, %v2919
    %v3112 = vld [vmem:[%s3] sm:$0xff]
    %v3113 = vld [vmem:[%s3 + $0x8] sm:$0xff]
    %v3114 = vld [vmem:[%s3 + $0x10] sm:$0xff]
    %v3115 = vld [vmem:[%s3 + $0x18] sm:$0xff]
    %v3116 = vld [vmem:[%s3 + $0x20] sm:$0xff]
    %v3117 = vld [vmem:[%s3 + $0x28] sm:$0xff]
    %v3118 = vld [vmem:[%s3 + $0x30] sm:$0xff]
    %v3119 = vld [vmem:[%s3 + $0x38] sm:$0xff]
    %v3120 = vld [vmem:[%s3 + $0x40] sm:$0xff]
    %s3121 = scalar_lea.vmem %s3, 72
    %v3122 = vld [vmem:[%s3121] sm:$0xff]
    %v3123 = vld [vmem:[%s3121 + $0x8] sm:$0xff]
    %v3124 = vld [vmem:[%s3121 + $0x10] sm:$0xff]
    %v3125 = vld [vmem:[%s3121 + $0x18] sm:$0xff]
    %v3126 = vld [vmem:[%s3121 + $0x20] sm:$0xff]
    %v3127 = vld [vmem:[%s3121 + $0x28] sm:$0xff]
    %v3128 = vld [vmem:[%s3121 + $0x30] sm:$0xff]
    %v3129 = vld [vmem:[%s3121 + $0x38] sm:$0xff]
    %v3130 = vld [vmem:[%s3121 + $0x40] sm:$0xff]
    %v3195 = vlaneseq
    %v3196 = vshrl.u32 %v3195, 7
    %v3197 = vsub.s32 0, %v3196
    %v3198 = vrot.slane %v3017, %v3197
    %v3199 = vlaneseq
    %v3200 = vshrl.u32 %v3199, 7
    %v3201 = vsub.s32 0, %v3200
    %v3202 = vrot.slane %v3018, %v3201
    %v3203 = vlaneseq
    %v3204 = vshrl.u32 %v3203, 7
    %v3205 = vsub.s32 0, %v3204
    %v3206 = vrot.slane %v3019, %v3205
    %v3207 = vlaneseq
    %v3208 = vshrl.u32 %v3207, 7
    %v3209 = vsub.s32 0, %v3208
    %v3210 = vrot.slane %v3020, %v3209
    %v3211 = vlaneseq
    %v3212 = vshrl.u32 %v3211, 7
    %v3213 = vsub.s32 0, %v3212
    %v3214 = vrot.slane %v3021, %v3213
    %v3215 = vlaneseq
    %v3216 = vshrl.u32 %v3215, 7
    %v3217 = vsub.s32 0, %v3216
    %v3218 = vrot.slane %v3022, %v3217
    %v3219 = vlaneseq
    %v3220 = vshrl.u32 %v3219, 7
    %v3221 = vsub.s32 0, %v3220
    %v3222 = vrot.slane %v3023, %v3221
    %v3223 = vlaneseq
    %v3224 = vshrl.u32 %v3223, 7
    %v3225 = vsub.s32 0, %v3224
    %v3226 = vrot.slane %v3024, %v3225
    %v3227 = vlaneseq
    %v3228 = vshrl.u32 %v3227, 7
    %v3229 = vsub.s32 0, %v3228
    %v3230 = vrot.slane %v3029, %v3229
    %v3231 = vlaneseq
    %v3232 = vshrl.u32 %v3231, 7
    %v3233 = vsub.s32 0, %v3232
    %v3234 = vrot.slane %v3030, %v3233
    %v3235 = vlaneseq
    %v3236 = vshrl.u32 %v3235, 7
    %v3237 = vsub.s32 0, %v3236
    %v3238 = vrot.slane %v3031, %v3237
    %v3239 = vlaneseq
    %v3240 = vshrl.u32 %v3239, 7
    %v3241 = vsub.s32 0, %v3240
    %v3242 = vrot.slane %v3032, %v3241
    %v3243 = vlaneseq
    %v3244 = vshrl.u32 %v3243, 7
    %v3245 = vsub.s32 0, %v3244
    %v3246 = vrot.slane %v3033, %v3245
    %v3247 = vlaneseq
    %v3248 = vshrl.u32 %v3247, 7
    %v3249 = vsub.s32 0, %v3248
    %v3250 = vrot.slane %v3034, %v3249
    %v3251 = vlaneseq
    %v3252 = vshrl.u32 %v3251, 7
    %v3253 = vsub.s32 0, %v3252
    %v3254 = vrot.slane %v3035, %v3253
    %v3255 = vlaneseq
    %v3256 = vshrl.u32 %v3255, 7
    %v3257 = vsub.s32 0, %v3256
    %v3258 = vrot.slane %v3036, %v3257
    %v3259 = vlaneseq
    %v3260 = vshrl.u32 %v3259, 7
    %v3261 = vsub.s32 0, %v3260
    %v3262 = vrot.slane %v3041, %v3261
    %v3263 = vlaneseq
    %v3264 = vshrl.u32 %v3263, 7
    %v3265 = vsub.s32 0, %v3264
    %v3266 = vrot.slane %v3042, %v3265
    %v3267 = vlaneseq
    %v3268 = vshrl.u32 %v3267, 7
    %v3269 = vsub.s32 0, %v3268
    %v3270 = vrot.slane %v3043, %v3269
    %v3271 = vlaneseq
    %v3272 = vshrl.u32 %v3271, 7
    %v3273 = vsub.s32 0, %v3272
    %v3274 = vrot.slane %v3044, %v3273
    %v3275 = vlaneseq
    %v3276 = vshrl.u32 %v3275, 7
    %v3277 = vsub.s32 0, %v3276
    %v3278 = vrot.slane %v3045, %v3277
    %v3279 = vlaneseq
    %v3280 = vshrl.u32 %v3279, 7
    %v3281 = vsub.s32 0, %v3280
    %v3282 = vrot.slane %v3046, %v3281
    %v3283 = vlaneseq
    %v3284 = vshrl.u32 %v3283, 7
    %v3285 = vsub.s32 0, %v3284
    %v3286 = vrot.slane %v3047, %v3285
    %v3287 = vlaneseq
    %v3288 = vshrl.u32 %v3287, 7
    %v3289 = vsub.s32 0, %v3288
    %v3290 = vrot.slane %v3048, %v3289
    %v3291 = vlaneseq
    %v3292 = vshrl.u32 %v3291, 7
    %v3293 = vsub.s32 0, %v3292
    %v3294 = vrot.slane %v3053, %v3293
    %v3295 = vlaneseq
    %v3296 = vshrl.u32 %v3295, 7
    %v3297 = vsub.s32 0, %v3296
    %v3298 = vrot.slane %v3054, %v3297
    %v3299 = vlaneseq
    %v3300 = vshrl.u32 %v3299, 7
    %v3301 = vsub.s32 0, %v3300
    %v3302 = vrot.slane %v3055, %v3301
    %v3303 = vlaneseq
    %v3304 = vshrl.u32 %v3303, 7
    %v3305 = vsub.s32 0, %v3304
    %v3306 = vrot.slane %v3056, %v3305
    %v3307 = vlaneseq
    %v3308 = vshrl.u32 %v3307, 7
    %v3309 = vsub.s32 0, %v3308
    %v3310 = vrot.slane %v3057, %v3309
    %v3311 = vlaneseq
    %v3312 = vshrl.u32 %v3311, 7
    %v3313 = vsub.s32 0, %v3312
    %v3314 = vrot.slane %v3058, %v3313
    %v3315 = vlaneseq
    %v3316 = vshrl.u32 %v3315, 7
    %v3317 = vsub.s32 0, %v3316
    %v3318 = vrot.slane %v3059, %v3317
    %v3319 = vlaneseq
    %v3320 = vshrl.u32 %v3319, 7
    %v3321 = vsub.s32 0, %v3320
    %v3322 = vrot.slane %v3060, %v3321
    %v3323 = vlaneseq
    %v3324 = vshrl.u32 %v3323, 7
    %v3325 = vsub.s32 0, %v3324
    %v3326 = vrot.slane %v3065, %v3325
    %v3327 = vlaneseq
    %v3328 = vshrl.u32 %v3327, 7
    %v3329 = vsub.s32 0, %v3328
    %v3330 = vrot.slane %v3066, %v3329
    %v3331 = vlaneseq
    %v3332 = vshrl.u32 %v3331, 7
    %v3333 = vsub.s32 0, %v3332
    %v3334 = vrot.slane %v3067, %v3333
    %v3335 = vlaneseq
    %v3336 = vshrl.u32 %v3335, 7
    %v3337 = vsub.s32 0, %v3336
    %v3338 = vrot.slane %v3068, %v3337
    %v3339 = vlaneseq
    %v3340 = vshrl.u32 %v3339, 7
    %v3341 = vsub.s32 0, %v3340
    %v3342 = vrot.slane %v3069, %v3341
    %v3343 = vlaneseq
    %v3344 = vshrl.u32 %v3343, 7
    %v3345 = vsub.s32 0, %v3344
    %v3346 = vrot.slane %v3070, %v3345
    %v3347 = vlaneseq
    %v3348 = vshrl.u32 %v3347, 7
    %v3349 = vsub.s32 0, %v3348
    %v3350 = vrot.slane %v3071, %v3349
    %v3351 = vlaneseq
    %v3352 = vshrl.u32 %v3351, 7
    %v3353 = vsub.s32 0, %v3352
    %v3354 = vrot.slane %v3072, %v3353
    %v3355 = vlaneseq
    %v3356 = vshrl.u32 %v3355, 7
    %v3357 = vsub.s32 0, %v3356
    %v3358 = vrot.slane %v3077, %v3357
    %v3359 = vlaneseq
    %v3360 = vshrl.u32 %v3359, 7
    %v3361 = vsub.s32 0, %v3360
    %v3362 = vrot.slane %v3078, %v3361
    %v3363 = vlaneseq
    %v3364 = vshrl.u32 %v3363, 7
    %v3365 = vsub.s32 0, %v3364
    %v3366 = vrot.slane %v3079, %v3365
    %v3367 = vlaneseq
    %v3368 = vshrl.u32 %v3367, 7
    %v3369 = vsub.s32 0, %v3368
    %v3370 = vrot.slane %v3080, %v3369
    %v3371 = vlaneseq
    %v3372 = vshrl.u32 %v3371, 7
    %v3373 = vsub.s32 0, %v3372
    %v3374 = vrot.slane %v3081, %v3373
    %v3375 = vlaneseq
    %v3376 = vshrl.u32 %v3375, 7
    %v3377 = vsub.s32 0, %v3376
    %v3378 = vrot.slane %v3082, %v3377
    %v3379 = vlaneseq
    %v3380 = vshrl.u32 %v3379, 7
    %v3381 = vsub.s32 0, %v3380
    %v3382 = vrot.slane %v3083, %v3381
    %v3383 = vlaneseq
    %v3384 = vshrl.u32 %v3383, 7
    %v3385 = vsub.s32 0, %v3384
    %v3386 = vrot.slane %v3084, %v3385
    %v3387 = vlaneseq
    %v3388 = vshrl.u32 %v3387, 7
    %v3389 = vsub.s32 0, %v3388
    %v3390 = vrot.slane %v3089, %v3389
    %v3391 = vlaneseq
    %v3392 = vshrl.u32 %v3391, 7
    %v3393 = vsub.s32 0, %v3392
    %v3394 = vrot.slane %v3090, %v3393
    %v3395 = vlaneseq
    %v3396 = vshrl.u32 %v3395, 7
    %v3397 = vsub.s32 0, %v3396
    %v3398 = vrot.slane %v3091, %v3397
    %v3399 = vlaneseq
    %v3400 = vshrl.u32 %v3399, 7
    %v3401 = vsub.s32 0, %v3400
    %v3402 = vrot.slane %v3092, %v3401
    %v3403 = vlaneseq
    %v3404 = vshrl.u32 %v3403, 7
    %v3405 = vsub.s32 0, %v3404
    %v3406 = vrot.slane %v3093, %v3405
    %v3407 = vlaneseq
    %v3408 = vshrl.u32 %v3407, 7
    %v3409 = vsub.s32 0, %v3408
    %v3410 = vrot.slane %v3094, %v3409
    %v3411 = vlaneseq
    %v3412 = vshrl.u32 %v3411, 7
    %v3413 = vsub.s32 0, %v3412
    %v3414 = vrot.slane %v3095, %v3413
    %v3415 = vlaneseq
    %v3416 = vshrl.u32 %v3415, 7
    %v3417 = vsub.s32 0, %v3416
    %v3418 = vrot.slane %v3096, %v3417
    %v3419 = vlaneseq
    %v3420 = vshrl.u32 %v3419, 7
    %v3421 = vsub.s32 0, %v3420
    %v3422 = vrot.slane %v3101, %v3421
    %v3423 = vlaneseq
    %v3424 = vshrl.u32 %v3423, 7
    %v3425 = vsub.s32 0, %v3424
    %v3426 = vrot.slane %v3102, %v3425
    %v3427 = vlaneseq
    %v3428 = vshrl.u32 %v3427, 7
    %v3429 = vsub.s32 0, %v3428
    %v3430 = vrot.slane %v3103, %v3429
    %v3431 = vlaneseq
    %v3432 = vshrl.u32 %v3431, 7
    %v3433 = vsub.s32 0, %v3432
    %v3434 = vrot.slane %v3104, %v3433
    %v3435 = vlaneseq
    %v3436 = vshrl.u32 %v3435, 7
    %v3437 = vsub.s32 0, %v3436
    %v3438 = vrot.slane %v3105, %v3437
    %v3439 = vlaneseq
    %v3440 = vshrl.u32 %v3439, 7
    %v3441 = vsub.s32 0, %v3440
    %v3442 = vrot.slane %v3106, %v3441
    %v3443 = vlaneseq
    %v3444 = vshrl.u32 %v3443, 7
    %v3445 = vsub.s32 0, %v3444
    %v3446 = vrot.slane %v3107, %v3445
    %v3447 = vlaneseq
    %v3448 = vshrl.u32 %v3447, 7
    %v3449 = vsub.s32 0, %v3448
    %v3450 = vrot.slane %v3108, %v3449
    %vm3451 = vcmask 1041409
    %v3452 = vsel %vm3451, %v3202, %v3198
    %vm3453 = vcmask 1042434
    %v3454 = vsel %vm3453, %v3206, %v3452
    %vm3455 = vcmask 1043459
    %v3456 = vsel %vm3455, %v3210, %v3454
    %vm3457 = vcmask 1044484
    %v3458 = vsel %vm3457, %v3214, %v3456
    %vm3459 = vcmask 1045509
    %v3460 = vsel %vm3459, %v3218, %v3458
    %vm3461 = vcmask 1046534
    %v3462 = vsel %vm3461, %v3222, %v3460
    %vm3463 = vcmask 1047559
    %v3464 = vsel %vm3463, %v3226, %v3462
    %v3465 = vsel %vm3451, %v3234, %v3230
    %v3466 = vsel %vm3453, %v3238, %v3465
    %v3467 = vsel %vm3455, %v3242, %v3466
    %v3468 = vsel %vm3457, %v3246, %v3467
    %v3469 = vsel %vm3459, %v3250, %v3468
    %v3470 = vsel %vm3461, %v3254, %v3469
    %v3471 = vsel %vm3463, %v3258, %v3470
    %v3472 = vsel %vm3451, %v3266, %v3262
    %v3473 = vsel %vm3453, %v3270, %v3472
    %v3474 = vsel %vm3455, %v3274, %v3473
    %v3475 = vsel %vm3457, %v3278, %v3474
    %v3476 = vsel %vm3459, %v3282, %v3475
    %v3477 = vsel %vm3461, %v3286, %v3476
    %v3478 = vsel %vm3463, %v3290, %v3477
    %v3479 = vsel %vm3451, %v3298, %v3294
    %v3480 = vsel %vm3453, %v3302, %v3479
    %v3481 = vsel %vm3455, %v3306, %v3480
    %v3482 = vsel %vm3457, %v3310, %v3481
    %v3483 = vsel %vm3459, %v3314, %v3482
    %v3484 = vsel %vm3461, %v3318, %v3483
    %v3485 = vsel %vm3463, %v3322, %v3484
    %v3486 = vsel %vm3451, %v3330, %v3326
    %v3487 = vsel %vm3453, %v3334, %v3486
    %v3488 = vsel %vm3455, %v3338, %v3487
    %v3489 = vsel %vm3457, %v3342, %v3488
    %v3490 = vsel %vm3459, %v3346, %v3489
    %v3491 = vsel %vm3461, %v3350, %v3490
    %v3492 = vsel %vm3463, %v3354, %v3491
    %v3493 = vsel %vm3451, %v3362, %v3358
    %v3494 = vsel %vm3453, %v3366, %v3493
    %v3495 = vsel %vm3455, %v3370, %v3494
    %v3496 = vsel %vm3457, %v3374, %v3495
    %v3497 = vsel %vm3459, %v3378, %v3496
    %v3498 = vsel %vm3461, %v3382, %v3497
    %v3499 = vsel %vm3463, %v3386, %v3498
    %v3500 = vsel %vm3451, %v3394, %v3390
    %v3501 = vsel %vm3453, %v3398, %v3500
    %v3502 = vsel %vm3455, %v3402, %v3501
    %v3503 = vsel %vm3457, %v3406, %v3502
    %v3504 = vsel %vm3459, %v3410, %v3503
    %v3505 = vsel %vm3461, %v3414, %v3504
    %v3506 = vsel %vm3463, %v3418, %v3505
    %v3507 = vsel %vm3451, %v3426, %v3422
    %v3508 = vsel %vm3453, %v3430, %v3507
    %v3509 = vsel %vm3455, %v3434, %v3508
    %v3510 = vsel %vm3457, %v3438, %v3509
    %v3511 = vsel %vm3459, %v3442, %v3510
    %v3512 = vsel %vm3461, %v3446, %v3511
    %v3513 = vsel %vm3463, %v3450, %v3512
    %vm3514 = vcmask 588800
    %v3515 = vsel %vm3514, %v3464, 0
    %v3517 = vsel %vm3514, %v3471, 0
    %v3519 = vsel %vm3514, %v3478, 0
    %v3521 = vsel %vm3514, %v3485, 0
    %v3523 = vsel %vm3514, %v3492, 0
    %v3525 = vsel %vm3514, %v3499, 0
    %v3527 = vsel %vm3514, %v3506, 0
    %v3529 = vsel %vm3514, %v3513, 0
    %3531 = vmatprep.subr.mxu0 0.0
    %3532 = vmatpush1.msra.mxu0 0.0
    %3533 = vmatprep.subr.mxu0 0.0
    %3534 = vmatpush1.msra.mxu0 0.0
    %3535 = vmatprep.subr.mxu0 0.0
    %3536 = vmatpush1.msra.mxu0 0.0
    %3537 = vmatprep.subr.mxu0 0.0
    %3538 = vmatpush1.msra.mxu0 0.0
    %3539 = vmatprep.subr.mxu0 0.0
    %3540 = vmatpush1.msra.mxu0 0.0
    %3541 = vmatprep.subr.mxu0 0.0
    %3542 = vmatpush1.msra.mxu0 0.0
    %3543 = vmatprep.subr.mxu0 0.0
    %3544 = vmatpush1.msra.mxu0 0.0
    %3545 = vmatprep.subr.mxu0 0.0
    %3546 = vmatpush1.msra.mxu0 %v3130
    %3547 = vmatprep.subr.mxu0 0.0
    %3548 = vmatpush1.msra.mxu0 %v3129
    %3549 = vmatprep.subr.mxu0 0.0
    %3550 = vmatpush1.msra.mxu0 %v3128
    %3551 = vmatprep.subr.mxu0 0.0
    %3552 = vmatpush1.msra.mxu0 %v3127
    %3553 = vmatprep.subr.mxu0 0.0
    %3554 = vmatpush1.msra.mxu0 %v3126
    %3555 = vmatprep.subr.mxu0 0.0
    %3556 = vmatpush1.msra.mxu0 %v3125
    %3557 = vmatprep.subr.mxu0 0.0
    %3558 = vmatpush1.msra.mxu0 %v3124
    %3559 = vmatprep.subr.mxu0 0.0
    %3560 = vmatpush1.msra.mxu0 %v3123
    %3561 = vmatprep.subr.mxu0 0.0
    %3562 = vmatpush1.msra.mxu0 %v3122
    %3563 = vmatprep.subr.mxu0 0.0
    %3564 = vmatpush2.msra.mxu0 0.0
    %3565 = vmatprep.subr.mxu0 0.0
    %3566 = vmatpush2.msra.mxu0 0.0
    %3567 = vmatprep.subr.mxu0 0.0
    %3568 = vmatpush2.msra.mxu0 0.0
    %3569 = vmatprep.subr.mxu0 0.0
    %3570 = vmatpush2.msra.mxu0 0.0
    %3571 = vmatprep.subr.mxu0 0.0
    %3572 = vmatpush2.msra.mxu0 0.0
    %3573 = vmatprep.subr.mxu0 0.0
    %3574 = vmatpush2.msra.mxu0 0.0
    %3575 = vmatprep.subr.mxu0 0.0
    %3576 = vmatpush2.msra.mxu0 0.0
    %3577 = vmatprep.subr.mxu0 0.0
    %3578 = vmatpush2.msra.mxu0 0.0
    %3579 = vmatprep.subr.mxu0 0.0
    %3580 = vmatpush2.msra.mxu0 0.0
    %3581 = vmatprep.subr.mxu0 0.0
    %3582 = vmatpush2.msra.mxu0 0.0
    %3583 = vmatprep.subr.mxu0 0.0
    %3584 = vmatpush2.msra.mxu0 0.0
    %3585 = vmatprep.subr.mxu0 0.0
    %3586 = vmatpush2.msra.mxu0 0.0
    %3587 = vmatprep.subr.mxu0 0.0
    %3588 = vmatpush2.msra.mxu0 0.0
    %3589 = vmatprep.subr.mxu0 0.0
    %3590 = vmatpush2.msra.mxu0 0.0
    %3591 = vmatprep.subr.mxu0 0.0
    %3592 = vmatpush2.msra.mxu0 0.0
    %3593 = vmatprep.subr.mxu0 0.0
    %3594 = vmatpush2.msra.mxu0 0.0
    %3595 = vmatprep.mubr.f32.mxu0 0.0
    %3596 = vmatmul.mubr.f32.gmra.mxu0 %v3515
    %v3597 = vpop.f32.mrf.mxu0
    %v3598 = vadd.f32 0.0, %v3597
    %v3599 = vpop.f32.mrf.mxu0
    %3600 = vmatprep.mubr.f32.mxu0 0.0
    %3601 = vmatmul.mubr.f32.gmra.mxu0 %v3517
    %v3602 = vpop.f32.mrf.mxu0
    %v3603 = vadd.f32 0.0, %v3602
    %v3604 = vpop.f32.mrf.mxu0
    %3605 = vmatprep.mubr.f32.mxu0 0.0
    %3606 = vmatmul.mubr.f32.gmra.mxu0 %v3519
    %v3607 = vpop.f32.mrf.mxu0
    %v3608 = vadd.f32 0.0, %v3607
    %v3609 = vpop.f32.mrf.mxu0
    %3610 = vmatprep.mubr.f32.mxu0 0.0
    %3611 = vmatmul.mubr.f32.gmra.mxu0 %v3521
    %v3612 = vpop.f32.mrf.mxu0
    %v3613 = vadd.f32 0.0, %v3612
    %v3614 = vpop.f32.mrf.mxu0
    %3615 = vmatprep.mubr.f32.mxu0 0.0
    %3616 = vmatmul.mubr.f32.gmra.mxu0 %v3523
    %v3617 = vpop.f32.mrf.mxu0
    %v3618 = vadd.f32 0.0, %v3617
    %v3619 = vpop.f32.mrf.mxu0
    %3620 = vmatprep.mubr.f32.mxu0 0.0
    %3621 = vmatmul.mubr.f32.gmra.mxu0 %v3525
    %v3622 = vpop.f32.mrf.mxu0
    %v3623 = vadd.f32 0.0, %v3622
    %v3624 = vpop.f32.mrf.mxu0
    %3625 = vmatprep.mubr.f32.mxu0 0.0
    %3626 = vmatmul.mubr.f32.gmra.mxu0 %v3527
    %v3627 = vpop.f32.mrf.mxu0
    %v3628 = vadd.f32 0.0, %v3627
    %v3629 = vpop.f32.mrf.mxu0
    %3630 = vmatprep.mubr.f32.mxu0 0.0
    %3631 = vmatmul.mubr.f32.gmra.mxu0 %v3529
    %v3632 = vpop.f32.mrf.mxu0
    %v3633 = vadd.f32 0.0, %v3632
    %v3634 = vpop.f32.mrf.mxu0
    %3635 = vdwg.mxu0
    %v3644 = vlaneseq
    %v3645 = vshrl.u32 %v3644, 7
    %v3646 = vsub.s32 0, %v3645
    %v3647 = vrot.slane %v3016, %v3646
    %v3648 = vlaneseq
    %v3649 = vshrl.u32 %v3648, 7
    %v3650 = vsub.s32 0, %v3649
    %v3651 = vrot.slane %v3028, %v3650
    %v3652 = vlaneseq
    %v3653 = vshrl.u32 %v3652, 7
    %v3654 = vsub.s32 0, %v3653
    %v3655 = vrot.slane %v3040, %v3654
    %v3656 = vlaneseq
    %v3657 = vshrl.u32 %v3656, 7
    %v3658 = vsub.s32 0, %v3657
    %v3659 = vrot.slane %v3052, %v3658
    %v3660 = vlaneseq
    %v3661 = vshrl.u32 %v3660, 7
    %v3662 = vsub.s32 0, %v3661
    %v3663 = vrot.slane %v3064, %v3662
    %v3664 = vlaneseq
    %v3665 = vshrl.u32 %v3664, 7
    %v3666 = vsub.s32 0, %v3665
    %v3667 = vrot.slane %v3076, %v3666
    %v3668 = vlaneseq
    %v3669 = vshrl.u32 %v3668, 7
    %v3670 = vsub.s32 0, %v3669
    %v3671 = vrot.slane %v3088, %v3670
    %v3672 = vlaneseq
    %v3673 = vshrl.u32 %v3672, 7
    %v3674 = vsub.s32 0, %v3673
    %v3675 = vrot.slane %v3100, %v3674
    %v3676 = vsel %vm3451, %v3198, %v3647
    %v3677 = vsel %vm3453, %v3202, %v3676
    %v3678 = vsel %vm3455, %v3206, %v3677
    %v3679 = vsel %vm3457, %v3210, %v3678
    %v3680 = vsel %vm3459, %v3214, %v3679
    %v3681 = vsel %vm3461, %v3218, %v3680
    %v3682 = vsel %vm3463, %v3222, %v3681
    %v3683 = vsel %vm3451, %v3230, %v3651
    %v3684 = vsel %vm3453, %v3234, %v3683
    %v3685 = vsel %vm3455, %v3238, %v3684
    %v3686 = vsel %vm3457, %v3242, %v3685
    %v3687 = vsel %vm3459, %v3246, %v3686
    %v3688 = vsel %vm3461, %v3250, %v3687
    %v3689 = vsel %vm3463, %v3254, %v3688
    %v3690 = vsel %vm3451, %v3262, %v3655
    %v3691 = vsel %vm3453, %v3266, %v3690
    %v3692 = vsel %vm3455, %v3270, %v3691
    %v3693 = vsel %vm3457, %v3274, %v3692
    %v3694 = vsel %vm3459, %v3278, %v3693
    %v3695 = vsel %vm3461, %v3282, %v3694
    %v3696 = vsel %vm3463, %v3286, %v3695
    %v3697 = vsel %vm3451, %v3294, %v3659
    %v3698 = vsel %vm3453, %v3298, %v3697
    %v3699 = vsel %vm3455, %v3302, %v3698
    %v3700 = vsel %vm3457, %v3306, %v3699
    %v3701 = vsel %vm3459, %v3310, %v3700
    %v3702 = vsel %vm3461, %v3314, %v3701
    %v3703 = vsel %vm3463, %v3318, %v3702
    %v3704 = vsel %vm3451, %v3326, %v3663
    %v3705 = vsel %vm3453, %v3330, %v3704
    %v3706 = vsel %vm3455, %v3334, %v3705
    %v3707 = vsel %vm3457, %v3338, %v3706
    %v3708 = vsel %vm3459, %v3342, %v3707
    %v3709 = vsel %vm3461, %v3346, %v3708
    %v3710 = vsel %vm3463, %v3350, %v3709
    %v3711 = vsel %vm3451, %v3358, %v3667
    %v3712 = vsel %vm3453, %v3362, %v3711
    %v3713 = vsel %vm3455, %v3366, %v3712
    %v3714 = vsel %vm3457, %v3370, %v3713
    %v3715 = vsel %vm3459, %v3374, %v3714
    %v3716 = vsel %vm3461, %v3378, %v3715
    %v3717 = vsel %vm3463, %v3382, %v3716
    %v3718 = vsel %vm3451, %v3390, %v3671
    %v3719 = vsel %vm3453, %v3394, %v3718
    %v3720 = vsel %vm3455, %v3398, %v3719
    %v3721 = vsel %vm3457, %v3402, %v3720
    %v3722 = vsel %vm3459, %v3406, %v3721
    %v3723 = vsel %vm3461, %v3410, %v3722
    %v3724 = vsel %vm3463, %v3414, %v3723
    %v3725 = vsel %vm3451, %v3422, %v3675
    %v3726 = vsel %vm3453, %v3426, %v3725
    %v3727 = vsel %vm3455, %v3430, %v3726
    %v3728 = vsel %vm3457, %v3434, %v3727
    %v3729 = vsel %vm3459, %v3438, %v3728
    %v3730 = vsel %vm3461, %v3442, %v3729
    %v3731 = vsel %vm3463, %v3446, %v3730
    %v3732 = vsel %vm3514, %v3682, 0
    %v3734 = vsel %vm3514, %v3689, 0
    %v3736 = vsel %vm3514, %v3696, 0
    %v3738 = vsel %vm3514, %v3703, 0
    %v3740 = vsel %vm3514, %v3710, 0
    %v3742 = vsel %vm3514, %v3717, 0
    %v3744 = vsel %vm3514, %v3724, 0
    %v3746 = vsel %vm3514, %v3731, 0
    %3748 = vmatprep.subr.mxu0 0.0
    %3749 = vmatpush1.msra.mxu0 0.0
    %3750 = vmatprep.subr.mxu0 0.0
    %3751 = vmatpush1.msra.mxu0 0.0
    %3752 = vmatprep.subr.mxu0 0.0
    %3753 = vmatpush1.msra.mxu0 0.0
    %3754 = vmatprep.subr.mxu0 0.0
    %3755 = vmatpush1.msra.mxu0 0.0
    %3756 = vmatprep.subr.mxu0 0.0
    %3757 = vmatpush1.msra.mxu0 0.0
    %3758 = vmatprep.subr.mxu0 0.0
    %3759 = vmatpush1.msra.mxu0 0.0
    %3760 = vmatprep.subr.mxu0 0.0
    %3761 = vmatpush1.msra.mxu0 0.0
    %3762 = vmatprep.subr.mxu0 0.0
    %3763 = vmatpush1.msra.mxu0 %v3120
    %3764 = vmatprep.subr.mxu0 0.0
    %3765 = vmatpush1.msra.mxu0 %v3119
    %3766 = vmatprep.subr.mxu0 0.0
    %3767 = vmatpush1.msra.mxu0 %v3118
    %3768 = vmatprep.subr.mxu0 0.0
    %3769 = vmatpush1.msra.mxu0 %v3117
    %3770 = vmatprep.subr.mxu0 0.0
    %3771 = vmatpush1.msra.mxu0 %v3116
    %3772 = vmatprep.subr.mxu0 0.0
    %3773 = vmatpush1.msra.mxu0 %v3115
    %3774 = vmatprep.subr.mxu0 0.0
    %3775 = vmatpush1.msra.mxu0 %v3114
    %3776 = vmatprep.subr.mxu0 0.0
    %3777 = vmatpush1.msra.mxu0 %v3113
    %3778 = vmatprep.subr.mxu0 0.0
    %3779 = vmatpush1.msra.mxu0 %v3112
    %3780 = vmatprep.subr.mxu0 0.0
    %3781 = vmatpush2.msra.mxu0 0.0
    %3782 = vmatprep.subr.mxu0 0.0
    %3783 = vmatpush2.msra.mxu0 0.0
    %3784 = vmatprep.subr.mxu0 0.0
    %3785 = vmatpush2.msra.mxu0 0.0
    %3786 = vmatprep.subr.mxu0 0.0
    %3787 = vmatpush2.msra.mxu0 0.0
    %3788 = vmatprep.subr.mxu0 0.0
    %3789 = vmatpush2.msra.mxu0 0.0
    %3790 = vmatprep.subr.mxu0 0.0
    %3791 = vmatpush2.msra.mxu0 0.0
    %3792 = vmatprep.subr.mxu0 0.0
    %3793 = vmatpush2.msra.mxu0 0.0
    %3794 = vmatprep.subr.mxu0 0.0
    %3795 = vmatpush2.msra.mxu0 0.0
    %3796 = vmatprep.subr.mxu0 0.0
    %3797 = vmatpush2.msra.mxu0 0.0
    %3798 = vmatprep.subr.mxu0 0.0
    %3799 = vmatpush2.msra.mxu0 0.0
    %3800 = vmatprep.subr.mxu0 0.0
    %3801 = vmatpush2.msra.mxu0 0.0
    %3802 = vmatprep.subr.mxu0 0.0
    %3803 = vmatpush2.msra.mxu0 0.0
    %3804 = vmatprep.subr.mxu0 0.0
    %3805 = vmatpush2.msra.mxu0 0.0
    %3806 = vmatprep.subr.mxu0 0.0
    %3807 = vmatpush2.msra.mxu0 0.0
    %3808 = vmatprep.subr.mxu0 0.0
    %3809 = vmatpush2.msra.mxu0 0.0
    %3810 = vmatprep.subr.mxu0 0.0
    %3811 = vmatpush2.msra.mxu0 0.0
    %3812 = vmatprep.mubr.f32.mxu0 0.0
    %3813 = vmatmul.mubr.f32.gmra.mxu0 %v3732
    %v3814 = vpop.f32.mrf.mxu0
    %v3815 = vadd.f32 %v3598, %v3814
    %v3816 = vpop.f32.mrf.mxu0
    %3817 = vmatprep.mubr.f32.mxu0 0.0
    %3818 = vmatmul.mubr.f32.gmra.mxu0 %v3734
    %v3819 = vpop.f32.mrf.mxu0
    %v3820 = vadd.f32 %v3603, %v3819
    %v3821 = vpop.f32.mrf.mxu0
    %3822 = vmatprep.mubr.f32.mxu0 0.0
    %3823 = vmatmul.mubr.f32.gmra.mxu0 %v3736
    %v3824 = vpop.f32.mrf.mxu0
    %v3825 = vadd.f32 %v3608, %v3824
    %v3826 = vpop.f32.mrf.mxu0
    %3827 = vmatprep.mubr.f32.mxu0 0.0
    %3828 = vmatmul.mubr.f32.gmra.mxu0 %v3738
    %v3829 = vpop.f32.mrf.mxu0
    %v3830 = vadd.f32 %v3613, %v3829
    %v3831 = vpop.f32.mrf.mxu0
    %3832 = vmatprep.mubr.f32.mxu0 0.0
    %3833 = vmatmul.mubr.f32.gmra.mxu0 %v3740
    %v3834 = vpop.f32.mrf.mxu0
    %v3835 = vadd.f32 %v3618, %v3834
    %v3836 = vpop.f32.mrf.mxu0
    %3837 = vmatprep.mubr.f32.mxu0 0.0
    %3838 = vmatmul.mubr.f32.gmra.mxu0 %v3742
    %v3839 = vpop.f32.mrf.mxu0
    %v3840 = vadd.f32 %v3623, %v3839
    %v3841 = vpop.f32.mrf.mxu0
    %3842 = vmatprep.mubr.f32.mxu0 0.0
    %3843 = vmatmul.mubr.f32.gmra.mxu0 %v3744
    %v3844 = vpop.f32.mrf.mxu0
    %v3845 = vadd.f32 %v3628, %v3844
    %v3846 = vpop.f32.mrf.mxu0
    %3847 = vmatprep.mubr.f32.mxu0 0.0
    %3848 = vmatmul.mubr.f32.gmra.mxu0 %v3746
    %v3849 = vpop.f32.mrf.mxu0
    %v3850 = vadd.f32 %v3633, %v3849
    %v3851 = vpop.f32.mrf.mxu0
    %3852 = vdwg.mxu0
    %s3853 = scalar_lea.vmem %s3, 144
    %v3854 = vld [vmem:[%s3853] sm:$0xff]
    %v3855 = vld [vmem:[%s3853 + $0x8] sm:$0xff]
    %v3856 = vld [vmem:[%s3853 + $0x10] sm:$0xff]
    %v3857 = vld [vmem:[%s3853 + $0x18] sm:$0xff]
    %v3858 = vld [vmem:[%s3853 + $0x20] sm:$0xff]
    %v3859 = vld [vmem:[%s3853 + $0x28] sm:$0xff]
    %v3860 = vld [vmem:[%s3853 + $0x30] sm:$0xff]
    %v3861 = vld [vmem:[%s3853 + $0x38] sm:$0xff]
    %v3862 = vld [vmem:[%s3853 + $0x40] sm:$0xff]
    %v3871 = vlaneseq
    %v3872 = vshrl.u32 %v3871, 7
    %v3873 = vsub.s32 0, %v3872
    %v3874 = vrot.slane %v3025, %v3873
    %v3875 = vlaneseq
    %v3876 = vshrl.u32 %v3875, 7
    %v3877 = vsub.s32 0, %v3876
    %v3878 = vrot.slane %v3037, %v3877
    %v3879 = vlaneseq
    %v3880 = vshrl.u32 %v3879, 7
    %v3881 = vsub.s32 0, %v3880
    %v3882 = vrot.slane %v3049, %v3881
    %v3883 = vlaneseq
    %v3884 = vshrl.u32 %v3883, 7
    %v3885 = vsub.s32 0, %v3884
    %v3886 = vrot.slane %v3061, %v3885
    %v3887 = vlaneseq
    %v3888 = vshrl.u32 %v3887, 7
    %v3889 = vsub.s32 0, %v3888
    %v3890 = vrot.slane %v3073, %v3889
    %v3891 = vlaneseq
    %v3892 = vshrl.u32 %v3891, 7
    %v3893 = vsub.s32 0, %v3892
    %v3894 = vrot.slane %v3085, %v3893
    %v3895 = vlaneseq
    %v3896 = vshrl.u32 %v3895, 7
    %v3897 = vsub.s32 0, %v3896
    %v3898 = vrot.slane %v3097, %v3897
    %v3899 = vlaneseq
    %v3900 = vshrl.u32 %v3899, 7
    %v3901 = vsub.s32 0, %v3900
    %v3902 = vrot.slane %v3109, %v3901
    %v3903 = vsel %vm3451, %v3206, %v3202
    %v3904 = vsel %vm3453, %v3210, %v3903
    %v3905 = vsel %vm3455, %v3214, %v3904
    %v3906 = vsel %vm3457, %v3218, %v3905
    %v3907 = vsel %vm3459, %v3222, %v3906
    %v3908 = vsel %vm3461, %v3226, %v3907
    %v3909 = vsel %vm3463, %v3874, %v3908
    %v3910 = vsel %vm3451, %v3238, %v3234
    %v3911 = vsel %vm3453, %v3242, %v3910
    %v3912 = vsel %vm3455, %v3246, %v3911
    %v3913 = vsel %vm3457, %v3250, %v3912
    %v3914 = vsel %vm3459, %v3254, %v3913
    %v3915 = vsel %vm3461, %v3258, %v3914
    %v3916 = vsel %vm3463, %v3878, %v3915
    %v3917 = vsel %vm3451, %v3270, %v3266
    %v3918 = vsel %vm3453, %v3274, %v3917
    %v3919 = vsel %vm3455, %v3278, %v3918
    %v3920 = vsel %vm3457, %v3282, %v3919
    %v3921 = vsel %vm3459, %v3286, %v3920
    %v3922 = vsel %vm3461, %v3290, %v3921
    %v3923 = vsel %vm3463, %v3882, %v3922
    %v3924 = vsel %vm3451, %v3302, %v3298
    %v3925 = vsel %vm3453, %v3306, %v3924
    %v3926 = vsel %vm3455, %v3310, %v3925
    %v3927 = vsel %vm3457, %v3314, %v3926
    %v3928 = vsel %vm3459, %v3318, %v3927
    %v3929 = vsel %vm3461, %v3322, %v3928
    %v3930 = vsel %vm3463, %v3886, %v3929
    %v3931 = vsel %vm3451, %v3334, %v3330
    %v3932 = vsel %vm3453, %v3338, %v3931
    %v3933 = vsel %vm3455, %v3342, %v3932
    %v3934 = vsel %vm3457, %v3346, %v3933
    %v3935 = vsel %vm3459, %v3350, %v3934
    %v3936 = vsel %vm3461, %v3354, %v3935
    %v3937 = vsel %vm3463, %v3890, %v3936
    %v3938 = vsel %vm3451, %v3366, %v3362
    %v3939 = vsel %vm3453, %v3370, %v3938
    %v3940 = vsel %vm3455, %v3374, %v3939
    %v3941 = vsel %vm3457, %v3378, %v3940
    %v3942 = vsel %vm3459, %v3382, %v3941
    %v3943 = vsel %vm3461, %v3386, %v3942
    %v3944 = vsel %vm3463, %v3894, %v3943
    %v3945 = vsel %vm3451, %v3398, %v3394
    %v3946 = vsel %vm3453, %v3402, %v3945
    %v3947 = vsel %vm3455, %v3406, %v3946
    %v3948 = vsel %vm3457, %v3410, %v3947
    %v3949 = vsel %vm3459, %v3414, %v3948
    %v3950 = vsel %vm3461, %v3418, %v3949
    %v3951 = vsel %vm3463, %v3898, %v3950
    %v3952 = vsel %vm3451, %v3430, %v3426
    %v3953 = vsel %vm3453, %v3434, %v3952
    %v3954 = vsel %vm3455, %v3438, %v3953
    %v3955 = vsel %vm3457, %v3442, %v3954
    %v3956 = vsel %vm3459, %v3446, %v3955
    %v3957 = vsel %vm3461, %v3450, %v3956
    %v3958 = vsel %vm3463, %v3902, %v3957
    %v3959 = vsel %vm3514, %v3909, 0
    %v3961 = vsel %vm3514, %v3916, 0
    %v3963 = vsel %vm3514, %v3923, 0
    %v3965 = vsel %vm3514, %v3930, 0
    %v3967 = vsel %vm3514, %v3937, 0
    %v3969 = vsel %vm3514, %v3944, 0
    %v3971 = vsel %vm3514, %v3951, 0
    %v3973 = vsel %vm3514, %v3958, 0
    %3975 = vmatprep.subr.mxu0 0.0
    %3976 = vmatpush1.msra.mxu0 0.0
    %3977 = vmatprep.subr.mxu0 0.0
    %3978 = vmatpush1.msra.mxu0 0.0
    %3979 = vmatprep.subr.mxu0 0.0
    %3980 = vmatpush1.msra.mxu0 0.0
    %3981 = vmatprep.subr.mxu0 0.0
    %3982 = vmatpush1.msra.mxu0 0.0
    %3983 = vmatprep.subr.mxu0 0.0
    %3984 = vmatpush1.msra.mxu0 0.0
    %3985 = vmatprep.subr.mxu0 0.0
    %3986 = vmatpush1.msra.mxu0 0.0
    %3987 = vmatprep.subr.mxu0 0.0
    %3988 = vmatpush1.msra.mxu0 0.0
    %3989 = vmatprep.subr.mxu0 0.0
    %3990 = vmatpush1.msra.mxu0 %v3862
    %3991 = vmatprep.subr.mxu0 0.0
    %3992 = vmatpush1.msra.mxu0 %v3861
    %3993 = vmatprep.subr.mxu0 0.0
    %3994 = vmatpush1.msra.mxu0 %v3860
    %3995 = vmatprep.subr.mxu0 0.0
    %3996 = vmatpush1.msra.mxu0 %v3859
    %3997 = vmatprep.subr.mxu0 0.0
    %3998 = vmatpush1.msra.mxu0 %v3858
    %3999 = vmatprep.subr.mxu0 0.0
    %4000 = vmatpush1.msra.mxu0 %v3857
    %4001 = vmatprep.subr.mxu0 0.0
    %4002 = vmatpush1.msra.mxu0 %v3856
    %4003 = vmatprep.subr.mxu0 0.0
    %4004 = vmatpush1.msra.mxu0 %v3855
    %4005 = vmatprep.subr.mxu0 0.0
    %4006 = vmatpush1.msra.mxu0 %v3854
    %4007 = vmatprep.subr.mxu0 0.0
    %4008 = vmatpush2.msra.mxu0 0.0
    %4009 = vmatprep.subr.mxu0 0.0
    %4010 = vmatpush2.msra.mxu0 0.0
    %4011 = vmatprep.subr.mxu0 0.0
    %4012 = vmatpush2.msra.mxu0 0.0
    %4013 = vmatprep.subr.mxu0 0.0
    %4014 = vmatpush2.msra.mxu0 0.0
    %4015 = vmatprep.subr.mxu0 0.0
    %4016 = vmatpush2.msra.mxu0 0.0
    %4017 = vmatprep.subr.mxu0 0.0
    %4018 = vmatpush2.msra.mxu0 0.0
    %4019 = vmatprep.subr.mxu0 0.0
    %4020 = vmatpush2.msra.mxu0 0.0
    %4021 = vmatprep.subr.mxu0 0.0
    %4022 = vmatpush2.msra.mxu0 0.0
    %4023 = vmatprep.subr.mxu0 0.0
    %4024 = vmatpush2.msra.mxu0 0.0
    %4025 = vmatprep.subr.mxu0 0.0
    %4026 = vmatpush2.msra.mxu0 0.0
    %4027 = vmatprep.subr.mxu0 0.0
    %4028 = vmatpush2.msra.mxu0 0.0
    %4029 = vmatprep.subr.mxu0 0.0
    %4030 = vmatpush2.msra.mxu0 0.0
    %4031 = vmatprep.subr.mxu0 0.0
    %4032 = vmatpush2.msra.mxu0 0.0
    %4033 = vmatprep.subr.mxu0 0.0
    %4034 = vmatpush2.msra.mxu0 0.0
    %4035 = vmatprep.subr.mxu0 0.0
    %4036 = vmatpush2.msra.mxu0 0.0
    %4037 = vmatprep.subr.mxu0 0.0
    %4038 = vmatpush2.msra.mxu0 0.0
    %4039 = vmatprep.mubr.f32.mxu0 0.0
    %4040 = vmatmul.mubr.f32.gmra.mxu0 %v3959
    %v4041 = vpop.f32.mrf.mxu0
    %v4042 = vadd.f32 0.0, %v4041
    %v4043 = vpop.f32.mrf.mxu0
    %4044 = vmatprep.mubr.f32.mxu0 0.0
    %4045 = vmatmul.mubr.f32.gmra.mxu0 %v3961
    %v4046 = vpop.f32.mrf.mxu0
    %v4047 = vadd.f32 0.0, %v4046
    %v4048 = vpop.f32.mrf.mxu0
    %4049 = vmatprep.mubr.f32.mxu0 0.0
    %4050 = vmatmul.mubr.f32.gmra.mxu0 %v3963
    %v4051 = vpop.f32.mrf.mxu0
    %v4052 = vadd.f32 0.0, %v4051
    %v4053 = vpop.f32.mrf.mxu0
    %4054 = vmatprep.mubr.f32.mxu0 0.0
    %4055 = vmatmul.mubr.f32.gmra.mxu0 %v3965
    %v4056 = vpop.f32.mrf.mxu0
    %v4057 = vadd.f32 0.0, %v4056
    %v4058 = vpop.f32.mrf.mxu0
    %4059 = vmatprep.mubr.f32.mxu0 0.0
    %4060 = vmatmul.mubr.f32.gmra.mxu0 %v3967
    %v4061 = vpop.f32.mrf.mxu0
    %v4062 = vadd.f32 0.0, %v4061
    %v4063 = vpop.f32.mrf.mxu0
    %4064 = vmatprep.mubr.f32.mxu0 0.0
    %4065 = vmatmul.mubr.f32.gmra.mxu0 %v3969
    %v4066 = vpop.f32.mrf.mxu0
    %v4067 = vadd.f32 0.0, %v4066
    %v4068 = vpop.f32.mrf.mxu0
    %4069 = vmatprep.mubr.f32.mxu0 0.0
    %4070 = vmatmul.mubr.f32.gmra.mxu0 %v3971
    %v4071 = vpop.f32.mrf.mxu0
    %v4072 = vadd.f32 0.0, %v4071
    %v4073 = vpop.f32.mrf.mxu0
    %4074 = vmatprep.mubr.f32.mxu0 0.0
    %4075 = vmatmul.mubr.f32.gmra.mxu0 %v3973
    %v4076 = vpop.f32.mrf.mxu0
    %v4077 = vadd.f32 0.0, %v4076
    %v4078 = vpop.f32.mrf.mxu0
    %4079 = vdwg.mxu0
    %v4080 = vadd.f32 %v3815, %v4042
    %v4081 = vadd.f32 %v3820, %v4047
    %v4082 = vadd.f32 %v3825, %v4052
    %v4083 = vadd.f32 %v3830, %v4057
    %v4084 = vadd.f32 %v3835, %v4062
    %v4085 = vadd.f32 %v3840, %v4067
    %v4086 = vadd.f32 %v3845, %v4072
    %v4087 = vadd.f32 %v3850, %v4077
    %s4088 = scalar_lea.vmem %s3, 216
    %v4089 = vld [vmem:[%s4088] sm:$0xff]
    %v4090 = vld [vmem:[%s4088 + $0x8] sm:$0xff]
    %v4091 = vld [vmem:[%s4088 + $0x10] sm:$0xff]
    %v4092 = vld [vmem:[%s4088 + $0x18] sm:$0xff]
    %v4093 = vld [vmem:[%s4088 + $0x20] sm:$0xff]
    %v4094 = vld [vmem:[%s4088 + $0x28] sm:$0xff]
    %v4095 = vld [vmem:[%s4088 + $0x30] sm:$0xff]
    %v4096 = vld [vmem:[%s4088 + $0x38] sm:$0xff]
    %v4097 = vld [vmem:[%s4088 + $0x40] sm:$0xff]
    %v4106 = vlaneseq
    %v4107 = vshrl.u32 %v4106, 7
    %v4108 = vsub.s32 0, %v4107
    %v4109 = vrot.slane %v3026, %v4108
    %v4110 = vlaneseq
    %v4111 = vshrl.u32 %v4110, 7
    %v4112 = vsub.s32 0, %v4111
    %v4113 = vrot.slane %v3038, %v4112
    %v4114 = vlaneseq
    %v4115 = vshrl.u32 %v4114, 7
    %v4116 = vsub.s32 0, %v4115
    %v4117 = vrot.slane %v3050, %v4116
    %v4118 = vlaneseq
    %v4119 = vshrl.u32 %v4118, 7
    %v4120 = vsub.s32 0, %v4119
    %v4121 = vrot.slane %v3062, %v4120
    %v4122 = vlaneseq
    %v4123 = vshrl.u32 %v4122, 7
    %v4124 = vsub.s32 0, %v4123
    %v4125 = vrot.slane %v3074, %v4124
    %v4126 = vlaneseq
    %v4127 = vshrl.u32 %v4126, 7
    %v4128 = vsub.s32 0, %v4127
    %v4129 = vrot.slane %v3086, %v4128
    %v4130 = vlaneseq
    %v4131 = vshrl.u32 %v4130, 7
    %v4132 = vsub.s32 0, %v4131
    %v4133 = vrot.slane %v3098, %v4132
    %v4134 = vlaneseq
    %v4135 = vshrl.u32 %v4134, 7
    %v4136 = vsub.s32 0, %v4135
    %v4137 = vrot.slane %v3110, %v4136
    %v4138 = vsel %vm3451, %v3210, %v3206
    %v4139 = vsel %vm3453, %v3214, %v4138
    %v4140 = vsel %vm3455, %v3218, %v4139
    %v4141 = vsel %vm3457, %v3222, %v4140
    %v4142 = vsel %vm3459, %v3226, %v4141
    %v4143 = vsel %vm3461, %v3874, %v4142
    %v4144 = vsel %vm3463, %v4109, %v4143
    %v4145 = vsel %vm3451, %v3242, %v3238
    %v4146 = vsel %vm3453, %v3246, %v4145
    %v4147 = vsel %vm3455, %v3250, %v4146
    %v4148 = vsel %vm3457, %v3254, %v4147
    %v4149 = vsel %vm3459, %v3258, %v4148
    %v4150 = vsel %vm3461, %v3878, %v4149
    %v4151 = vsel %vm3463, %v4113, %v4150
    %v4152 = vsel %vm3451, %v3274, %v3270
    %v4153 = vsel %vm3453, %v3278, %v4152
    %v4154 = vsel %vm3455, %v3282, %v4153
    %v4155 = vsel %vm3457, %v3286, %v4154
    %v4156 = vsel %vm3459, %v3290, %v4155
    %v4157 = vsel %vm3461, %v3882, %v4156
    %v4158 = vsel %vm3463, %v4117, %v4157
    %v4159 = vsel %vm3451, %v3306, %v3302
    %v4160 = vsel %vm3453, %v3310, %v4159
    %v4161 = vsel %vm3455, %v3314, %v4160
    %v4162 = vsel %vm3457, %v3318, %v4161
    %v4163 = vsel %vm3459, %v3322, %v4162
    %v4164 = vsel %vm3461, %v3886, %v4163
    %v4165 = vsel %vm3463, %v4121, %v4164
    %v4166 = vsel %vm3451, %v3338, %v3334
    %v4167 = vsel %vm3453, %v3342, %v4166
    %v4168 = vsel %vm3455, %v3346, %v4167
    %v4169 = vsel %vm3457, %v3350, %v4168
    %v4170 = vsel %vm3459, %v3354, %v4169
    %v4171 = vsel %vm3461, %v3890, %v4170
    %v4172 = vsel %vm3463, %v4125, %v4171
    %v4173 = vsel %vm3451, %v3370, %v3366
    %v4174 = vsel %vm3453, %v3374, %v4173
    %v4175 = vsel %vm3455, %v3378, %v4174
    %v4176 = vsel %vm3457, %v3382, %v4175
    %v4177 = vsel %vm3459, %v3386, %v4176
    %v4178 = vsel %vm3461, %v3894, %v4177
    %v4179 = vsel %vm3463, %v4129, %v4178
    %v4180 = vsel %vm3451, %v3402, %v3398
    %v4181 = vsel %vm3453, %v3406, %v4180
    %v4182 = vsel %vm3455, %v3410, %v4181
    %v4183 = vsel %vm3457, %v3414, %v4182
    %v4184 = vsel %vm3459, %v3418, %v4183
    %v4185 = vsel %vm3461, %v3898, %v4184
    %v4186 = vsel %vm3463, %v4133, %v4185
    %v4187 = vsel %vm3451, %v3434, %v3430
    %v4188 = vsel %vm3453, %v3438, %v4187
    %v4189 = vsel %vm3455, %v3442, %v4188
    %v4190 = vsel %vm3457, %v3446, %v4189
    %v4191 = vsel %vm3459, %v3450, %v4190
    %v4192 = vsel %vm3461, %v3902, %v4191
    %v4193 = vsel %vm3463, %v4137, %v4192
    %v4194 = vsel %vm3514, %v4144, 0
    %v4196 = vsel %vm3514, %v4151, 0
    %v4198 = vsel %vm3514, %v4158, 0
    %v4200 = vsel %vm3514, %v4165, 0
    %v4202 = vsel %vm3514, %v4172, 0
    %v4204 = vsel %vm3514, %v4179, 0
    %v4206 = vsel %vm3514, %v4186, 0
    %v4208 = vsel %vm3514, %v4193, 0
    %4210 = vmatprep.subr.mxu0 0.0
    %4211 = vmatpush1.msra.mxu0 0.0
    %4212 = vmatprep.subr.mxu0 0.0
    %4213 = vmatpush1.msra.mxu0 0.0
    %4214 = vmatprep.subr.mxu0 0.0
    %4215 = vmatpush1.msra.mxu0 0.0
    %4216 = vmatprep.subr.mxu0 0.0
    %4217 = vmatpush1.msra.mxu0 0.0
    %4218 = vmatprep.subr.mxu0 0.0
    %4219 = vmatpush1.msra.mxu0 0.0
    %4220 = vmatprep.subr.mxu0 0.0
    %4221 = vmatpush1.msra.mxu0 0.0
    %4222 = vmatprep.subr.mxu0 0.0
    %4223 = vmatpush1.msra.mxu0 0.0
    %4224 = vmatprep.subr.mxu0 0.0
    %4225 = vmatpush1.msra.mxu0 %v4097
    %4226 = vmatprep.subr.mxu0 0.0
    %4227 = vmatpush1.msra.mxu0 %v4096
    %4228 = vmatprep.subr.mxu0 0.0
    %4229 = vmatpush1.msra.mxu0 %v4095
    %4230 = vmatprep.subr.mxu0 0.0
    %4231 = vmatpush1.msra.mxu0 %v4094
    %4232 = vmatprep.subr.mxu0 0.0
    %4233 = vmatpush1.msra.mxu0 %v4093
    %4234 = vmatprep.subr.mxu0 0.0
    %4235 = vmatpush1.msra.mxu0 %v4092
    %4236 = vmatprep.subr.mxu0 0.0
    %4237 = vmatpush1.msra.mxu0 %v4091
    %4238 = vmatprep.subr.mxu0 0.0
    %4239 = vmatpush1.msra.mxu0 %v4090
    %4240 = vmatprep.subr.mxu0 0.0
    %4241 = vmatpush1.msra.mxu0 %v4089
    %4242 = vmatprep.subr.mxu0 0.0
    %4243 = vmatpush2.msra.mxu0 0.0
    %4244 = vmatprep.subr.mxu0 0.0
    %4245 = vmatpush2.msra.mxu0 0.0
    %4246 = vmatprep.subr.mxu0 0.0
    %4247 = vmatpush2.msra.mxu0 0.0
    %4248 = vmatprep.subr.mxu0 0.0
    %4249 = vmatpush2.msra.mxu0 0.0
    %4250 = vmatprep.subr.mxu0 0.0
    %4251 = vmatpush2.msra.mxu0 0.0
    %4252 = vmatprep.subr.mxu0 0.0
    %4253 = vmatpush2.msra.mxu0 0.0
    %4254 = vmatprep.subr.mxu0 0.0
    %4255 = vmatpush2.msra.mxu0 0.0
    %4256 = vmatprep.subr.mxu0 0.0
    %4257 = vmatpush2.msra.mxu0 0.0
    %4258 = vmatprep.subr.mxu0 0.0
    %4259 = vmatpush2.msra.mxu0 0.0
    %4260 = vmatprep.subr.mxu0 0.0
    %4261 = vmatpush2.msra.mxu0 0.0
    %4262 = vmatprep.subr.mxu0 0.0
    %4263 = vmatpush2.msra.mxu0 0.0
    %4264 = vmatprep.subr.mxu0 0.0
    %4265 = vmatpush2.msra.mxu0 0.0
    %4266 = vmatprep.subr.mxu0 0.0
    %4267 = vmatpush2.msra.mxu0 0.0
    %4268 = vmatprep.subr.mxu0 0.0
    %4269 = vmatpush2.msra.mxu0 0.0
    %4270 = vmatprep.subr.mxu0 0.0
    %4271 = vmatpush2.msra.mxu0 0.0
    %4272 = vmatprep.subr.mxu0 0.0
    %4273 = vmatpush2.msra.mxu0 0.0
    %4274 = vmatprep.mubr.f32.mxu0 0.0
    %4275 = vmatmul.mubr.f32.gmra.mxu0 %v4194
    %v4276 = vpop.f32.mrf.mxu0
    %v4277 = vadd.f32 0.0, %v4276
    %v4278 = vpop.f32.mrf.mxu0
    %4279 = vmatprep.mubr.f32.mxu0 0.0
    %4280 = vmatmul.mubr.f32.gmra.mxu0 %v4196
    %v4281 = vpop.f32.mrf.mxu0
    %v4282 = vadd.f32 0.0, %v4281
    %v4283 = vpop.f32.mrf.mxu0
    %4284 = vmatprep.mubr.f32.mxu0 0.0
    %4285 = vmatmul.mubr.f32.gmra.mxu0 %v4198
    %v4286 = vpop.f32.mrf.mxu0
    %v4287 = vadd.f32 0.0, %v4286
    %v4288 = vpop.f32.mrf.mxu0
    %4289 = vmatprep.mubr.f32.mxu0 0.0
    %4290 = vmatmul.mubr.f32.gmra.mxu0 %v4200
    %v4291 = vpop.f32.mrf.mxu0
    %v4292 = vadd.f32 0.0, %v4291
    %v4293 = vpop.f32.mrf.mxu0
    %4294 = vmatprep.mubr.f32.mxu0 0.0
    %4295 = vmatmul.mubr.f32.gmra.mxu0 %v4202
    %v4296 = vpop.f32.mrf.mxu0
    %v4297 = vadd.f32 0.0, %v4296
    %v4298 = vpop.f32.mrf.mxu0
    %4299 = vmatprep.mubr.f32.mxu0 0.0
    %4300 = vmatmul.mubr.f32.gmra.mxu0 %v4204
    %v4301 = vpop.f32.mrf.mxu0
    %v4302 = vadd.f32 0.0, %v4301
    %v4303 = vpop.f32.mrf.mxu0
    %4304 = vmatprep.mubr.f32.mxu0 0.0
    %4305 = vmatmul.mubr.f32.gmra.mxu0 %v4206
    %v4306 = vpop.f32.mrf.mxu0
    %v4307 = vadd.f32 0.0, %v4306
    %v4308 = vpop.f32.mrf.mxu0
    %4309 = vmatprep.mubr.f32.mxu0 0.0
    %4310 = vmatmul.mubr.f32.gmra.mxu0 %v4208
    %v4311 = vpop.f32.mrf.mxu0
    %v4312 = vadd.f32 0.0, %v4311
    %v4313 = vpop.f32.mrf.mxu0
    %4314 = vdwg.mxu0
    %v4315 = vadd.f32 %v4080, %v4277
    %v4316 = vadd.f32 %v4081, %v4282
    %v4317 = vadd.f32 %v4082, %v4287
    %v4318 = vadd.f32 %v4083, %v4292
    %v4319 = vadd.f32 %v4084, %v4297
    %v4320 = vadd.f32 %v4085, %v4302
    %v4321 = vadd.f32 %v4086, %v4307
    %v4322 = vadd.f32 %v4087, %v4312
    %s4323 = scalar_lea.vmem %s3, 288
    %v4324 = vld [vmem:[%s4323] sm:$0xff]
    %v4325 = vld [vmem:[%s4323 + $0x8] sm:$0xff]
    %v4326 = vld [vmem:[%s4323 + $0x10] sm:$0xff]
    %v4327 = vld [vmem:[%s4323 + $0x18] sm:$0xff]
    %v4328 = vld [vmem:[%s4323 + $0x20] sm:$0xff]
    %v4329 = vld [vmem:[%s4323 + $0x28] sm:$0xff]
    %v4330 = vld [vmem:[%s4323 + $0x30] sm:$0xff]
    %v4331 = vld [vmem:[%s4323 + $0x38] sm:$0xff]
    %v4332 = vld [vmem:[%s4323 + $0x40] sm:$0xff]
    %v4341 = vlaneseq
    %v4342 = vshrl.u32 %v4341, 7
    %v4343 = vsub.s32 0, %v4342
    %v4344 = vrot.slane %v3027, %v4343
    %v4345 = vlaneseq
    %v4346 = vshrl.u32 %v4345, 7
    %v4347 = vsub.s32 0, %v4346
    %v4348 = vrot.slane %v3039, %v4347
    %v4349 = vlaneseq
    %v4350 = vshrl.u32 %v4349, 7
    %v4351 = vsub.s32 0, %v4350
    %v4352 = vrot.slane %v3051, %v4351
    %v4353 = vlaneseq
    %v4354 = vshrl.u32 %v4353, 7
    %v4355 = vsub.s32 0, %v4354
    %v4356 = vrot.slane %v3063, %v4355
    %v4357 = vlaneseq
    %v4358 = vshrl.u32 %v4357, 7
    %v4359 = vsub.s32 0, %v4358
    %v4360 = vrot.slane %v3075, %v4359
    %v4361 = vlaneseq
    %v4362 = vshrl.u32 %v4361, 7
    %v4363 = vsub.s32 0, %v4362
    %v4364 = vrot.slane %v3087, %v4363
    %v4365 = vlaneseq
    %v4366 = vshrl.u32 %v4365, 7
    %v4367 = vsub.s32 0, %v4366
    %v4368 = vrot.slane %v3099, %v4367
    %v4369 = vlaneseq
    %v4370 = vshrl.u32 %v4369, 7
    %v4371 = vsub.s32 0, %v4370
    %v4372 = vrot.slane %v3111, %v4371
    %v4373 = vsel %vm3451, %v3214, %v3210
    %v4374 = vsel %vm3453, %v3218, %v4373
    %v4375 = vsel %vm3455, %v3222, %v4374
    %v4376 = vsel %vm3457, %v3226, %v4375
    %v4377 = vsel %vm3459, %v3874, %v4376
    %v4378 = vsel %vm3461, %v4109, %v4377
    %v4379 = vsel %vm3463, %v4344, %v4378
    %v4380 = vsel %vm3451, %v3246, %v3242
    %v4381 = vsel %vm3453, %v3250, %v4380
    %v4382 = vsel %vm3455, %v3254, %v4381
    %v4383 = vsel %vm3457, %v3258, %v4382
    %v4384 = vsel %vm3459, %v3878, %v4383
    %v4385 = vsel %vm3461, %v4113, %v4384
    %v4386 = vsel %vm3463, %v4348, %v4385
    %v4387 = vsel %vm3451, %v3278, %v3274
    %v4388 = vsel %vm3453, %v3282, %v4387
    %v4389 = vsel %vm3455, %v3286, %v4388
    %v4390 = vsel %vm3457, %v3290, %v4389
    %v4391 = vsel %vm3459, %v3882, %v4390
    %v4392 = vsel %vm3461, %v4117, %v4391
    %v4393 = vsel %vm3463, %v4352, %v4392
    %v4394 = vsel %vm3451, %v3310, %v3306
    %v4395 = vsel %vm3453, %v3314, %v4394
    %v4396 = vsel %vm3455, %v3318, %v4395
    %v4397 = vsel %vm3457, %v3322, %v4396
    %v4398 = vsel %vm3459, %v3886, %v4397
    %v4399 = vsel %vm3461, %v4121, %v4398
    %v4400 = vsel %vm3463, %v4356, %v4399
    %v4401 = vsel %vm3451, %v3342, %v3338
    %v4402 = vsel %vm3453, %v3346, %v4401
    %v4403 = vsel %vm3455, %v3350, %v4402
    %v4404 = vsel %vm3457, %v3354, %v4403
    %v4405 = vsel %vm3459, %v3890, %v4404
    %v4406 = vsel %vm3461, %v4125, %v4405
    %v4407 = vsel %vm3463, %v4360, %v4406
    %v4408 = vsel %vm3451, %v3374, %v3370
    %v4409 = vsel %vm3453, %v3378, %v4408
    %v4410 = vsel %vm3455, %v3382, %v4409
    %v4411 = vsel %vm3457, %v3386, %v4410
    %v4412 = vsel %vm3459, %v3894, %v4411
    %v4413 = vsel %vm3461, %v4129, %v4412
    %v4414 = vsel %vm3463, %v4364, %v4413
    %v4415 = vsel %vm3451, %v3406, %v3402
    %v4416 = vsel %vm3453, %v3410, %v4415
    %v4417 = vsel %vm3455, %v3414, %v4416
    %v4418 = vsel %vm3457, %v3418, %v4417
    %v4419 = vsel %vm3459, %v3898, %v4418
    %v4420 = vsel %vm3461, %v4133, %v4419
    %v4421 = vsel %vm3463, %v4368, %v4420
    %v4422 = vsel %vm3451, %v3438, %v3434
    %v4423 = vsel %vm3453, %v3442, %v4422
    %v4424 = vsel %vm3455, %v3446, %v4423
    %v4425 = vsel %vm3457, %v3450, %v4424
    %v4426 = vsel %vm3459, %v3902, %v4425
    %v4427 = vsel %vm3461, %v4137, %v4426
    %v4428 = vsel %vm3463, %v4372, %v4427
    %v4429 = vsel %vm3514, %v4379, 0
    %v4431 = vsel %vm3514, %v4386, 0
    %v4433 = vsel %vm3514, %v4393, 0
    %v4435 = vsel %vm3514, %v4400, 0
    %v4437 = vsel %vm3514, %v4407, 0
    %v4439 = vsel %vm3514, %v4414, 0
    %v4441 = vsel %vm3514, %v4421, 0
    %v4443 = vsel %vm3514, %v4428, 0
    %4445 = vmatprep.subr.mxu0 0.0
    %4446 = vmatpush1.msra.mxu0 0.0
    %4447 = vmatprep.subr.mxu0 0.0
    %4448 = vmatpush1.msra.mxu0 0.0
    %4449 = vmatprep.subr.mxu0 0.0
    %4450 = vmatpush1.msra.mxu0 0.0
    %4451 = vmatprep.subr.mxu0 0.0
    %4452 = vmatpush1.msra.mxu0 0.0
    %4453 = vmatprep.subr.mxu0 0.0
    %4454 = vmatpush1.msra.mxu0 0.0
    %4455 = vmatprep.subr.mxu0 0.0
    %4456 = vmatpush1.msra.mxu0 0.0
    %4457 = vmatprep.subr.mxu0 0.0
    %4458 = vmatpush1.msra.mxu0 0.0
    %4459 = vmatprep.subr.mxu0 0.0
    %4460 = vmatpush1.msra.mxu0 %v4332
    %4461 = vmatprep.subr.mxu0 0.0
    %4462 = vmatpush1.msra.mxu0 %v4331
    %4463 = vmatprep.subr.mxu0 0.0
    %4464 = vmatpush1.msra.mxu0 %v4330
    %4465 = vmatprep.subr.mxu0 0.0
    %4466 = vmatpush1.msra.mxu0 %v4329
    %4467 = vmatprep.subr.mxu0 0.0
    %4468 = vmatpush1.msra.mxu0 %v4328
    %4469 = vmatprep.subr.mxu0 0.0
    %4470 = vmatpush1.msra.mxu0 %v4327
    %4471 = vmatprep.subr.mxu0 0.0
    %4472 = vmatpush1.msra.mxu0 %v4326
    %4473 = vmatprep.subr.mxu0 0.0
    %4474 = vmatpush1.msra.mxu0 %v4325
    %4475 = vmatprep.subr.mxu0 0.0
    %4476 = vmatpush1.msra.mxu0 %v4324
    %4477 = vmatprep.subr.mxu0 0.0
    %4478 = vmatpush2.msra.mxu0 0.0
    %4479 = vmatprep.subr.mxu0 0.0
    %4480 = vmatpush2.msra.mxu0 0.0
    %4481 = vmatprep.subr.mxu0 0.0
    %4482 = vmatpush2.msra.mxu0 0.0
    %4483 = vmatprep.subr.mxu0 0.0
    %4484 = vmatpush2.msra.mxu0 0.0
    %4485 = vmatprep.subr.mxu0 0.0
    %4486 = vmatpush2.msra.mxu0 0.0
    %4487 = vmatprep.subr.mxu0 0.0
    %4488 = vmatpush2.msra.mxu0 0.0
    %4489 = vmatprep.subr.mxu0 0.0
    %4490 = vmatpush2.msra.mxu0 0.0
    %4491 = vmatprep.subr.mxu0 0.0
    %4492 = vmatpush2.msra.mxu0 0.0
    %4493 = vmatprep.subr.mxu0 0.0
    %4494 = vmatpush2.msra.mxu0 0.0
    %4495 = vmatprep.subr.mxu0 0.0
    %4496 = vmatpush2.msra.mxu0 0.0
    %4497 = vmatprep.subr.mxu0 0.0
    %4498 = vmatpush2.msra.mxu0 0.0
    %4499 = vmatprep.subr.mxu0 0.0
    %4500 = vmatpush2.msra.mxu0 0.0
    %4501 = vmatprep.subr.mxu0 0.0
    %4502 = vmatpush2.msra.mxu0 0.0
    %4503 = vmatprep.subr.mxu0 0.0
    %4504 = vmatpush2.msra.mxu0 0.0
    %4505 = vmatprep.subr.mxu0 0.0
    %4506 = vmatpush2.msra.mxu0 0.0
    %4507 = vmatprep.subr.mxu0 0.0
    %4508 = vmatpush2.msra.mxu0 0.0
    %4509 = vmatprep.mubr.f32.mxu0 0.0
    %4510 = vmatmul.mubr.f32.gmra.mxu0 %v4429
    %v4511 = vpop.f32.mrf.mxu0
    %v4512 = vadd.f32 0.0, %v4511
    %v4513 = vpop.f32.mrf.mxu0
    %4514 = vmatprep.mubr.f32.mxu0 0.0
    %4515 = vmatmul.mubr.f32.gmra.mxu0 %v4431
    %v4516 = vpop.f32.mrf.mxu0
    %v4517 = vadd.f32 0.0, %v4516
    %v4518 = vpop.f32.mrf.mxu0
    %4519 = vmatprep.mubr.f32.mxu0 0.0
    %4520 = vmatmul.mubr.f32.gmra.mxu0 %v4433
    %v4521 = vpop.f32.mrf.mxu0
    %v4522 = vadd.f32 0.0, %v4521
    %v4523 = vpop.f32.mrf.mxu0
    %4524 = vmatprep.mubr.f32.mxu0 0.0
    %4525 = vmatmul.mubr.f32.gmra.mxu0 %v4435
    %v4526 = vpop.f32.mrf.mxu0
    %v4527 = vadd.f32 0.0, %v4526
    %v4528 = vpop.f32.mrf.mxu0
    %4529 = vmatprep.mubr.f32.mxu0 0.0
    %4530 = vmatmul.mubr.f32.gmra.mxu0 %v4437
    %v4531 = vpop.f32.mrf.mxu0
    %v4532 = vadd.f32 0.0, %v4531
    %v4533 = vpop.f32.mrf.mxu0
    %4534 = vmatprep.mubr.f32.mxu0 0.0
    %4535 = vmatmul.mubr.f32.gmra.mxu0 %v4439
    %v4536 = vpop.f32.mrf.mxu0
    %v4537 = vadd.f32 0.0, %v4536
    %v4538 = vpop.f32.mrf.mxu0
    %4539 = vmatprep.mubr.f32.mxu0 0.0
    %4540 = vmatmul.mubr.f32.gmra.mxu0 %v4441
    %v4541 = vpop.f32.mrf.mxu0
    %v4542 = vadd.f32 0.0, %v4541
    %v4543 = vpop.f32.mrf.mxu0
    %4544 = vmatprep.mubr.f32.mxu0 0.0
    %4545 = vmatmul.mubr.f32.gmra.mxu0 %v4443
    %v4546 = vpop.f32.mrf.mxu0
    %v4547 = vadd.f32 0.0, %v4546
    %v4548 = vpop.f32.mrf.mxu0
    %4549 = vdwg.mxu0
    %v4550 = vadd.f32 %v4315, %v4512
    %v4551 = vadd.f32 %v4316, %v4517
    %v4552 = vadd.f32 %v4317, %v4522
    %v4553 = vadd.f32 %v4318, %v4527
    %v4554 = vadd.f32 %v4319, %v4532
    %v4555 = vadd.f32 %v4320, %v4537
    %v4556 = vadd.f32 %v4321, %v4542
    %v4557 = vadd.f32 %v4322, %v4547
    %v4558 = vld [vmem:[%s4] sm:$0x1]
    %v4560 = vlaneseq
    %v4561 = vshrl.u32 %v4560, 7
    %v4562 = vsub.s32 0, %v4561
    %v4563 = vrot.slane %v4558, %v4562
    %v4565 = vadd.f32 %v4550, %v4563
    %v4566 = vadd.f32 %v4551, %v4563
    %v4567 = vadd.f32 %v4552, %v4563
    %v4568 = vadd.f32 %v4553, %v4563
    %v4569 = vadd.f32 %v4554, %v4563
    %v4570 = vadd.f32 %v4555, %v4563
    %v4571 = vadd.f32 %v4556, %v4563
    %v4572 = vadd.f32 %v4557, %v4563
    %v4573 = vmax.f32 %v4565, 0.0
    %v4574 = vmax.f32 %v4566, 0.0
    %v4575 = vmax.f32 %v4567, 0.0
    %v4576 = vmax.f32 %v4568, 0.0
    %v4577 = vmax.f32 %v4569, 0.0
    %v4578 = vmax.f32 %v4570, 0.0
    %v4579 = vmax.f32 %v4571, 0.0
    %v4580 = vmax.f32 %v4572, 0.0
    %4589 = vrot.lane.b32.xlu0 %v4573, 64
    %v4590 = vpop.permute.xlu0 %4589
    %4591 = vrot.lane.b32.xlu0 %v4574, 64
    %v4592 = vpop.permute.xlu0 %4591
    %4593 = vrot.lane.b32.xlu0 %v4575, 64
    %v4594 = vpop.permute.xlu0 %4593
    %4595 = vrot.lane.b32.xlu0 %v4576, 64
    %v4596 = vpop.permute.xlu0 %4595
    %4597 = vrot.lane.b32.xlu0 %v4577, 64
    %v4598 = vpop.permute.xlu0 %4597
    %4599 = vrot.lane.b32.xlu0 %v4578, 64
    %v4600 = vpop.permute.xlu0 %4599
    %4601 = vrot.lane.b32.xlu0 %v4579, 64
    %v4602 = vpop.permute.xlu0 %4601
    %4603 = vrot.lane.b32.xlu0 %v4580, 64
    %v4604 = vpop.permute.xlu0 %4603
    %v4613 = vmax.f32 %v4573, %v4590
    %v4614 = vmax.f32 %v4574, %v4592
    %v4615 = vmax.f32 %v4575, %v4594
    %v4616 = vmax.f32 %v4576, %v4596
    %v4617 = vmax.f32 %v4577, %v4598
    %v4618 = vmax.f32 %v4578, %v4600
    %v4619 = vmax.f32 %v4579, %v4602
    %v4620 = vmax.f32 %v4580, %v4604
    %v4629 = vcombine.high %v4613, %v4613
    %v4631 = vunpack.c.l.s4 1983009808
    %v4632 = vunpack.c.0.s8 %v4631
    %v4633 = vlaneseq
    %v4634 = vshrl.u32 %v4633, 7
    %v4635 = vsub.s32 %v4632, %v4634
    %v4636 = vrot.slane %v4613, %v4635
    %v4638 = vunpack.c.l.s4 1983009808
    %v4639 = vunpack.c.0.s8 %v4638
    %v4640 = vlaneseq
    %v4641 = vshrl.u32 %v4640, 7
    %v4642 = vsub.s32 %v4639, %v4641
    %v4643 = vrot.slane %v4629, %v4642
    %v4644 = vcombine.high %v4636, %v4636
    %v4645 = vcombine.high %v4643, %v4643
    %v4646 = vcombine.high %v4614, %v4614
    %v4648 = vunpack.c.l.s4 1983009808
    %v4649 = vunpack.c.0.s8 %v4648
    %v4650 = vlaneseq
    %v4651 = vshrl.u32 %v4650, 7
    %v4652 = vsub.s32 %v4649, %v4651
    %v4653 = vrot.slane %v4614, %v4652
    %v4655 = vunpack.c.l.s4 1983009808
    %v4656 = vunpack.c.0.s8 %v4655
    %v4657 = vlaneseq
    %v4658 = vshrl.u32 %v4657, 7
    %v4659 = vsub.s32 %v4656, %v4658
    %v4660 = vrot.slane %v4646, %v4659
    %v4661 = vcombine.high %v4653, %v4653
    %v4662 = vcombine.high %v4660, %v4660
    %v4663 = vcombine.high %v4615, %v4615
    %v4665 = vunpack.c.l.s4 1983009808
    %v4666 = vunpack.c.0.s8 %v4665
    %v4667 = vlaneseq
    %v4668 = vshrl.u32 %v4667, 7
    %v4669 = vsub.s32 %v4666, %v4668
    %v4670 = vrot.slane %v4615, %v4669
    %v4672 = vunpack.c.l.s4 1983009808
    %v4673 = vunpack.c.0.s8 %v4672
    %v4674 = vlaneseq
    %v4675 = vshrl.u32 %v4674, 7
    %v4676 = vsub.s32 %v4673, %v4675
    %v4677 = vrot.slane %v4663, %v4676
    %v4678 = vcombine.high %v4670, %v4670
    %v4679 = vcombine.high %v4677, %v4677
    %v4680 = vcombine.high %v4616, %v4616
    %v4682 = vunpack.c.l.s4 1983009808
    %v4683 = vunpack.c.0.s8 %v4682
    %v4684 = vlaneseq
    %v4685 = vshrl.u32 %v4684, 7
    %v4686 = vsub.s32 %v4683, %v4685
    %v4687 = vrot.slane %v4616, %v4686
    %v4689 = vunpack.c.l.s4 1983009808
    %v4690 = vunpack.c.0.s8 %v4689
    %v4691 = vlaneseq
    %v4692 = vshrl.u32 %v4691, 7
    %v4693 = vsub.s32 %v4690, %v4692
    %v4694 = vrot.slane %v4680, %v4693
    %v4695 = vcombine.high %v4687, %v4687
    %v4696 = vcombine.high %v4694, %v4694
    %v4697 = vcombine.high %v4617, %v4617
    %v4699 = vunpack.c.l.s4 1983009808
    %v4700 = vunpack.c.0.s8 %v4699
    %v4701 = vlaneseq
    %v4702 = vshrl.u32 %v4701, 7
    %v4703 = vsub.s32 %v4700, %v4702
    %v4704 = vrot.slane %v4617, %v4703
    %v4706 = vunpack.c.l.s4 1983009808
    %v4707 = vunpack.c.0.s8 %v4706
    %v4708 = vlaneseq
    %v4709 = vshrl.u32 %v4708, 7
    %v4710 = vsub.s32 %v4707, %v4709
    %v4711 = vrot.slane %v4697, %v4710
    %v4712 = vcombine.high %v4704, %v4704
    %v4713 = vcombine.high %v4711, %v4711
    %v4714 = vcombine.high %v4618, %v4618
    %v4716 = vunpack.c.l.s4 1983009808
    %v4717 = vunpack.c.0.s8 %v4716
    %v4718 = vlaneseq
    %v4719 = vshrl.u32 %v4718, 7
    %v4720 = vsub.s32 %v4717, %v4719
    %v4721 = vrot.slane %v4618, %v4720
    %v4723 = vunpack.c.l.s4 1983009808
    %v4724 = vunpack.c.0.s8 %v4723
    %v4725 = vlaneseq
    %v4726 = vshrl.u32 %v4725, 7
    %v4727 = vsub.s32 %v4724, %v4726
    %v4728 = vrot.slane %v4714, %v4727
    %v4729 = vcombine.high %v4721, %v4721
    %v4730 = vcombine.high %v4728, %v4728
    %v4731 = vcombine.high %v4619, %v4619
    %v4733 = vunpack.c.l.s4 1983009808
    %v4734 = vunpack.c.0.s8 %v4733
    %v4735 = vlaneseq
    %v4736 = vshrl.u32 %v4735, 7
    %v4737 = vsub.s32 %v4734, %v4736
    %v4738 = vrot.slane %v4619, %v4737
    %v4740 = vunpack.c.l.s4 1983009808
    %v4741 = vunpack.c.0.s8 %v4740
    %v4742 = vlaneseq
    %v4743 = vshrl.u32 %v4742, 7
    %v4744 = vsub.s32 %v4741, %v4743
    %v4745 = vrot.slane %v4731, %v4744
    %v4746 = vcombine.high %v4738, %v4738
    %v4747 = vcombine.high %v4745, %v4745
    %v4748 = vcombine.high %v4620, %v4620
    %v4750 = vunpack.c.l.s4 1983009808
    %v4751 = vunpack.c.0.s8 %v4750
    %v4752 = vlaneseq
    %v4753 = vshrl.u32 %v4752, 7
    %v4754 = vsub.s32 %v4751, %v4753
    %v4755 = vrot.slane %v4620, %v4754
    %v4757 = vunpack.c.l.s4 1983009808
    %v4758 = vunpack.c.0.s8 %v4757
    %v4759 = vlaneseq
    %v4760 = vshrl.u32 %v4759, 7
    %v4761 = vsub.s32 %v4758, %v4760
    %v4762 = vrot.slane %v4748, %v4761
    %v4763 = vcombine.high %v4755, %v4755
    %v4764 = vcombine.high %v4762, %v4762
    %v4797 = vrot.slane %v4636, 7
    %v4798 = vrot.slane %v4797, 2
    %v4799 = vrot.slane %v4644, 7
    %v4800 = vrot.slane %v4799, 2
    %v4801 = vrot.slane %v4643, 7
    %v4802 = vrot.slane %v4801, 2
    %v4803 = vrot.slane %v4645, 7
    %v4804 = vrot.slane %v4803, 2
    %v4805 = vrot.slane %v4653, 7
    %v4806 = vrot.slane %v4805, 2
    %v4807 = vrot.slane %v4661, 7
    %v4808 = vrot.slane %v4807, 2
    %v4809 = vrot.slane %v4660, 7
    %v4810 = vrot.slane %v4809, 2
    %v4811 = vrot.slane %v4662, 7
    %v4812 = vrot.slane %v4811, 2
    %v4813 = vrot.slane %v4670, 7
    %v4814 = vrot.slane %v4813, 2
    %v4815 = vrot.slane %v4678, 7
    %v4816 = vrot.slane %v4815, 2
    %v4817 = vrot.slane %v4677, 7
    %v4818 = vrot.slane %v4817, 2
    %v4819 = vrot.slane %v4679, 7
    %v4820 = vrot.slane %v4819, 2
    %v4821 = vrot.slane %v4687, 7
    %v4822 = vrot.slane %v4821, 2
    %v4823 = vrot.slane %v4695, 7
    %v4824 = vrot.slane %v4823, 2
    %v4825 = vrot.slane %v4694, 7
    %v4826 = vrot.slane %v4825, 2
    %v4827 = vrot.slane %v4696, 7
    %v4828 = vrot.slane %v4827, 2
    %v4829 = vrot.slane %v4704, 7
    %v4830 = vrot.slane %v4829, 2
    %v4831 = vrot.slane %v4712, 7
    %v4832 = vrot.slane %v4831, 2
    %v4833 = vrot.slane %v4711, 7
    %v4834 = vrot.slane %v4833, 2
    %v4835 = vrot.slane %v4713, 7
    %v4836 = vrot.slane %v4835, 2
    %v4837 = vrot.slane %v4721, 7
    %v4838 = vrot.slane %v4837, 2
    %v4839 = vrot.slane %v4729, 7
    %v4840 = vrot.slane %v4839, 2
    %v4841 = vrot.slane %v4728, 7
    %v4842 = vrot.slane %v4841, 2
    %v4843 = vrot.slane %v4730, 7
    %v4844 = vrot.slane %v4843, 2
    %v4845 = vrot.slane %v4738, 7
    %v4846 = vrot.slane %v4845, 2
    %v4847 = vrot.slane %v4746, 7
    %v4848 = vrot.slane %v4847, 2
    %v4849 = vrot.slane %v4745, 7
    %v4850 = vrot.slane %v4849, 2
    %v4851 = vrot.slane %v4747, 7
    %v4852 = vrot.slane %v4851, 2
    %v4853 = vrot.slane %v4755, 7
    %v4854 = vrot.slane %v4853, 2
    %v4855 = vrot.slane %v4763, 7
    %v4856 = vrot.slane %v4855, 2
    %v4857 = vrot.slane %v4762, 7
    %v4858 = vrot.slane %v4857, 2
    %v4859 = vrot.slane %v4764, 7
    %v4860 = vrot.slane %v4859, 2
    %v4893 = vmax.f32 %v4636, %v4798
    %v4894 = vmax.f32 %v4644, %v4800
    %v4895 = vmax.f32 %v4643, %v4802
    %v4896 = vmax.f32 %v4645, %v4804
    %v4897 = vmax.f32 %v4653, %v4806
    %v4898 = vmax.f32 %v4661, %v4808
    %v4899 = vmax.f32 %v4660, %v4810
    %v4900 = vmax.f32 %v4662, %v4812
    %v4901 = vmax.f32 %v4670, %v4814
    %v4902 = vmax.f32 %v4678, %v4816
    %v4903 = vmax.f32 %v4677, %v4818
    %v4904 = vmax.f32 %v4679, %v4820
    %v4905 = vmax.f32 %v4687, %v4822
    %v4906 = vmax.f32 %v4695, %v4824
    %v4907 = vmax.f32 %v4694, %v4826
    %v4908 = vmax.f32 %v4696, %v4828
    %v4909 = vmax.f32 %v4704, %v4830
    %v4910 = vmax.f32 %v4712, %v4832
    %v4911 = vmax.f32 %v4711, %v4834
    %v4912 = vmax.f32 %v4713, %v4836
    %v4913 = vmax.f32 %v4721, %v4838
    %v4914 = vmax.f32 %v4729, %v4840
    %v4915 = vmax.f32 %v4728, %v4842
    %v4916 = vmax.f32 %v4730, %v4844
    %v4917 = vmax.f32 %v4738, %v4846
    %v4918 = vmax.f32 %v4746, %v4848
    %v4919 = vmax.f32 %v4745, %v4850
    %v4920 = vmax.f32 %v4747, %v4852
    %v4921 = vmax.f32 %v4755, %v4854
    %v4922 = vmax.f32 %v4763, %v4856
    %v4923 = vmax.f32 %v4762, %v4858
    %v4924 = vmax.f32 %v4764, %v4860
    %v4957 = vsel %vm3457, %v4893, %v4893
    %v4958 = vsel %vm3461, %v4893, %v4957
    %v4959 = vrot.slane %v4894, 7
    %v4960 = vsel %vm3451, %v4959, %v4958
    %v4961 = vsel %vm3455, %v4959, %v4960
    %v4962 = vsel %vm3459, %v4959, %v4961
    %v4963 = vsel %vm3463, %v4959, %v4962
    %v4964 = vsel %vm3457, %v4895, %v4895
    %v4965 = vsel %vm3461, %v4895, %v4964
    %v4966 = vrot.slane %v4896, 7
    %v4967 = vsel %vm3451, %v4966, %v4965
    %v4968 = vsel %vm3455, %v4966, %v4967
    %v4969 = vsel %vm3459, %v4966, %v4968
    %v4970 = vsel %vm3463, %v4966, %v4969
    %v4971 = vsel %vm3457, %v4897, %v4897
    %v4972 = vsel %vm3461, %v4897, %v4971
    %v4973 = vrot.slane %v4898, 7
    %v4974 = vsel %vm3451, %v4973, %v4972
    %v4975 = vsel %vm3455, %v4973, %v4974
    %v4976 = vsel %vm3459, %v4973, %v4975
    %v4977 = vsel %vm3463, %v4973, %v4976
    %v4978 = vsel %vm3457, %v4899, %v4899
    %v4979 = vsel %vm3461, %v4899, %v4978
    %v4980 = vrot.slane %v4900, 7
    %v4981 = vsel %vm3451, %v4980, %v4979
    %v4982 = vsel %vm3455, %v4980, %v4981
    %v4983 = vsel %vm3459, %v4980, %v4982
    %v4984 = vsel %vm3463, %v4980, %v4983
    %v4985 = vsel %vm3457, %v4901, %v4901
    %v4986 = vsel %vm3461, %v4901, %v4985
    %v4987 = vrot.slane %v4902, 7
    %v4988 = vsel %vm3451, %v4987, %v4986
    %v4989 = vsel %vm3455, %v4987, %v4988
    %v4990 = vsel %vm3459, %v4987, %v4989
    %v4991 = vsel %vm3463, %v4987, %v4990
    %v4992 = vsel %vm3457, %v4903, %v4903
    %v4993 = vsel %vm3461, %v4903, %v4992
    %v4994 = vrot.slane %v4904, 7
    %v4995 = vsel %vm3451, %v4994, %v4993
    %v4996 = vsel %vm3455, %v4994, %v4995
    %v4997 = vsel %vm3459, %v4994, %v4996
    %v4998 = vsel %vm3463, %v4994, %v4997
    %v4999 = vsel %vm3457, %v4905, %v4905
    %v5000 = vsel %vm3461, %v4905, %v4999
    %v5001 = vrot.slane %v4906, 7
    %v5002 = vsel %vm3451, %v5001, %v5000
    %v5003 = vsel %vm3455, %v5001, %v5002
    %v5004 = vsel %vm3459, %v5001, %v5003
    %v5005 = vsel %vm3463, %v5001, %v5004
    %v5006 = vsel %vm3457, %v4907, %v4907
    %v5007 = vsel %vm3461, %v4907, %v5006
    %v5008 = vrot.slane %v4908, 7
    %v5009 = vsel %vm3451, %v5008, %v5007
    %v5010 = vsel %vm3455, %v5008, %v5009
    %v5011 = vsel %vm3459, %v5008, %v5010
    %v5012 = vsel %vm3463, %v5008, %v5011
    %v5013 = vsel %vm3457, %v4909, %v4909
    %v5014 = vsel %vm3461, %v4909, %v5013
    %v5015 = vrot.slane %v4910, 7
    %v5016 = vsel %vm3451, %v5015, %v5014
    %v5017 = vsel %vm3455, %v5015, %v5016
    %v5018 = vsel %vm3459, %v5015, %v5017
    %v5019 = vsel %vm3463, %v5015, %v5018
    %v5020 = vsel %vm3457, %v4911, %v4911
    %v5021 = vsel %vm3461, %v4911, %v5020
    %v5022 = vrot.slane %v4912, 7
    %v5023 = vsel %vm3451, %v5022, %v5021
    %v5024 = vsel %vm3455, %v5022, %v5023
    %v5025 = vsel %vm3459, %v5022, %v5024
    %v5026 = vsel %vm3463, %v5022, %v5025
    %v5027 = vsel %vm3457, %v4913, %v4913
    %v5028 = vsel %vm3461, %v4913, %v5027
    %v5029 = vrot.slane %v4914, 7
    %v5030 = vsel %vm3451, %v5029, %v5028
    %v5031 = vsel %vm3455, %v5029, %v5030
    %v5032 = vsel %vm3459, %v5029, %v5031
    %v5033 = vsel %vm3463, %v5029, %v5032
    %v5034 = vsel %vm3457, %v4915, %v4915
    %v5035 = vsel %vm3461, %v4915, %v5034
    %v5036 = vrot.slane %v4916, 7
    %v5037 = vsel %vm3451, %v5036, %v5035
    %v5038 = vsel %vm3455, %v5036, %v5037
    %v5039 = vsel %vm3459, %v5036, %v5038
    %v5040 = vsel %vm3463, %v5036, %v5039
    %v5041 = vsel %vm3457, %v4917, %v4917
    %v5042 = vsel %vm3461, %v4917, %v5041
    %v5043 = vrot.slane %v4918, 7
    %v5044 = vsel %vm3451, %v5043, %v5042
    %v5045 = vsel %vm3455, %v5043, %v5044
    %v5046 = vsel %vm3459, %v5043, %v5045
    %v5047 = vsel %vm3463, %v5043, %v5046
    %v5048 = vsel %vm3457, %v4919, %v4919
    %v5049 = vsel %vm3461, %v4919, %v5048
    %v5050 = vrot.slane %v4920, 7
    %v5051 = vsel %vm3451, %v5050, %v5049
    %v5052 = vsel %vm3455, %v5050, %v5051
    %v5053 = vsel %vm3459, %v5050, %v5052
    %v5054 = vsel %vm3463, %v5050, %v5053
    %v5055 = vsel %vm3457, %v4921, %v4921
    %v5056 = vsel %vm3461, %v4921, %v5055
    %v5057 = vrot.slane %v4922, 7
    %v5058 = vsel %vm3451, %v5057, %v5056
    %v5059 = vsel %vm3455, %v5057, %v5058
    %v5060 = vsel %vm3459, %v5057, %v5059
    %v5061 = vsel %vm3463, %v5057, %v5060
    %v5062 = vsel %vm3457, %v4923, %v4923
    %v5063 = vsel %vm3461, %v4923, %v5062
    %v5064 = vrot.slane %v4924, 7
    %v5065 = vsel %vm3451, %v5064, %v5063
    %v5066 = vsel %vm3455, %v5064, %v5065
    %v5067 = vsel %vm3459, %v5064, %v5066
    %v5068 = vsel %vm3463, %v5064, %v5067
    %v5085 = vcombine.low %v4963, %v4977
    %v5087 = vunpack.c.l.s4 1934713408
    %v5088 = vunpack.c.0.s8 %v5087
    %v5089 = vlaneseq
    %v5090 = vshrl.u32 %v5089, 7
    %v5091 = vsub.s32 %v5088, %v5090
    %v5092 = vrot.slane %v5085, %v5091
    %v5093 = vcombine.high %v5092, 0.0
    %v5094 = vcombine.low %v4991, %v5005
    %v5096 = vunpack.c.l.s4 1934713408
    %v5097 = vunpack.c.0.s8 %v5096
    %v5098 = vlaneseq
    %v5099 = vshrl.u32 %v5098, 7
    %v5100 = vsub.s32 %v5097, %v5099
    %v5101 = vrot.slane %v5094, %v5100
    %v5102 = vcombine.high %v5101, 0.0
    %v5103 = vcombine.low %v5019, %v5033
    %v5105 = vunpack.c.l.s4 1934713408
    %v5106 = vunpack.c.0.s8 %v5105
    %v5107 = vlaneseq
    %v5108 = vshrl.u32 %v5107, 7
    %v5109 = vsub.s32 %v5106, %v5108
    %v5110 = vrot.slane %v5103, %v5109
    %v5111 = vcombine.high %v5110, 0.0
    %v5112 = vcombine.low %v5047, %v5061
    %v5114 = vunpack.c.l.s4 1934713408
    %v5115 = vunpack.c.0.s8 %v5114
    %v5116 = vlaneseq
    %v5117 = vshrl.u32 %v5116, 7
    %v5118 = vsub.s32 %v5115, %v5117
    %v5119 = vrot.slane %v5112, %v5118
    %v5120 = vcombine.high %v5119, 0.0
    %v5121 = vcombine.low %v4970, %v4984
    %v5123 = vunpack.c.l.s4 1934713408
    %v5124 = vunpack.c.0.s8 %v5123
    %v5125 = vlaneseq
    %v5126 = vshrl.u32 %v5125, 7
    %v5127 = vsub.s32 %v5124, %v5126
    %v5128 = vrot.slane %v5121, %v5127
    %v5129 = vcombine.high %v5128, 0.0
    %v5130 = vcombine.low %v4998, %v5012
    %v5132 = vunpack.c.l.s4 1934713408
    %v5133 = vunpack.c.0.s8 %v5132
    %v5134 = vlaneseq
    %v5135 = vshrl.u32 %v5134, 7
    %v5136 = vsub.s32 %v5133, %v5135
    %v5137 = vrot.slane %v5130, %v5136
    %v5138 = vcombine.high %v5137, 0.0
    %v5139 = vcombine.low %v5026, %v5040
    %v5141 = vunpack.c.l.s4 1934713408
    %v5142 = vunpack.c.0.s8 %v5141
    %v5143 = vlaneseq
    %v5144 = vshrl.u32 %v5143, 7
    %v5145 = vsub.s32 %v5142, %v5144
    %v5146 = vrot.slane %v5139, %v5145
    %v5147 = vcombine.high %v5146, 0.0
    %v5148 = vcombine.low %v5054, %v5068
    %v5150 = vunpack.c.l.s4 1934713408
    %v5151 = vunpack.c.0.s8 %v5150
    %v5152 = vlaneseq
    %v5153 = vshrl.u32 %v5152, 7
    %v5154 = vsub.s32 %v5151, %v5153
    %v5155 = vrot.slane %v5148, %v5154
    %v5156 = vcombine.high %v5155, 0.0
    %v5161 = vcombine.low %v5092, %v5101
    %v5162 = vcombine.low %v5110, %v5119
    %v5164 = vunpack.c.l.s4 1983009808
    %v5165 = vunpack.c.0.s8 %v5164
    %v5166 = vlaneseq
    %v5167 = vshrl.u32 %v5166, 7
    %v5168 = vsub.s32 %v5165, %v5167
    %v5169 = vrot.slane %v5161, %v5168
    %v5171 = vunpack.c.l.s4 1983009808
    %v5172 = vunpack.c.0.s8 %v5171
    %v5173 = vlaneseq
    %v5174 = vshrl.u32 %v5173, 7
    %v5175 = vsub.s32 %v5172, %v5174
    %v5176 = vrot.slane %v5162, %v5175
    %v5177 = vcombine.low %v5169, %v5176
    %v5183 = vcombine.low %v5093, %v5102
    %v5184 = vcombine.low %v5111, %v5120
    %v5186 = vunpack.c.l.s4 1983009808
    %v5187 = vunpack.c.0.s8 %v5186
    %v5188 = vlaneseq
    %v5189 = vshrl.u32 %v5188, 7
    %v5190 = vsub.s32 %v5187, %v5189
    %v5191 = vrot.slane %v5183, %v5190
    %v5193 = vunpack.c.l.s4 1983009808
    %v5194 = vunpack.c.0.s8 %v5193
    %v5195 = vlaneseq
    %v5196 = vshrl.u32 %v5195, 7
    %v5197 = vsub.s32 %v5194, %v5196
    %v5198 = vrot.slane %v5184, %v5197
    %v5199 = vcombine.low %v5191, %v5198
    %5200 = vrot.lane.b32.xlu0 %v5199, 64
    %v5201 = vpop.permute.xlu0 %5200
    %v5207 = vcombine.low %v5128, %v5137
    %v5208 = vcombine.low %v5146, %v5155
    %v5210 = vunpack.c.l.s4 1983009808
    %v5211 = vunpack.c.0.s8 %v5210
    %v5212 = vlaneseq
    %v5213 = vshrl.u32 %v5212, 7
    %v5214 = vsub.s32 %v5211, %v5213
    %v5215 = vrot.slane %v5207, %v5214
    %v5217 = vunpack.c.l.s4 1983009808
    %v5218 = vunpack.c.0.s8 %v5217
    %v5219 = vlaneseq
    %v5220 = vshrl.u32 %v5219, 7
    %v5221 = vsub.s32 %v5218, %v5220
    %v5222 = vrot.slane %v5208, %v5221
    %v5223 = vcombine.low %v5215, %v5222
    %v5229 = vcombine.low %v5129, %v5138
    %v5230 = vcombine.low %v5147, %v5156
    %v5232 = vunpack.c.l.s4 1983009808
    %v5233 = vunpack.c.0.s8 %v5232
    %v5234 = vlaneseq
    %v5235 = vshrl.u32 %v5234, 7
    %v5236 = vsub.s32 %v5233, %v5235
    %v5237 = vrot.slane %v5229, %v5236
    %v5239 = vunpack.c.l.s4 1983009808
    %v5240 = vunpack.c.0.s8 %v5239
    %v5241 = vlaneseq
    %v5242 = vshrl.u32 %v5241, 7
    %v5243 = vsub.s32 %v5240, %v5242
    %v5244 = vrot.slane %v5230, %v5243
    %v5245 = vcombine.low %v5237, %v5244
    %5246 = vrot.lane.b32.xlu0 %v5245, 64
    %v5247 = vpop.permute.xlu0 %5246
    %vm5249 = vcmask 523264
    %v5250 = vsel %vm5249, %v5177, %v5201
    %v5251 = vsel %vm5249, %v5223, %v5247
    %v5252 = vld [vmem:[#allocation4] sm:$0xff]
    %v5253 = vld [vmem:[#allocation4 + $0x8] sm:$0xff]
    %v5254 = vld [vmem:[#allocation4 + $0x10] sm:$0xff]
    %v5255 = vld [vmem:[#allocation4 + $0x18] sm:$0xff]
    %v5256 = vld [vmem:[#allocation4 + $0x20] sm:$0xff]
    %v5257 = vld [vmem:[#allocation4 + $0x28] sm:$0xff]
    %v5258 = vld [vmem:[#allocation4 + $0x30] sm:$0xff]
    %v5259 = vld [vmem:[#allocation4 + $0x38] sm:$0xff]
    %v5260 = vld [vmem:[#allocation4 + $0x40] sm:$0xff]
    %v5261 = vld [vmem:[#allocation4 + $0x48] sm:$0xff]
    %v5262 = vld [vmem:[#allocation4 + $0x50] sm:$0xff]
    %v5263 = vld [vmem:[#allocation4 + $0x58] sm:$0xff]
    %v5264 = vld [vmem:[#allocation4 + $0x60] sm:$0xff]
    %v5265 = vld [vmem:[#allocation4 + $0x68] sm:$0xff]
    %v5266 = vld [vmem:[#allocation4 + $0x70] sm:$0xff]
    %v5267 = vld [vmem:[#allocation4 + $0x78] sm:$0xff]
    %v5268 = vld [vmem:[#allocation4 + $0x80] sm:$0xff]
    %v5269 = vld [vmem:[#allocation4 + $0x88] sm:$0xff]
    %v5270 = vld [vmem:[#allocation4 + $0x90] sm:$0xff]
    %v5271 = vld [vmem:[#allocation4 + $0x98] sm:$0xff]
    %v5272 = vld [vmem:[#allocation4 + $0xa0] sm:$0xff]
    %v5273 = vld [vmem:[#allocation4 + $0xa8] sm:$0xff]
    %v5274 = vld [vmem:[#allocation4 + $0xb0] sm:$0xff]
    %v5275 = vld [vmem:[#allocation4 + $0xb8] sm:$0xff]
    %v5276 = vld [vmem:[#allocation4 + $0xc0] sm:$0xff]
    %v5277 = vld [vmem:[#allocation4 + $0xc8] sm:$0xff]
    %v5278 = vld [vmem:[#allocation4 + $0xd0] sm:$0xff]
    %v5279 = vld [vmem:[#allocation4 + $0xd8] sm:$0xff]
    %v5280 = vld [vmem:[#allocation4 + $0xe0] sm:$0xff]
    %v5281 = vld [vmem:[#allocation4 + $0xe8] sm:$0xff]
    %v5282 = vld [vmem:[#allocation4 + $0xf0] sm:$0xff]
    %v5283 = vld [vmem:[#allocation4 + $0xf8] sm:$0xff]
    %v5284 = vld [vmem:[%s6] sm:$0x1]
    %v5286 = vlaneseq
    %v5287 = vshrl.u32 %v5286, 7
    %v5288 = vsub.s32 0, %v5287
    %v5289 = vrot.slane %v5284, %v5288
    %5291 = vmatprep.subr.mxu0 0.0
    %5292 = vmatpush1.msra.mxu0 %v5267
    %5293 = vmatprep.subr.mxu0 0.0
    %5294 = vmatpush1.msra.mxu0 %v5266
    %5295 = vmatprep.subr.mxu0 0.0
    %5296 = vmatpush1.msra.mxu0 %v5265
    %5297 = vmatprep.subr.mxu0 0.0
    %5298 = vmatpush1.msra.mxu0 %v5264
    %5299 = vmatprep.subr.mxu0 0.0
    %5300 = vmatpush1.msra.mxu0 %v5263
    %5301 = vmatprep.subr.mxu0 0.0
    %5302 = vmatpush1.msra.mxu0 %v5262
    %5303 = vmatprep.subr.mxu0 0.0
    %5304 = vmatpush1.msra.mxu0 %v5261
    %5305 = vmatprep.subr.mxu0 0.0
    %5306 = vmatpush1.msra.mxu0 %v5260
    %5307 = vmatprep.subr.mxu0 0.0
    %5308 = vmatpush1.msra.mxu0 %v5259
    %5309 = vmatprep.subr.mxu0 0.0
    %5310 = vmatpush1.msra.mxu0 %v5258
    %5311 = vmatprep.subr.mxu0 0.0
    %5312 = vmatpush1.msra.mxu0 %v5257
    %5313 = vmatprep.subr.mxu0 0.0
    %5314 = vmatpush1.msra.mxu0 %v5256
    %5315 = vmatprep.subr.mxu0 0.0
    %5316 = vmatpush1.msra.mxu0 %v5255
    %5317 = vmatprep.subr.mxu0 0.0
    %5318 = vmatpush1.msra.mxu0 %v5254
    %5319 = vmatprep.subr.mxu0 0.0
    %5320 = vmatpush1.msra.mxu0 %v5253
    %5321 = vmatprep.subr.mxu0 0.0
    %5322 = vmatpush1.msra.mxu0 %v5252
    %5323 = vmatprep.subr.mxu0 0.0
    %5324 = vmatpush2.msra.mxu0 %v5283
    %5325 = vmatprep.subr.mxu0 0.0
    %5326 = vmatpush2.msra.mxu0 %v5282
    %5327 = vmatprep.subr.mxu0 0.0
    %5328 = vmatpush2.msra.mxu0 %v5281
    %5329 = vmatprep.subr.mxu0 0.0
    %5330 = vmatpush2.msra.mxu0 %v5280
    %5331 = vmatprep.subr.mxu0 0.0
    %5332 = vmatpush2.msra.mxu0 %v5279
    %5333 = vmatprep.subr.mxu0 0.0
    %5334 = vmatpush2.msra.mxu0 %v5278
    %5335 = vmatprep.subr.mxu0 0.0
    %5336 = vmatpush2.msra.mxu0 %v5277
    %5337 = vmatprep.subr.mxu0 0.0
    %5338 = vmatpush2.msra.mxu0 %v5276
    %5339 = vmatprep.subr.mxu0 0.0
    %5340 = vmatpush2.msra.mxu0 %v5275
    %5341 = vmatprep.subr.mxu0 0.0
    %5342 = vmatpush2.msra.mxu0 %v5274
    %5343 = vmatprep.subr.mxu0 0.0
    %5344 = vmatpush2.msra.mxu0 %v5273
    %5345 = vmatprep.subr.mxu0 0.0
    %5346 = vmatpush2.msra.mxu0 %v5272
    %5347 = vmatprep.subr.mxu0 0.0
    %5348 = vmatpush2.msra.mxu0 %v5271
    %5349 = vmatprep.subr.mxu0 0.0
    %5350 = vmatpush2.msra.mxu0 %v5270
    %5351 = vmatprep.subr.mxu0 0.0
    %5352 = vmatpush2.msra.mxu0 %v5269
    %5353 = vmatprep.subr.mxu0 0.0
    %5354 = vmatpush2.msra.mxu0 %v5268
    %5355 = vmatprep.mubr.f32.mxu0 %v5251
    %5356 = vmatmul.mubr.f32.gmra.mxu0 %v5250
    %v5357 = vpop.f32.mrf.mxu0
    %v5358 = vadd.f32 %v5289, %v5357
    %v5359 = vpop.f32.mrf.mxu0
    %5360 = vdwg.mxu0
    %v5361 = vmax.f32 %v5358, 0.0
    %v5362 = vld [vmem:[%s7] sm:$0xff]
    %v5363 = vld [vmem:[%s7 + $0x8] sm:$0xff]
    %v5364 = vld [vmem:[%s7 + $0x10] sm:$0xff]
    %v5365 = vld [vmem:[%s7 + $0x18] sm:$0xff]
    %v5366 = vld [vmem:[%s7 + $0x20] sm:$0xff]
    %v5367 = vld [vmem:[%s7 + $0x28] sm:$0xff]
    %v5368 = vld [vmem:[%s7 + $0x30] sm:$0xff]
    %v5369 = vld [vmem:[%s7 + $0x38] sm:$0xff]
    %v5370 = vld [vmem:[%s7 + $0x40] sm:$0xff]
    %v5371 = vld [vmem:[%s7 + $0x48] sm:$0xff]
    %v5372 = vld [vmem:[%s7 + $0x50] sm:$0xff]
    %v5373 = vld [vmem:[%s7 + $0x58] sm:$0xff]
    %v5374 = vld [vmem:[%s7 + $0x60] sm:$0xff]
    %v5375 = vld [vmem:[%s7 + $0x68] sm:$0xff]
    %v5376 = vld [vmem:[%s7 + $0x70] sm:$0xff]
    %v5377 = vld [vmem:[%s7 + $0x78] sm:$0xff]
    %v5378 = vld [vmem:[%s8] sm:$0x1]
    %v5380 = vlaneseq
    %v5381 = vshrl.u32 %v5380, 7
    %v5382 = vsub.s32 0, %v5381
    %v5383 = vrot.slane %v5378, %v5382
    %5385 = vmatprep.subr.mxu0 0.0
    %5386 = vmatpush1.msra.mxu0 %v5377
    %5387 = vmatprep.subr.mxu0 0.0
    %5388 = vmatpush1.msra.mxu0 %v5376
    %5389 = vmatprep.subr.mxu0 0.0
    %5390 = vmatpush1.msra.mxu0 %v5375
    %5391 = vmatprep.subr.mxu0 0.0
    %5392 = vmatpush1.msra.mxu0 %v5374
    %5393 = vmatprep.subr.mxu0 0.0
    %5394 = vmatpush1.msra.mxu0 %v5373
    %5395 = vmatprep.subr.mxu0 0.0
    %5396 = vmatpush1.msra.mxu0 %v5372
    %5397 = vmatprep.subr.mxu0 0.0
    %5398 = vmatpush1.msra.mxu0 %v5371
    %5399 = vmatprep.subr.mxu0 0.0
    %5400 = vmatpush1.msra.mxu0 %v5370
    %5401 = vmatprep.subr.mxu0 0.0
    %5402 = vmatpush1.msra.mxu0 %v5369
    %5403 = vmatprep.subr.mxu0 0.0
    %5404 = vmatpush1.msra.mxu0 %v5368
    %5405 = vmatprep.subr.mxu0 0.0
    %5406 = vmatpush1.msra.mxu0 %v5367
    %5407 = vmatprep.subr.mxu0 0.0
    %5408 = vmatpush1.msra.mxu0 %v5366
    %5409 = vmatprep.subr.mxu0 0.0
    %5410 = vmatpush1.msra.mxu0 %v5365
    %5411 = vmatprep.subr.mxu0 0.0
    %5412 = vmatpush1.msra.mxu0 %v5364
    %5413 = vmatprep.subr.mxu0 0.0
    %5414 = vmatpush1.msra.mxu0 %v5363
    %5415 = vmatprep.subr.mxu0 0.0
    %5416 = vmatpush1.msra.mxu0 %v5362
    %5417 = vmatprep.subr.mxu0 0.0
    %5418 = vmatpush2.msra.mxu0 0.0
    %5419 = vmatprep.subr.mxu0 0.0
    %5420 = vmatpush2.msra.mxu0 0.0
    %5421 = vmatprep.subr.mxu0 0.0
    %5422 = vmatpush2.msra.mxu0 0.0
    %5423 = vmatprep.subr.mxu0 0.0
    %5424 = vmatpush2.msra.mxu0 0.0
    %5425 = vmatprep.subr.mxu0 0.0
    %5426 = vmatpush2.msra.mxu0 0.0
    %5427 = vmatprep.subr.mxu0 0.0
    %5428 = vmatpush2.msra.mxu0 0.0
    %5429 = vmatprep.subr.mxu0 0.0
    %5430 = vmatpush2.msra.mxu0 0.0
    %5431 = vmatprep.subr.mxu0 0.0
    %5432 = vmatpush2.msra.mxu0 0.0
    %5433 = vmatprep.subr.mxu0 0.0
    %5434 = vmatpush2.msra.mxu0 0.0
    %5435 = vmatprep.subr.mxu0 0.0
    %5436 = vmatpush2.msra.mxu0 0.0
    %5437 = vmatprep.subr.mxu0 0.0
    %5438 = vmatpush2.msra.mxu0 0.0
    %5439 = vmatprep.subr.mxu0 0.0
    %5440 = vmatpush2.msra.mxu0 0.0
    %5441 = vmatprep.subr.mxu0 0.0
    %5442 = vmatpush2.msra.mxu0 0.0
    %5443 = vmatprep.subr.mxu0 0.0
    %5444 = vmatpush2.msra.mxu0 0.0
    %5445 = vmatprep.subr.mxu0 0.0
    %5446 = vmatpush2.msra.mxu0 0.0
    %5447 = vmatprep.subr.mxu0 0.0
    %5448 = vmatpush2.msra.mxu0 0.0
    %5449 = vmatprep.mubr.f32.mxu0 0.0
    %5450 = vmatmul.mubr.f32.gmra.mxu0 %v5361
    %v5451 = vpop.f32.mrf.mxu0
    %v5452 = vadd.f32 %v5383, %v5451
    %v5453 = vpop.f32.mrf.mxu0
    %5454 = vdwg.mxu0
    %v5455 = vmax.f32 %v5452, 0.0
    %v5456 = vld [vmem:[#allocation6] sm:$0xff]
    %v5457 = vld [vmem:[#allocation6 + $0x8] sm:$0xff]
    %v5458 = vld [vmem:[#allocation6 + $0x10] sm:$0xff]
    %v5459 = vld [vmem:[#allocation6 + $0x18] sm:$0xff]
    %v5460 = vld [vmem:[#allocation6 + $0x20] sm:$0xff]
    %v5461 = vld [vmem:[#allocation6 + $0x28] sm:$0xff]
    %v5462 = vld [vmem:[#allocation6 + $0x30] sm:$0xff]
    %v5463 = vld [vmem:[#allocation6 + $0x38] sm:$0xff]
    %v5464 = vld [vmem:[#allocation6 + $0x40] sm:$0xff]
    %v5465 = vld [vmem:[#allocation6 + $0x48] sm:$0xff]
    %v5466 = vld [vmem:[#allocation6 + $0x50] sm:$0xff]
    %v5467 = vld [vmem:[#allocation6 + $0x58] sm:$0xff]
    %v5468 = vld [vmem:[#allocation6 + $0x60] sm:$0xff]
    %v5469 = vld [vmem:[#allocation6 + $0x68] sm:$0xff]
    %v5470 = vld [vmem:[#allocation6 + $0x70] sm:$0xff]
    %v5471 = vld [vmem:[#allocation6 + $0x78] sm:$0xff]
    %v5472 = vld [vmem:[%s10] sm:$0x1]
    %v5474 = vlaneseq
    %v5475 = vshrl.u32 %v5474, 7
    %v5476 = vsub.s32 0, %v5475
    %v5477 = vrot.slane %v5472, %v5476
    %5479 = vmatprep.subr.mxu0 0.0
    %5480 = vmatpush1.msra.mxu0 %v5471
    %5481 = vmatprep.subr.mxu0 0.0
    %5482 = vmatpush1.msra.mxu0 %v5470
    %5483 = vmatprep.subr.mxu0 0.0
    %5484 = vmatpush1.msra.mxu0 %v5469
    %5485 = vmatprep.subr.mxu0 0.0
    %5486 = vmatpush1.msra.mxu0 %v5468
    %5487 = vmatprep.subr.mxu0 0.0
    %5488 = vmatpush1.msra.mxu0 %v5467
    %5489 = vmatprep.subr.mxu0 0.0
    %5490 = vmatpush1.msra.mxu0 %v5466
    %5491 = vmatprep.subr.mxu0 0.0
    %5492 = vmatpush1.msra.mxu0 %v5465
    %5493 = vmatprep.subr.mxu0 0.0
    %5494 = vmatpush1.msra.mxu0 %v5464
    %5495 = vmatprep.subr.mxu0 0.0
    %5496 = vmatpush1.msra.mxu0 %v5463
    %5497 = vmatprep.subr.mxu0 0.0
    %5498 = vmatpush1.msra.mxu0 %v5462
    %5499 = vmatprep.subr.mxu0 0.0
    %5500 = vmatpush1.msra.mxu0 %v5461
    %5501 = vmatprep.subr.mxu0 0.0
    %5502 = vmatpush1.msra.mxu0 %v5460
    %5503 = vmatprep.subr.mxu0 0.0
    %5504 = vmatpush1.msra.mxu0 %v5459
    %5505 = vmatprep.subr.mxu0 0.0
    %5506 = vmatpush1.msra.mxu0 %v5458
    %5507 = vmatprep.subr.mxu0 0.0
    %5508 = vmatpush1.msra.mxu0 %v5457
    %5509 = vmatprep.subr.mxu0 0.0
    %5510 = vmatpush1.msra.mxu0 %v5456
    %5511 = vmatprep.subr.mxu0 0.0
    %5512 = vmatpush2.msra.mxu0 0.0
    %5513 = vmatprep.subr.mxu0 0.0
    %5514 = vmatpush2.msra.mxu0 0.0
    %5515 = vmatprep.subr.mxu0 0.0
    %5516 = vmatpush2.msra.mxu0 0.0
    %5517 = vmatprep.subr.mxu0 0.0
    %5518 = vmatpush2.msra.mxu0 0.0
    %5519 = vmatprep.subr.mxu0 0.0
    %5520 = vmatpush2.msra.mxu0 0.0
    %5521 = vmatprep.subr.mxu0 0.0
    %5522 = vmatpush2.msra.mxu0 0.0
    %5523 = vmatprep.subr.mxu0 0.0
    %5524 = vmatpush2.msra.mxu0 0.0
    %5525 = vmatprep.subr.mxu0 0.0
    %5526 = vmatpush2.msra.mxu0 0.0
    %5527 = vmatprep.subr.mxu0 0.0
    %5528 = vmatpush2.msra.mxu0 0.0
    %5529 = vmatprep.subr.mxu0 0.0
    %5530 = vmatpush2.msra.mxu0 0.0
    %5531 = vmatprep.subr.mxu0 0.0
    %5532 = vmatpush2.msra.mxu0 0.0
    %5533 = vmatprep.subr.mxu0 0.0
    %5534 = vmatpush2.msra.mxu0 0.0
    %5535 = vmatprep.subr.mxu0 0.0
    %5536 = vmatpush2.msra.mxu0 0.0
    %5537 = vmatprep.subr.mxu0 0.0
    %5538 = vmatpush2.msra.mxu0 0.0
    %5539 = vmatprep.subr.mxu0 0.0
    %5540 = vmatpush2.msra.mxu0 0.0
    %5541 = vmatprep.subr.mxu0 0.0
    %5542 = vmatpush2.msra.mxu0 0.0
    %5543 = vmatprep.mubr.f32.mxu0 0.0
    %5544 = vmatmul.mubr.f32.gmra.mxu0 %v5455
    %v5545 = vpop.f32.mrf.mxu0
    %v5546 = vadd.f32 %v5477, %v5545
    %v5547 = vpop.f32.mrf.mxu0
    %5548 = vdwg.mxu0
    %5549 = vst [vmem:[%s11] sm:$0xff] %v5546
    // Predicated region
    $region58: #{net_forward.1} parent=1 // pred_check
      _
    $region59: #{net_forward.1} parent=1 // pred_check_branch
      %5551 = sbr.rel (0) target = $region61
    $region60: #{net_forward.1} parent=1 // pred_region
      _
    $region61: #{net_forward.1} parent=1 // pred_fallthru
      _
    // Predicated region
    $region62: #{net_forward.1} parent=1 // pred_check
      _
    $region63: #{net_forward.1} parent=1 // pred_check_branch
      %5553 = sbr.rel (0) target = $region65
    $region64: #{net_forward.1} parent=1 // pred_region
      _
    $region65: #{net_forward.1} parent=1 // pred_fallthru
      _
    %5554 = vsyncpa [#allocation3], 1
    %5555 = vsyncpa [#allocation5], 1

</llo_original>
